<compile_context>
chip_gen: v5e
topology: v5e:2x2
jax: 0.10.0
libtpu: 0.0.40
codegen_flags: <defaults>
</compile_context>

<pallas_src>
import math
from functools import partial

import jax
import jax.numpy as jnp
from jax.experimental import pallas as pl
from jax.experimental.pallas import tpu as pltpu


# ----------------------------------------------------------------------------
# helpers usable inside kernels
# ----------------------------------------------------------------------------
def _layernorm(x, gamma, beta, eps=1e-5):
    mu = jnp.mean(x, axis=-1, keepdims=True)
    xc = x - mu
    var = jnp.mean(xc * xc, axis=-1, keepdims=True)
    return xc / jnp.sqrt(var + eps) * gamma + beta


def _erf(x):
    # Abramowitz & Stegun 7.1.26 (max abs err ~1.5e-7); exp/div only -> VPU/EUP friendly.
    a1, a2, a3, a4, a5 = 0.254829592, -0.284496736, 1.421413741, -1.453152027, 1.061405429
    p = 0.3275911
    sgn = jnp.where(x >= 0.0, 1.0, -1.0)
    ax = jnp.abs(x)
    t = 1.0 / (1.0 + p * ax)
    poly = ((((a5 * t + a4) * t + a3) * t + a2) * t + a1) * t
    return sgn * (1.0 - poly * jnp.exp(-ax * ax))


def _gelu_exact(x):
    # matches torch.nn.functional.gelu (erf form) to ~1e-7
    return 0.5 * x * (1.0 + _erf(x * 0.7071067811865476))


# ----------------------------------------------------------------------------
# Pallas kernel 1: conv1 of PatchEmbed2 as a row-tiled matmul on im2col'd patches.
#   y = relu(x @ W1' + b1')   with 1/255 and -0.5 already folded into W1'/b1'.
# ----------------------------------------------------------------------------
def pallas_conv1(x1, w1, b1, *, tm=512):
    M, K = x1.shape
    N = w1.shape[1]
    tm = M if M <= tm else tm           # small M: one full block, no OOB rows

    def kernel(x_ref, w_ref, b_ref, o_ref):
        y = jnp.dot(x_ref[...], w_ref[...], preferred_element_type=jnp.float32) + b_ref[...]
        o_ref[...] = jnp.maximum(y, 0.0).astype(o_ref.dtype)       # ReLU, bf16 out

    return pl.pallas_call(
        kernel,
        out_shape=jax.ShapeDtypeStruct((M, N), jnp.bfloat16),
        grid=(pl.cdiv(M, tm),),
        in_specs=[pl.BlockSpec((tm, K), lambda i: (i, 0)),
                  pl.BlockSpec((K, N), lambda i: (0, 0)),
                  pl.BlockSpec((1, N), lambda i: (0, 0))],
        out_specs=pl.BlockSpec((tm, N), lambda i: (i, 0)),
        compiler_params=pltpu.CompilerParams(dimension_semantics=("parallel",)),
    )(x1, w1, b1.reshape(1, N))


# ----------------------------------------------------------------------------
# Pallas kernel 2: conv2 matmul + pos-embed + full MinVit transformer + final LN,
# fused in one kernel, gridded over chunks of the batch.
# ----------------------------------------------------------------------------
def make_conv2_transformer_kernel(depth, num_heads, bb, P, D):
    dh = D // num_heads

    def kernel(x2_ref, pos_ref, vec_ref, wc2_ref, *refs):
        out_ref = refs[-1]
        layer_w = refs[:-1]                 # 4 bf16 weight refs per layer

        off = 0

        def take(n):                        # static, lane-aligned slices of packed 1-D params
            nonlocal off
            v = vec_ref[:, off:off + n]     # (1, n) f32
            off += n
            return v

        # ---- conv2 (matmul on im2col'd patches) + positional embedding --------
        bc2 = take(D)
        x2 = x2_ref[...].reshape(bb * P, 9 * D)                      # bf16
        tok = jnp.dot(x2, wc2_ref[...], preferred_element_type=jnp.float32) + bc2
        x = (tok.reshape(bb, P, D) + pos_ref[...]).reshape(bb * P, D)  # f32

        # ---- transformer layers ------------------------------------------------
        for l in range(depth):
            wqkv_r, wo_r, wf1_r, wf2_r = layer_w[4 * l:4 * l + 4]
            g1 = take(D); be1 = take(D); bqkv = take(3 * D); bo = take(D)
            g2 = take(D); be2 = take(D); bf1 = take(4 * D); bf2 = take(D)

            # multi-head self attention (1/sqrt(dh) already folded into wqkv/bqkv)
            xn = _layernorm(x, g1, be1)
            qkv = jnp.dot(xn.astype(jnp.bfloat16), wqkv_r[...],
                          preferred_element_type=jnp.float32) + bqkv
            q = qkv[:, 0 * D:1 * D].reshape(bb, P, D)
            k = qkv[:, 1 * D:2 * D].reshape(bb, P, D)
            v = qkv[:, 2 * D:3 * D].reshape(bb, P, D)

            heads = []
            for h in range(num_heads):
                hs = h * dh
                qh = q[:, :, hs:hs + dh].astype(jnp.bfloat16)
                kh = k[:, :, hs:hs + dh].astype(jnp.bfloat16)
                vh = v[:, :, hs:hs + dh].astype(jnp.bfloat16)
                s = jnp.einsum('bqd,bkd->bqk', qh, kh,
                               preferred_element_type=jnp.float32)    # (bb, P, P) f32
                s = s - jnp.max(s, axis=-1, keepdims=True)
                e = jnp.exp(s)
                pr = e * pl.reciprocal(jnp.sum(e, axis=-1, keepdims=True), approx=True)
                heads.append(jnp.einsum('bqk,bkd->bqd', pr.astype(jnp.bfloat16), vh,
                                        preferred_element_type=jnp.float32))
            # one full-K out-projection instead of 4 tiny K=32 matmuls
            ctx = jnp.concatenate(heads, axis=-1).reshape(bb * P, D)
            attn = jnp.dot(ctx.astype(jnp.bfloat16), wo_r[...],
                           preferred_element_type=jnp.float32) + bo
            x = x + attn                                              # dropout p=0

            # feed-forward
            xn2 = _layernorm(x, g2, be2)
            hid = _gelu_exact(jnp.dot(xn2.astype(jnp.bfloat16), wf1_r[...],
                                      preferred_element_type=jnp.float32) + bf1)
            x = x + jnp.dot(hid.astype(jnp.bfloat16), wf2_r[...],
                            preferred_element_type=jnp.float32) + bf2

        # ---- final LayerNorm ---------------------------------------------------
        gf = take(D); bfin = take(D)
        out_ref[...] = _layernorm(x, gf, bfin).reshape(bb, P, D)

    return kernel


def _pick_batch_chunk(B, cap=64):
    """Per-generation batch chunking.
    v5e/v6e (1 TensorCore): one fat grid step (bb = B) up to the VMEM cap.
    v7x (2 TensorCores): a multiple-of-2 number of parallel grid steps.
    Returns (bb, steps) with bb*steps >= B (caller zero-pads the batch)."""
    try:
        kind = jax.devices()[0].device_kind.lower()
    except Exception:
        kind = ""
    n_tc = 2 if ("v7" in kind or "7x" in kind) else 1
    steps = max(1, -(-B // cap))                  # VMEM cap on the chunk size
    if n_tc > 1 and B >= n_tc:
        steps = -(-steps // n_tc) * n_tc          # keep both TCs busy on v7x
    bb = -(-B // steps)
    return bb, steps


def pallas_conv2_transformer(x2, wc2, pos, vec, layer_weights, *,
                             depth, num_heads, bb, steps):
    Bp, P, K2 = x2.shape
    D = K2 // 9
    assert Bp == bb * steps

    kernel = make_conv2_transformer_kernel(depth, num_heads, bb, P, D)

    in_specs = [pl.BlockSpec((bb, P, K2), lambda i: (i, 0, 0)),
                pl.BlockSpec(pos.shape, lambda i: (0, 0)),
                pl.BlockSpec(vec.shape, lambda i: (0, 0)),
                pl.BlockSpec(wc2.shape, lambda i: (0, 0))]
    for w in layer_weights:
        in_specs.append(pl.BlockSpec(w.shape, lambda i: (0, 0)))

    return pl.pallas_call(
        kernel,
        out_shape=jax.ShapeDtypeStruct((Bp, P, D), jnp.float32),
        grid=(steps,),
        in_specs=in_specs,
        out_specs=pl.BlockSpec((bb, P, D), lambda i: (i, 0, 0)),
        compiler_params=pltpu.CompilerParams(dimension_semantics=("parallel",)),
    )(x2, pos, vec, wc2, *layer_weights)


# ----------------------------------------------------------------------------
# parameters (deterministic, shapes as implied by the PyTorch __init__)
# ----------------------------------------------------------------------------
def init_params(key, *, num_channel=3, embed_dim=128, depth=1, img_h=32, img_w=32):
    keys = iter(jax.random.split(key, 8 + 8 * depth))

    def tn(k, shape, std=0.02):
        return (std * jax.random.truncated_normal(k, -2.0, 2.0, shape)).astype(jnp.float32)

    H1 = (img_h - 8) // 4 + 1
    W1 = (img_w - 8) // 4 + 1
    H2 = (H1 - 3) // 2 + 1
    W2 = (W1 - 3) // 2 + 1
    num_patch = H2 * W2

    params = {
        # conv weights kept in the PyTorch (out, in, kh, kw) layout
        "conv1_w": tn(next(keys), (embed_dim, num_channel, 8, 8), std=0.05),
        "conv1_b": jnp.zeros((embed_dim,), jnp.float32),
        "conv2_w": tn(next(keys), (embed_dim, embed_dim, 3, 3), std=0.05),
        "conv2_b": jnp.zeros((embed_dim,), jnp.float32),
        "pos_embed": tn(next(keys), (num_patch, embed_dim)),
        "lnf_g": jnp.ones((embed_dim,), jnp.float32),
        "lnf_b": jnp.zeros((embed_dim,), jnp.float32),
        "layers": [],
    }
    for _ in range(depth):
        params["layers"].append(dict(
            ln1_g=jnp.ones((embed_dim,), jnp.float32),
            ln1_b=jnp.zeros((embed_dim,), jnp.float32),
            # linear weights stored (in, out); a real PyTorch port must transpose nn.Linear.
            wqkv=tn(next(keys), (embed_dim, 3 * embed_dim)),
            bqkv=jnp.zeros((3 * embed_dim,), jnp.float32),
            wout=tn(next(keys), (embed_dim, embed_dim)),
            bout=jnp.zeros((embed_dim,), jnp.float32),
            ln2_g=jnp.ones((embed_dim,), jnp.float32),
            ln2_b=jnp.zeros((embed_dim,), jnp.float32),
            w1=tn(next(keys), (embed_dim, 4 * embed_dim)),
            b1=jnp.zeros((4 * embed_dim,), jnp.float32),
            w2=tn(next(keys), (4 * embed_dim, embed_dim)),
            b2=jnp.zeros((embed_dim,), jnp.float32),
        ))
    return params, num_patch


def prepare_params(params, *, num_heads):
    """Host-side weight prep: fold constants into weights, cast matmul operands to
    bf16, and pack all 1-D parameters into one lane-aligned (1, L) f32 vector."""
    D, C = params["conv1_w"].shape[0], params["conv1_w"].shape[1]
    K1 = C * 64
    dh = D // num_heads
    scale = 1.0 / math.sqrt(dh)

    # conv1: fold obs/255 - 0.5 into the weight/bias (offline transform)
    w1 = params["conv1_w"].reshape(D, K1).T                         # (K1, D) f32
    w1_eff = (w1 * (1.0 / 255.0)).astype(jnp.bfloat16)
    b1_eff = (params["conv1_b"] - 0.5 * jnp.sum(w1, axis=0)).astype(jnp.float32)

    wc2 = params["conv2_w"].reshape(D, 9 * D).T.astype(jnp.bfloat16)

    # fold 1/sqrt(dh) into the q-columns of the qkv projection
    qscale = jnp.concatenate([jnp.full((D,), scale, jnp.float32),
                              jnp.ones((2 * D,), jnp.float32)])

    layer_w = []
    vec_pieces = [params["conv2_b"]]
    for layer in params["layers"]:
        wqkv = (layer["wqkv"] * qscale[None, :]).astype(jnp.bfloat16)
        layer_w += [wqkv,
                    layer["wout"].astype(jnp.bfloat16),
                    layer["w1"].astype(jnp.bfloat16),
                    layer["w2"].astype(jnp.bfloat16)]
        vec_pieces += [layer["ln1_g"], layer["ln1_b"], layer["bqkv"] * qscale,
                       layer["bout"], layer["ln2_g"], layer["ln2_b"],
                       layer["b1"], layer["b2"]]
    vec_pieces += [params["lnf_g"], params["lnf_b"]]

    return {
        "w1": w1_eff, "b1": b1_eff,
        "wc2": wc2,
        "pos": params["pos_embed"].astype(jnp.float32),
        "vec": jnp.concatenate(vec_pieces).astype(jnp.float32).reshape(1, -1),
        "layer_w": layer_w,
    }


# ----------------------------------------------------------------------------
# forward pass (equivalent to VitEncoder.forward)
# ----------------------------------------------------------------------------
def vit_encoder_forward(obs, prep, *, embed_dim=128, num_heads=4, flatten=False):
    # obs: NCHW float32 (B, C, H, W) in [0, 255], same as the PyTorch module.
    B, C, H, W = obs.shape
    D = embed_dim
    OH1 = (H - 8) // 4 + 1
    OW1 = (W - 8) // 4 + 1
    OH2 = (OH1 - 3) // 2 + 1
    OW2 = (OW1 - 3) // 2 + 1
    P = OH2 * OW2
    depth = len(prep["layer_w"]) // 4

    # conv1 im2col: a single patch-extraction op; feature dim ordered (c, kh, kw),
    # matching the flattened PyTorch conv weight.  bf16 (MXU operand dtype).
    x1 = jax.lax.conv_general_dilated_patches(
        obs.astype(jnp.bfloat16), filter_shape=(8, 8), window_strides=(4, 4),
        padding='VALID', dimension_numbers=('NCHW', 'OIHW', 'NHWC'))  # (B,OH1,OW1,C*64)
    K1 = C * 64
    x1 = x1.reshape(B * OH1 * OW1, K1)
    y1 = pallas_conv1(x1, prep["w1"], prep["b1"])                    # bf16, prescale folded
    y1 = y1.reshape(B, OH1, OW1, D)                                  # NHWC bf16

    # conv2 im2col: a single patch-extraction op on bf16 (half the duplicated bytes).
    # TODO(synk): could be fused into kernel 2 with strided ref reads; left as one XLA op.
    x2 = jax.lax.conv_general_dilated_patches(
        y1, filter_shape=(3, 3), window_strides=(2, 2), padding='VALID',
        dimension_numbers=('NHWC', 'OIHW', 'NHWC'))                  # (B, OH2, OW2, 9*D)
    x2 = x2.reshape(B, P, 9 * D)

    # per-generation batch chunking; pad awkward batch sizes instead of bb=1 fallback
    bb, steps = _pick_batch_chunk(B)
    Bp = bb * steps
    if Bp != B:
        x2 = jnp.pad(x2, ((0, Bp - B), (0, 0), (0, 0)))

    feats = pallas_conv2_transformer(
        x2, prep["wc2"], prep["pos"], prep["vec"], prep["layer_w"],
        depth=depth, num_heads=num_heads, bb=bb, steps=steps)        # (Bp, P, D) f32
    feats = feats[:B]
    if flatten:
        feats = feats.reshape(B, P * D)
    return feats


# ----------------------------------------------------------------------------
if __name__ == "__main__":
    key = jax.random.PRNGKey(0)
    k_params, k_obs = jax.random.split(key)

    B, C, H, W = 2, 3, 32, 32                 # small image -> 3x3 = 9 patches
    EMBED_DIM, NUM_HEADS, DEPTH = 128, 4, 1   # cfg defaults (depth=1)

    params, num_patch = init_params(k_params, num_channel=C, embed_dim=EMBED_DIM,
                                    depth=DEPTH, img_h=H, img_w=W)
    prep = prepare_params(params, num_heads=NUM_HEADS)
    obs = jax.random.uniform(k_obs, (B, C, H, W), jnp.float32, 0.0, 255.0)

    fwd = jax.jit(partial(vit_encoder_forward, embed_dim=EMBED_DIM,
                          num_heads=NUM_HEADS, flatten=False))
    feats = jax.block_until_ready(fwd(obs, prep))

    assert feats.shape == (B, num_patch, EMBED_DIM), feats.shape
    assert bool(jnp.all(jnp.isfinite(feats)))
    print("KERNEL_OK")
</pallas_src>

<mosaic_0001>
module attributes {stable_mosaic.version = 11 : i64} {
  func.func @kernel(%arg0: i32, %arg1: memref<98x192xbf16, #tpu.memory_space<vmem>>, %arg2: memref<192x128xbf16, #tpu.memory_space<vmem>>, %arg3: memref<1x128xf32, #tpu.memory_space<vmem>>, %arg4: memref<98x128xbf16, #tpu.memory_space<vmem>>) attributes {dimension_semantics = [#tpu.dimension_semantics<parallel>], iteration_bounds = array<i64: 1>, scalar_prefetch = 0 : i64, scratch_operands = 0 : i64, tpu.core_type = #tpu.core_type<tc>, window_params = [{transform_indices = @transform_0, window_bounds = array<i64: 98, 192>}, {pipeline_mode = #tpu.pipeline_mode<synchronous>, transform_indices = @transform_1, window_bounds = array<i64: 192, 128>}, {pipeline_mode = #tpu.pipeline_mode<synchronous>, transform_indices = @transform_2, window_bounds = array<i64: 1, 128>}, {transform_indices = @transform_3, window_bounds = array<i64: 98, 128>}]} {
    %c0 = arith.constant 0 : index
    %c0_0 = arith.constant 0 : index
    %0 = vector.load %arg1[%c0, %c0_0] : memref<98x192xbf16, #tpu.memory_space<vmem>>, vector<98x192xbf16>
    %c0_1 = arith.constant 0 : index
    %c0_2 = arith.constant 0 : index
    %1 = vector.load %arg2[%c0_1, %c0_2] : memref<192x128xbf16, #tpu.memory_space<vmem>>, vector<192x128xbf16>
    %cst = arith.constant dense<0.000000e+00> : vector<98x128xf32>
    %2 = tpu.matmul %0, %1, %cst {dimension_numbers = #tpu.dot_dimension_numbers<[1], [0], [0], [1], [0, 0, 1, 1], [], []>} : vector<98x192xbf16>, vector<192x128xbf16>, vector<98x128xf32> -> vector<98x128xf32>
    %c0_3 = arith.constant 0 : index
    %c0_4 = arith.constant 0 : index
    %3 = vector.load %arg3[%c0_3, %c0_4] : memref<1x128xf32, #tpu.memory_space<vmem>>, vector<1x128xf32>
    %4 = vector.broadcast %3 : vector<1x128xf32> to vector<98x128xf32>
    %5 = arith.addf %2, %4 : vector<98x128xf32>
    %cst_5 = arith.constant 0.000000e+00 : f32
    %6 = vector.broadcast %cst_5 : f32 to vector<98x128xf32>
    %7 = arith.maximumf %5, %6 : vector<98x128xf32>
    %8 = arith.truncf %7 : vector<98x128xf32> to vector<98x128xbf16>
    %c0_6 = arith.constant 0 : index
    %c0_7 = arith.constant 0 : index
    %9 = vector.load %arg4[%c0_6, %c0_7] : memref<98x128xbf16, #tpu.memory_space<vmem>>, vector<98x128xbf16>
    tpu.vector_store %arg4[%c0_6, %c0_7], %8 {strides = array<i32>} : memref<98x128xbf16, #tpu.memory_space<vmem>>, vector<98x128xbf16>,
    return
  }
  func.func @transform_0(%arg0: i32) -> (i32, i32) {
    %c0_i32 = arith.constant 0 : i32
    %c0_i32_0 = arith.constant 0 : i32
    return %arg0, %c0_i32 : i32, i32
  }
  func.func @transform_1(%arg0: i32) -> (i32, i32) {
    %c0_i32 = arith.constant 0 : i32
    %c0_i32_0 = arith.constant 0 : i32
    %c0_i32_1 = arith.constant 0 : i32
    return %c0_i32, %c0_i32_0 : i32, i32
  }
  func.func @transform_2(%arg0: i32) -> (i32, i32) {
    %c0_i32 = arith.constant 0 : i32
    %c0_i32_0 = arith.constant 0 : i32
    %c0_i32_1 = arith.constant 0 : i32
    return %c0_i32, %c0_i32_0 : i32, i32
  }
  func.func @transform_3(%arg0: i32) -> (i32, i32) {
    %c0_i32 = arith.constant 0 : i32
    %c0_i32_0 = arith.constant 0 : i32
    return %arg0, %c0_i32 : i32, i32
  }
}

module attributes {stable_mosaic.version = 11 : i64} {
  func.func @kernel(%arg0: i32, %arg1: memref<2x9x1152xbf16, #tpu.memory_space<vmem>>, %arg2: memref<9x128xf32, #tpu.memory_space<vmem>>, %arg3: memref<1x2048xf32, #tpu.memory_space<vmem>>, %arg4: memref<1152x128xbf16, #tpu.memory_space<vmem>>, %arg5: memref<128x384xbf16, #tpu.memory_space<vmem>>, %arg6: memref<128x128xbf16, #tpu.memory_space<vmem>>, %arg7: memref<128x512xbf16, #tpu.memory_space<vmem>>, %arg8: memref<512x128xbf16, #tpu.memory_space<vmem>>, %arg9: memref<2x9x128xf32, #tpu.memory_space<vmem>>) attributes {dimension_semantics = [#tpu.dimension_semantics<parallel>], iteration_bounds = array<i64: 1>, scalar_prefetch = 0 : i64, scratch_operands = 0 : i64, tpu.core_type = #tpu.core_type<tc>, window_params = [{transform_indices = @transform_0, window_bounds = array<i64: 2, 9, 1152>}, {pipeline_mode = #tpu.pipeline_mode<synchronous>, transform_indices = @transform_1, window_bounds = array<i64: 9, 128>}, {pipeline_mode = #tpu.pipeline_mode<synchronous>, transform_indices = @transform_2, window_bounds = array<i64: 1, 2048>}, {pipeline_mode = #tpu.pipeline_mode<synchronous>, transform_indices = @transform_3, window_bounds = array<i64: 1152, 128>}, {pipeline_mode = #tpu.pipeline_mode<synchronous>, transform_indices = @transform_4, window_bounds = array<i64: 128, 384>}, {pipeline_mode = #tpu.pipeline_mode<synchronous>, transform_indices = @transform_5, window_bounds = array<i64: 128, 128>}, {pipeline_mode = #tpu.pipeline_mode<synchronous>, transform_indices = @transform_6, window_bounds = array<i64: 128, 512>}, {pipeline_mode = #tpu.pipeline_mode<synchronous>, transform_indices = @transform_7, window_bounds = array<i64: 512, 128>}, {transform_indices = @transform_8, window_bounds = array<i64: 2, 9, 128>}]} {
    %c0 = arith.constant 0 : index
    %c0_0 = arith.constant 0 : index
    %0 = vector.load %arg3[%c0, %c0_0] : memref<1x2048xf32, #tpu.memory_space<vmem>>, vector<1x128xf32>
    %c0_1 = arith.constant 0 : index
    %c0_2 = arith.constant 0 : index
    %c0_3 = arith.constant 0 : index
    %1 = vector.load %arg1[%c0_1, %c0_2, %c0_3] : memref<2x9x1152xbf16, #tpu.memory_space<vmem>>, vector<2x9x1152xbf16>
    %2 = vector.shape_cast %1 : vector<2x9x1152xbf16> to vector<18x1152xbf16>
    %c0_4 = arith.constant 0 : index
    %c0_5 = arith.constant 0 : index
    %3 = vector.load %arg4[%c0_4, %c0_5] : memref<1152x128xbf16, #tpu.memory_space<vmem>>, vector<1152x128xbf16>
    %cst = arith.constant dense<0.000000e+00> : vector<18x128xf32>
    %4 = tpu.matmul %2, %3, %cst {dimension_numbers = #tpu.dot_dimension_numbers<[1], [0], [0], [1], [0, 0, 1, 1], [], []>} : vector<18x1152xbf16>, vector<1152x128xbf16>, vector<18x128xf32> -> vector<18x128xf32>
    %5 = vector.broadcast %0 : vector<1x128xf32> to vector<18x128xf32>
    %6 = arith.addf %4, %5 : vector<18x128xf32>
    %7 = vector.shape_cast %6 : vector<18x128xf32> to vector<2x9x128xf32>
    %c0_6 = arith.constant 0 : index
    %c0_7 = arith.constant 0 : index
    %8 = vector.load %arg2[%c0_6, %c0_7] : memref<9x128xf32, #tpu.memory_space<vmem>>, vector<9x128xf32>
    %9 = vector.shape_cast %8 : vector<9x128xf32> to vector<1x9x128xf32>
    %10 = vector.broadcast %9 : vector<1x9x128xf32> to vector<2x9x128xf32>
    %11 = arith.addf %7, %10 : vector<2x9x128xf32>
    %12 = vector.shape_cast %11 : vector<2x9x128xf32> to vector<18x128xf32>
    %c0_8 = arith.constant 0 : index
    %c128 = arith.constant 128 : index
    %13 = vector.load %arg3[%c0_8, %c128] : memref<1x2048xf32, #tpu.memory_space<vmem>>, vector<1x128xf32>
    %c0_9 = arith.constant 0 : index
    %c256 = arith.constant 256 : index
    %14 = vector.load %arg3[%c0_9, %c256] : memref<1x2048xf32, #tpu.memory_space<vmem>>, vector<1x128xf32>
    %c0_10 = arith.constant 0 : index
    %c384 = arith.constant 384 : index
    %15 = vector.load %arg3[%c0_10, %c384] : memref<1x2048xf32, #tpu.memory_space<vmem>>, vector<1x384xf32>
    %c0_11 = arith.constant 0 : index
    %c768 = arith.constant 768 : index
    %16 = vector.load %arg3[%c0_11, %c768] : memref<1x2048xf32, #tpu.memory_space<vmem>>, vector<1x128xf32>
    %c0_12 = arith.constant 0 : index
    %c896 = arith.constant 896 : index
    %17 = vector.load %arg3[%c0_12, %c896] : memref<1x2048xf32, #tpu.memory_space<vmem>>, vector<1x128xf32>
    %c0_13 = arith.constant 0 : index
    %c1024 = arith.constant 1024 : index
    %18 = vector.load %arg3[%c0_13, %c1024] : memref<1x2048xf32, #tpu.memory_space<vmem>>, vector<1x128xf32>
    %c0_14 = arith.constant 0 : index
    %c1152 = arith.constant 1152 : index
    %19 = vector.load %arg3[%c0_14, %c1152] : memref<1x2048xf32, #tpu.memory_space<vmem>>, vector<1x512xf32>
    %c0_15 = arith.constant 0 : index
    %c1664 = arith.constant 1664 : index
    %20 = vector.load %arg3[%c0_15, %c1664] : memref<1x2048xf32, #tpu.memory_space<vmem>>, vector<1x128xf32>
    %cst_16 = arith.constant dense<0.000000e+00> : vector<18xf32>
    %21 = vector.multi_reduction <add>, %12, %cst_16 [1] : vector<18x128xf32> to vector<18xf32>
    %22 = vector.shape_cast %21 : vector<18xf32> to vector<18x1xf32>
    %cst_17 = arith.constant 1.280000e+02 : f32
    %23 = vector.broadcast %cst_17 : f32 to vector<18x1xf32>
    %24 = arith.divf %22, %23 : vector<18x1xf32>
    %25 = vector.broadcast %24 : vector<18x1xf32> to vector<18x128xf32>
    %26 = arith.subf %12, %25 : vector<18x128xf32>
    %27 = arith.mulf %26, %26 : vector<18x128xf32>
    %cst_18 = arith.constant dense<0.000000e+00> : vector<18xf32>
    %28 = vector.multi_reduction <add>, %27, %cst_18 [1] : vector<18x128xf32> to vector<18xf32>
    %29 = vector.shape_cast %28 : vector<18xf32> to vector<18x1xf32>
    %cst_19 = arith.constant 1.280000e+02 : f32
    %30 = vector.broadcast %cst_19 : f32 to vector<18x1xf32>
    %31 = arith.divf %29, %30 : vector<18x1xf32>
    %cst_20 = arith.constant 9.99999974E-6 : f32
    %32 = vector.broadcast %cst_20 : f32 to vector<18x1xf32>
    %33 = arith.addf %31, %32 : vector<18x1xf32>
    %34 = math.sqrt %33 : vector<18x1xf32>
    %35 = vector.broadcast %34 : vector<18x1xf32> to vector<18x128xf32>
    %36 = arith.divf %26, %35 : vector<18x128xf32>
    %37 = vector.broadcast %13 : vector<1x128xf32> to vector<18x128xf32>
    %38 = arith.mulf %36, %37 : vector<18x128xf32>
    %39 = vector.broadcast %14 : vector<1x128xf32> to vector<18x128xf32>
    %40 = arith.addf %38, %39 : vector<18x128xf32>
    %41 = arith.truncf %40 : vector<18x128xf32> to vector<18x128xbf16>
    %c0_21 = arith.constant 0 : index
    %c0_22 = arith.constant 0 : index
    %42 = vector.load %arg5[%c0_21, %c0_22] : memref<128x384xbf16, #tpu.memory_space<vmem>>, vector<128x384xbf16>
    %cst_23 = arith.constant dense<0.000000e+00> : vector<18x384xf32>
    %43 = tpu.matmul %41, %42, %cst_23 {dimension_numbers = #tpu.dot_dimension_numbers<[1], [0], [0], [1], [0, 0, 1, 1], [], []>} : vector<18x128xbf16>, vector<128x384xbf16>, vector<18x384xf32> -> vector<18x384xf32>
    %44 = vector.broadcast %15 : vector<1x384xf32> to vector<18x384xf32>
    %45 = arith.addf %43, %44 : vector<18x384xf32>
    %46 = vector.extract_strided_slice %45 {offsets = [0, 0], sizes = [18, 128], strides = [1, 1]} : vector<18x384xf32> to vector<18x128xf32>
    %47 = vector.shape_cast %46 : vector<18x128xf32> to vector<2x9x128xf32>
    %48 = vector.extract_strided_slice %45 {offsets = [0, 128], sizes = [18, 128], strides = [1, 1]} : vector<18x384xf32> to vector<18x128xf32>
    %49 = vector.shape_cast %48 : vector<18x128xf32> to vector<2x9x128xf32>
    %50 = vector.extract_strided_slice %45 {offsets = [0, 256], sizes = [18, 128], strides = [1, 1]} : vector<18x384xf32> to vector<18x128xf32>
    %51 = vector.shape_cast %50 : vector<18x128xf32> to vector<2x9x128xf32>
    %52 = vector.extract_strided_slice %47 {offsets = [0, 0, 0], sizes = [2, 9, 32], strides = [1, 1, 1]} : vector<2x9x128xf32> to vector<2x9x32xf32>
    %53 = arith.truncf %52 : vector<2x9x32xf32> to vector<2x9x32xbf16>
    %54 = vector.extract_strided_slice %49 {offsets = [0, 0, 0], sizes = [2, 9, 32], strides = [1, 1, 1]} : vector<2x9x128xf32> to vector<2x9x32xf32>
    %55 = arith.truncf %54 : vector<2x9x32xf32> to vector<2x9x32xbf16>
    %56 = vector.extract_strided_slice %51 {offsets = [0, 0, 0], sizes = [2, 9, 32], strides = [1, 1, 1]} : vector<2x9x128xf32> to vector<2x9x32xf32>
    %57 = arith.truncf %56 : vector<2x9x32xf32> to vector<2x9x32xbf16>
    "tpu.trace_start"() <{level = 10 : i32, message = "bqd,bkd->bqk"}> : () -> ()
    %cst_24 = arith.constant dense<0.000000e+00> : vector<2x9x9xf32>
    %58 = tpu.matmul %53, %55, %cst_24 {dimension_numbers = #tpu.dot_dimension_numbers<[2], [2], [1], [1], [0, 0, 0, 1, 1, 1], [0], [0]>} : vector<2x9x32xbf16>, vector<2x9x32xbf16>, vector<2x9x9xf32> -> vector<2x9x9xf32>
    "tpu.trace_stop"() : () -> ()
    %cst_25 = arith.constant dense<0xFF800000> : vector<2x9xf32>
    %59 = vector.multi_reduction <maximumf>, %58, %cst_25 [2] : vector<2x9x9xf32> to vector<2x9xf32>
    %60 = vector.shape_cast %59 : vector<2x9xf32> to vector<2x9x1xf32>
    %61 = vector.broadcast %60 : vector<2x9x1xf32> to vector<2x9x9xf32>
    %62 = arith.subf %58, %61 : vector<2x9x9xf32>
    %63 = math.exp %62 : vector<2x9x9xf32>
    %cst_26 = arith.constant dense<0.000000e+00> : vector<2x9xf32>
    %64 = vector.multi_reduction <add>, %63, %cst_26 [2] : vector<2x9x9xf32> to vector<2x9xf32>
    %65 = vector.shape_cast %64 : vector<2x9xf32> to vector<2x9x1xf32>
    %66 = tpu.reciprocal %65 {approx = true} : vector<2x9x1xf32> -> vector<2x9x1xf32>
    %67 = vector.broadcast %66 : vector<2x9x1xf32> to vector<2x9x9xf32>
    %68 = arith.mulf %63, %67 : vector<2x9x9xf32>
    %69 = arith.truncf %68 : vector<2x9x9xf32> to vector<2x9x9xbf16>
    "tpu.trace_start"() <{level = 10 : i32, message = "bqk,bkd->bqd"}> : () -> ()
    %cst_27 = arith.constant dense<0.000000e+00> : vector<2x9x32xf32>
    %70 = tpu.matmul %69, %57, %cst_27 {dimension_numbers = #tpu.dot_dimension_numbers<[2], [1], [1], [2], [0, 0, 0, 1, 1, 2], [0], [0]>} : vector<2x9x9xbf16>, vector<2x9x32xbf16>, vector<2x9x32xf32> -> vector<2x9x32xf32>
    "tpu.trace_stop"() : () -> ()
    %71 = vector.extract_strided_slice %47 {offsets = [0, 0, 32], sizes = [2, 9, 32], strides = [1, 1, 1]} : vector<2x9x128xf32> to vector<2x9x32xf32>
    %72 = arith.truncf %71 : vector<2x9x32xf32> to vector<2x9x32xbf16>
    %73 = vector.extract_strided_slice %49 {offsets = [0, 0, 32], sizes = [2, 9, 32], strides = [1, 1, 1]} : vector<2x9x128xf32> to vector<2x9x32xf32>
    %74 = arith.truncf %73 : vector<2x9x32xf32> to vector<2x9x32xbf16>
    %75 = vector.extract_strided_slice %51 {offsets = [0, 0, 32], sizes = [2, 9, 32], strides = [1, 1, 1]} : vector<2x9x128xf32> to vector<2x9x32xf32>
    %76 = arith.truncf %75 : vector<2x9x32xf32> to vector<2x9x32xbf16>
    "tpu.trace_start"() <{level = 10 : i32, message = "bqd,bkd->bqk"}> : () -> ()
    %cst_28 = arith.constant dense<0.000000e+00> : vector<2x9x9xf32>
    %77 = tpu.matmul %72, %74, %cst_28 {dimension_numbers = #tpu.dot_dimension_numbers<[2], [2], [1], [1], [0, 0, 0, 1, 1, 1], [0], [0]>} : vector<2x9x32xbf16>, vector<2x9x32xbf16>, vector<2x9x9xf32> -> vector<2x9x9xf32>
    "tpu.trace_stop"() : () -> ()
    %cst_29 = arith.constant dense<0xFF800000> : vector<2x9xf32>
    %78 = vector.multi_reduction <maximumf>, %77, %cst_29 [2] : vector<2x9x9xf32> to vector<2x9xf32>
    %79 = vector.shape_cast %78 : vector<2x9xf32> to vector<2x9x1xf32>
    %80 = vector.broadcast %79 : vector<2x9x1xf32> to vector<2x9x9xf32>
    %81 = arith.subf %77, %80 : vector<2x9x9xf32>
    %82 = math.exp %81 : vector<2x9x9xf32>
    %cst_30 = arith.constant dense<0.000000e+00> : vector<2x9xf32>
    %83 = vector.multi_reduction <add>, %82, %cst_30 [2] : vector<2x9x9xf32> to vector<2x9xf32>
    %84 = vector.shape_cast %83 : vector<2x9xf32> to vector<2x9x1xf32>
    %85 = tpu.reciprocal %84 {approx = true} : vector<2x9x1xf32> -> vector<2x9x1xf32>
    %86 = vector.broadcast %85 : vector<2x9x1xf32> to vector<2x9x9xf32>
    %87 = arith.mulf %82, %86 : vector<2x9x9xf32>
    %88 = arith.truncf %87 : vector<2x9x9xf32> to vector<2x9x9xbf16>
    "tpu.trace_start"() <{level = 10 : i32, message = "bqk,bkd->bqd"}> : () -> ()
    %cst_31 = arith.constant dense<0.000000e+00> : vector<2x9x32xf32>
    %89 = tpu.matmul %88, %76, %cst_31 {dimension_numbers = #tpu.dot_dimension_numbers<[2], [1], [1], [2], [0, 0, 0, 1, 1, 2], [0], [0]>} : vector<2x9x9xbf16>, vector<2x9x32xbf16>, vector<2x9x32xf32> -> vector<2x9x32xf32>
    "tpu.trace_stop"() : () -> ()
    %90 = vector.extract_strided_slice %47 {offsets = [0, 0, 64], sizes = [2, 9, 32], strides = [1, 1, 1]} : vector<2x9x128xf32> to vector<2x9x32xf32>
    %91 = arith.truncf %90 : vector<2x9x32xf32> to vector<2x9x32xbf16>
    %92 = vector.extract_strided_slice %49 {offsets = [0, 0, 64], sizes = [2, 9, 32], strides = [1, 1, 1]} : vector<2x9x128xf32> to vector<2x9x32xf32>
    %93 = arith.truncf %92 : vector<2x9x32xf32> to vector<2x9x32xbf16>
    %94 = vector.extract_strided_slice %51 {offsets = [0, 0, 64], sizes = [2, 9, 32], strides = [1, 1, 1]} : vector<2x9x128xf32> to vector<2x9x32xf32>
    %95 = arith.truncf %94 : vector<2x9x32xf32> to vector<2x9x32xbf16>
    "tpu.trace_start"() <{level = 10 : i32, message = "bqd,bkd->bqk"}> : () -> ()
    %cst_32 = arith.constant dense<0.000000e+00> : vector<2x9x9xf32>
    %96 = tpu.matmul %91, %93, %cst_32 {dimension_numbers = #tpu.dot_dimension_numbers<[2], [2], [1], [1], [0, 0, 0, 1, 1, 1], [0], [0]>} : vector<2x9x32xbf16>, vector<2x9x32xbf16>, vector<2x9x9xf32> -> vector<2x9x9xf32>
    "tpu.trace_stop"() : () -> ()
    %cst_33 = arith.constant dense<0xFF800000> : vector<2x9xf32>
    %97 = vector.multi_reduction <maximumf>, %96, %cst_33 [2] : vector<2x9x9xf32> to vector<2x9xf32>
    %98 = vector.shape_cast %97 : vector<2x9xf32> to vector<2x9x1xf32>
    %99 = vector.broadcast %98 : vector<2x9x1xf32> to vector<2x9x9xf32>
    %100 = arith.subf %96, %99 : vector<2x9x9xf32>
    %101 = math.exp %100 : vector<2x9x9xf32>
    %cst_34 = arith.constant dense<0.000000e+00> : vector<2x9xf32>
    %102 = vector.multi_reduction <add>, %101, %cst_34 [2] : vector<2x9x9xf32> to vector<2x9xf32>
    %103 = vector.shape_cast %102 : vector<2x9xf32> to vector<2x9x1xf32>
    %104 = tpu.reciprocal %103 {approx = true} : vector<2x9x1xf32> -> vector<2x9x1xf32>
    %105 = vector.broadcast %104 : vector<2x9x1xf32> to vector<2x9x9xf32>
    %106 = arith.mulf %101, %105 : vector<2x9x9xf32>
    %107 = arith.truncf %106 : vector<2x9x9xf32> to vector<2x9x9xbf16>
    "tpu.trace_start"() <{level = 10 : i32, message = "bqk,bkd->bqd"}> : () -> ()
    %cst_35 = arith.constant dense<0.000000e+00> : vector<2x9x32xf32>
    %108 = tpu.matmul %107, %95, %cst_35 {dimension_numbers = #tpu.dot_dimension_numbers<[2], [1], [1], [2], [0, 0, 0, 1, 1, 2], [0], [0]>} : vector<2x9x9xbf16>, vector<2x9x32xbf16>, vector<2x9x32xf32> -> vector<2x9x32xf32>
    "tpu.trace_stop"() : () -> ()
    %109 = vector.extract_strided_slice %47 {offsets = [0, 0, 96], sizes = [2, 9, 32], strides = [1, 1, 1]} : vector<2x9x128xf32> to vector<2x9x32xf32>
    %110 = arith.truncf %109 : vector<2x9x32xf32> to vector<2x9x32xbf16>
    %111 = vector.extract_strided_slice %49 {offsets = [0, 0, 96], sizes = [2, 9, 32], strides = [1, 1, 1]} : vector<2x9x128xf32> to vector<2x9x32xf32>
    %112 = arith.truncf %111 : vector<2x9x32xf32> to vector<2x9x32xbf16>
    %113 = vector.extract_strided_slice %51 {offsets = [0, 0, 96], sizes = [2, 9, 32], strides = [1, 1, 1]} : vector<2x9x128xf32> to vector<2x9x32xf32>
    %114 = arith.truncf %113 : vector<2x9x32xf32> to vector<2x9x32xbf16>
    "tpu.trace_start"() <{level = 10 : i32, message = "bqd,bkd->bqk"}> : () -> ()
    %cst_36 = arith.constant dense<0.000000e+00> : vector<2x9x9xf32>
    %115 = tpu.matmul %110, %112, %cst_36 {dimension_numbers = #tpu.dot_dimension_numbers<[2], [2], [1], [1], [0, 0, 0, 1, 1, 1], [0], [0]>} : vector<2x9x32xbf16>, vector<2x9x32xbf16>, vector<2x9x9xf32> -> vector<2x9x9xf32>
    "tpu.trace_stop"() : () -> ()
    %cst_37 = arith.constant dense<0xFF800000> : vector<2x9xf32>
    %116 = vector.multi_reduction <maximumf>, %115, %cst_37 [2] : vector<2x9x9xf32> to vector<2x9xf32>
    %117 = vector.shape_cast %116 : vector<2x9xf32> to vector<2x9x1xf32>
    %118 = vector.broadcast %117 : vector<2x9x1xf32> to vector<2x9x9xf32>
    %119 = arith.subf %115, %118 : vector<2x9x9xf32>
    %120 = math.exp %119 : vector<2x9x9xf32>
    %cst_38 = arith.constant dense<0.000000e+00> : vector<2x9xf32>
    %121 = vector.multi_reduction <add>, %120, %cst_38 [2] : vector<2x9x9xf32> to vector<2x9xf32>
    %122 = vector.shape_cast %121 : vector<2x9xf32> to vector<2x9x1xf32>
    %123 = tpu.reciprocal %122 {approx = true} : vector<2x9x1xf32> -> vector<2x9x1xf32>
    %124 = vector.broadcast %123 : vector<2x9x1xf32> to vector<2x9x9xf32>
    %125 = arith.mulf %120, %124 : vector<2x9x9xf32>
    %126 = arith.truncf %125 : vector<2x9x9xf32> to vector<2x9x9xbf16>
    "tpu.trace_start"() <{level = 10 : i32, message = "bqk,bkd->bqd"}> : () -> ()
    %cst_39 = arith.constant dense<0.000000e+00> : vector<2x9x32xf32>
    %127 = tpu.matmul %126, %114, %cst_39 {dimension_numbers = #tpu.dot_dimension_numbers<[2], [1], [1], [2], [0, 0, 0, 1, 1, 2], [0], [0]>} : vector<2x9x9xbf16>, vector<2x9x32xbf16>, vector<2x9x32xf32> -> vector<2x9x32xf32>
    "tpu.trace_stop"() : () -> ()
    %128 = tpu.concatenate %70, %89, %108, %127 in 2 : vector<2x9x32xf32>, vector<2x9x32xf32>, vector<2x9x32xf32>, vector<2x9x32xf32> -> vector<2x9x128xf32>
    %129 = vector.shape_cast %128 : vector<2x9x128xf32> to vector<18x128xf32>
    %130 = arith.truncf %129 : vector<18x128xf32> to vector<18x128xbf16>
    %c0_40 = arith.constant 0 : index
    %c0_41 = arith.constant 0 : index
    %131 = vector.load %arg6[%c0_40, %c0_41] : memref<128x128xbf16, #tpu.memory_space<vmem>>, vector<128x128xbf16>
    %cst_42 = arith.constant dense<0.000000e+00> : vector<18x128xf32>
    %132 = tpu.matmul %130, %131, %cst_42 {dimension_numbers = #tpu.dot_dimension_numbers<[1], [0], [0], [1], [0, 0, 1, 1], [], []>} : vector<18x128xbf16>, vector<128x128xbf16>, vector<18x128xf32> -> vector<18x128xf32>
    %133 = vector.broadcast %16 : vector<1x128xf32> to vector<18x128xf32>
    %134 = arith.addf %132, %133 : vector<18x128xf32>
    %135 = arith.addf %12, %134 : vector<18x128xf32>
    %cst_43 = arith.constant dense<0.000000e+00> : vector<18xf32>
    %136 = vector.multi_reduction <add>, %135, %cst_43 [1] : vector<18x128xf32> to vector<18xf32>
    %137 = vector.shape_cast %136 : vector<18xf32> to vector<18x1xf32>
    %cst_44 = arith.constant 1.280000e+02 : f32
    %138 = vector.broadcast %cst_44 : f32 to vector<18x1xf32>
    %139 = arith.divf %137, %138 : vector<18x1xf32>
    %140 = vector.broadcast %139 : vector<18x1xf32> to vector<18x128xf32>
    %141 = arith.subf %135, %140 : vector<18x128xf32>
    %142 = arith.mulf %141, %141 : vector<18x128xf32>
    %cst_45 = arith.constant dense<0.000000e+00> : vector<18xf32>
    %143 = vector.multi_reduction <add>, %142, %cst_45 [1] : vector<18x128xf32> to vector<18xf32>
    %144 = vector.shape_cast %143 : vector<18xf32> to vector<18x1xf32>
    %cst_46 = arith.constant 1.280000e+02 : f32
    %145 = vector.broadcast %cst_46 : f32 to vector<18x1xf32>
    %146 = arith.divf %144, %145 : vector<18x1xf32>
    %cst_47 = arith.constant 9.99999974E-6 : f32
    %147 = vector.broadcast %cst_47 : f32 to vector<18x1xf32>
    %148 = arith.addf %146, %147 : vector<18x1xf32>
    %149 = math.sqrt %148 : vector<18x1xf32>
    %150 = vector.broadcast %149 : vector<18x1xf32> to vector<18x128xf32>
    %151 = arith.divf %141, %150 : vector<18x128xf32>
    %152 = vector.broadcast %17 : vector<1x128xf32> to vector<18x128xf32>
    %153 = arith.mulf %151, %152 : vector<18x128xf32>
    %154 = vector.broadcast %18 : vector<1x128xf32> to vector<18x128xf32>
    %155 = arith.addf %153, %154 : vector<18x128xf32>
    %156 = arith.truncf %155 : vector<18x128xf32> to vector<18x128xbf16>
    %c0_48 = arith.constant 0 : index
    %c0_49 = arith.constant 0 : index
    %157 = vector.load %arg7[%c0_48, %c0_49] : memref<128x512xbf16, #tpu.memory_space<vmem>>, vector<128x512xbf16>
    %cst_50 = arith.constant dense<0.000000e+00> : vector<18x512xf32>
    %158 = tpu.matmul %156, %157, %cst_50 {dimension_numbers = #tpu.dot_dimension_numbers<[1], [0], [0], [1], [0, 0, 1, 1], [], []>} : vector<18x128xbf16>, vector<128x512xbf16>, vector<18x512xf32> -> vector<18x512xf32>
    %159 = vector.broadcast %19 : vector<1x512xf32> to vector<18x512xf32>
    %160 = arith.addf %158, %159 : vector<18x512xf32>
    %cst_51 = arith.constant 5.000000e-01 : f32
    %161 = vector.broadcast %cst_51 : f32 to vector<18x512xf32>
    %162 = arith.mulf %161, %160 : vector<18x512xf32>
    %cst_52 = arith.constant 0.707106769 : f32
    %163 = vector.broadcast %cst_52 : f32 to vector<18x512xf32>
    %164 = arith.mulf %160, %163 : vector<18x512xf32>
    %cst_53 = arith.constant 0.000000e+00 : f32
    %165 = vector.broadcast %cst_53 : f32 to vector<18x512xf32>
    %166 = arith.cmpf oge, %164, %165 : vector<18x512xf32>
    %cst_54 = arith.constant 1.000000e+00 : f32
    %cst_55 = arith.constant -1.000000e+00 : f32
    %167 = vector.broadcast %cst_54 : f32 to vector<18x512xf32>
    %168 = vector.broadcast %cst_55 : f32 to vector<18x512xf32>
    %169 = arith.select %166, %167, %168 : vector<18x512xi1>, vector<18x512xf32>
    %170 = math.absf %164 : vector<18x512xf32>
    %cst_56 = arith.constant 0.327591091 : f32
    %171 = vector.broadcast %cst_56 : f32 to vector<18x512xf32>
    %172 = arith.mulf %171, %170 : vector<18x512xf32>
    %cst_57 = arith.constant 1.000000e+00 : f32
    %173 = vector.broadcast %cst_57 : f32 to vector<18x512xf32>
    %174 = arith.addf %173, %172 : vector<18x512xf32>
    %cst_58 = arith.constant 1.000000e+00 : f32
    %175 = vector.broadcast %cst_58 : f32 to vector<18x512xf32>
    %176 = arith.divf %175, %174 : vector<18x512xf32>
    %cst_59 = arith.constant 1.06140542 : f32
    %177 = vector.broadcast %cst_59 : f32 to vector<18x512xf32>
    %178 = arith.mulf %177, %176 : vector<18x512xf32>
    %cst_60 = arith.constant -1.45315206 : f32
    %179 = vector.broadcast %cst_60 : f32 to vector<18x512xf32>
    %180 = arith.addf %178, %179 : vector<18x512xf32>
    %181 = arith.mulf %180, %176 : vector<18x512xf32>
    %cst_61 = arith.constant 1.42141378 : f32
    %182 = vector.broadcast %cst_61 : f32 to vector<18x512xf32>
    %183 = arith.addf %181, %182 : vector<18x512xf32>
    %184 = arith.mulf %183, %176 : vector<18x512xf32>
    %cst_62 = arith.constant -0.284496725 : f32
    %185 = vector.broadcast %cst_62 : f32 to vector<18x512xf32>
    %186 = arith.addf %184, %185 : vector<18x512xf32>
    %187 = arith.mulf %186, %176 : vector<18x512xf32>
    %cst_63 = arith.constant 0.254829586 : f32
    %188 = vector.broadcast %cst_63 : f32 to vector<18x512xf32>
    %189 = arith.addf %187, %188 : vector<18x512xf32>
    %190 = arith.mulf %189, %176 : vector<18x512xf32>
    %cst_64 = arith.constant 0.000000e+00 : f32
    %191 = vector.broadcast %cst_64 : f32 to vector<18x512xf32>
    %192 = arith.subf %191, %170 : vector<18x512xf32>
    %193 = arith.mulf %192, %170 : vector<18x512xf32>
    %194 = math.exp %193 : vector<18x512xf32>
    %195 = arith.mulf %190, %194 : vector<18x512xf32>
    %cst_65 = arith.constant 1.000000e+00 : f32
    %196 = vector.broadcast %cst_65 : f32 to vector<18x512xf32>
    %197 = arith.subf %196, %195 : vector<18x512xf32>
    %198 = arith.mulf %169, %197 : vector<18x512xf32>
    %cst_66 = arith.constant 1.000000e+00 : f32
    %199 = vector.broadcast %cst_66 : f32 to vector<18x512xf32>
    %200 = arith.addf %199, %198 : vector<18x512xf32>
    %201 = arith.mulf %162, %200 : vector<18x512xf32>
    %202 = arith.truncf %201 : vector<18x512xf32> to vector<18x512xbf16>
    %c0_67 = arith.constant 0 : index
    %c0_68 = arith.constant 0 : index
    %203 = vector.load %arg8[%c0_67, %c0_68] : memref<512x128xbf16, #tpu.memory_space<vmem>>, vector<512x128xbf16>
    %cst_69 = arith.constant dense<0.000000e+00> : vector<18x128xf32>
    %204 = tpu.matmul %202, %203, %cst_69 {dimension_numbers = #tpu.dot_dimension_numbers<[1], [0], [0], [1], [0, 0, 1, 1], [], []>} : vector<18x512xbf16>, vector<512x128xbf16>, vector<18x128xf32> -> vector<18x128xf32>
    %205 = arith.addf %135, %204 : vector<18x128xf32>
    %206 = vector.broadcast %20 : vector<1x128xf32> to vector<18x128xf32>
    %207 = arith.addf %205, %206 : vector<18x128xf32>
    %c0_70 = arith.constant 0 : index
    %c1792 = arith.constant 1792 : index
    %208 = vector.load %arg3[%c0_70, %c1792] : memref<1x2048xf32, #tpu.memory_space<vmem>>, vector<1x128xf32>
    %c0_71 = arith.constant 0 : index
    %c1920 = arith.constant 1920 : index
    %209 = vector.load %arg3[%c0_71, %c1920] : memref<1x2048xf32, #tpu.memory_space<vmem>>, vector<1x128xf32>
    %cst_72 = arith.constant dense<0.000000e+00> : vector<18xf32>
    %210 = vector.multi_reduction <add>, %207, %cst_72 [1] : vector<18x128xf32> to vector<18xf32>
    %211 = vector.shape_cast %210 : vector<18xf32> to vector<18x1xf32>
    %cst_73 = arith.constant 1.280000e+02 : f32
    %212 = vector.broadcast %cst_73 : f32 to vector<18x1xf32>
    %213 = arith.divf %211, %212 : vector<18x1xf32>
    %214 = vector.broadcast %213 : vector<18x1xf32> to vector<18x128xf32>
    %215 = arith.subf %207, %214 : vector<18x128xf32>
    %216 = arith.mulf %215, %215 : vector<18x128xf32>
    %cst_74 = arith.constant dense<0.000000e+00> : vector<18xf32>
    %217 = vector.multi_reduction <add>, %216, %cst_74 [1] : vector<18x128xf32> to vector<18xf32>
    %218 = vector.shape_cast %217 : vector<18xf32> to vector<18x1xf32>
    %cst_75 = arith.constant 1.280000e+02 : f32
    %219 = vector.broadcast %cst_75 : f32 to vector<18x1xf32>
    %220 = arith.divf %218, %219 : vector<18x1xf32>
    %cst_76 = arith.constant 9.99999974E-6 : f32
    %221 = vector.broadcast %cst_76 : f32 to vector<18x1xf32>
    %222 = arith.addf %220, %221 : vector<18x1xf32>
    %223 = math.sqrt %222 : vector<18x1xf32>
    %224 = vector.broadcast %223 : vector<18x1xf32> to vector<18x128xf32>
    %225 = arith.divf %215, %224 : vector<18x128xf32>
    %226 = vector.broadcast %208 : vector<1x128xf32> to vector<18x128xf32>
    %227 = arith.mulf %225, %226 : vector<18x128xf32>
    %228 = vector.broadcast %209 : vector<1x128xf32> to vector<18x128xf32>
    %229 = arith.addf %227, %228 : vector<18x128xf32>
    %230 = vector.shape_cast %229 : vector<18x128xf32> to vector<2x9x128xf32>
    %c0_77 = arith.constant 0 : index
    %c0_78 = arith.constant 0 : index
    %c0_79 = arith.constant 0 : index
    %231 = vector.load %arg9[%c0_77, %c0_78, %c0_79] : memref<2x9x128xf32, #tpu.memory_space<vmem>>, vector<2x9x128xf32>
    tpu.vector_store %arg9[%c0_77, %c0_78, %c0_79], %230 {strides = array<i32>} : memref<2x9x128xf32, #tpu.memory_space<vmem>>, vector<2x9x128xf32>,
    return
  }
  func.func @transform_0(%arg0: i32) -> (i32, i32, i32) {
    %c0_i32 = arith.constant 0 : i32
    %c0_i32_0 = arith.constant 0 : i32
    %c0_i32_1 = arith.constant 0 : i32
    return %arg0, %c0_i32, %c0_i32_0 : i32, i32, i32
  }
  func.func @transform_1(%arg0: i32) -> (i32, i32) {
    %c0_i32 = arith.constant 0 : i32
    %c0_i32_0 = arith.constant 0 : i32
    %c0_i32_1 = arith.constant 0 : i32
    return %c0_i32, %c0_i32_0 : i32, i32
  }
  func.func @transform_2(%arg0: i32) -> (i32, i32) {
    %c0_i32 = arith.constant 0 : i32
    %c0_i32_0 = arith.constant 0 : i32
    %c0_i32_1 = arith.constant 0 : i32
    return %c0_i32, %c0_i32_0 : i32, i32
  }
  func.func @transform_3(%arg0: i32) -> (i32, i32) {
    %c0_i32 = arith.constant 0 : i32
    %c0_i32_0 = arith.constant 0 : i32
    %c0_i32_1 = arith.constant 0 : i32
    return %c0_i32, %c0_i32_0 : i32, i32
  }
  func.func @transform_4(%arg0: i32) -> (i32, i32) {
    %c0_i32 = arith.constant 0 : i32
    %c0_i32_0 = arith.constant 0 : i32
    %c0_i32_1 = arith.constant 0 : i32
    return %c0_i32, %c0_i32_0 : i32, i32
  }
  func.func @transform_5(%arg0: i32) -> (i32, i32) {
    %c0_i32 = arith.constant 0 : i32
    %c0_i32_0 = arith.constant 0 : i32
    %c0_i32_1 = arith.constant 0 : i32
    return %c0_i32, %c0_i32_0 : i32, i32
  }
  func.func @transform_6(%arg0: i32) -> (i32, i32) {
    %c0_i32 = arith.constant 0 : i32
    %c0_i32_0 = arith.constant 0 : i32
    %c0_i32_1 = arith.constant 0 : i32
    return %c0_i32, %c0_i32_0 : i32, i32
  }
  func.func @transform_7(%arg0: i32) -> (i32, i32) {
    %c0_i32 = arith.constant 0 : i32
    %c0_i32_0 = arith.constant 0 : i32
    %c0_i32_1 = arith.constant 0 : i32
    return %c0_i32, %c0_i32_0 : i32, i32
  }
  func.func @transform_8(%arg0: i32) -> (i32, i32, i32) {
    %c0_i32 = arith.constant 0 : i32
    %c0_i32_0 = arith.constant 0 : i32
    %c0_i32_1 = arith.constant 0 : i32
    return %arg0, %c0_i32, %c0_i32_0 : i32, i32, i32
  }
}

</mosaic_0001>

<llo_original>
// kernel: vit_encoder_forward.2
$region0: #{vit_encoder_forward.2}
  #allocation0 [shape = 'u32[]', space=smem, size = 0x4, offset = 0x4, fixed_abs, tag = 'smem constant byte address 0x4 - core index']
  #allocation1 [shape = 'u32[72,128]{1,0:T(1,128)}', space=vmem, size = 0x9000, scoped, tag = 'internal scratch']
  %s0 = inlined_call_operand.vmem [shape: bf16[98,192], index: 0, kind: input, shape index: {}]
  %s1 = inlined_call_operand.vmem [shape: bf16[192,128], index: 1, kind: input, shape index: {}]
  %s2 = inlined_call_operand.vmem [shape: f32[1,128], index: 2, kind: input, shape index: {}]
  %s3 = inlined_call_operand.vmem [shape: bf16[98,128], index: 3, kind: output, shape index: {}]
  %s4 = sld [smem:[#allocation0]]
  $region22: #{vit_encoder_forward.2} parent=0
    _
  %s6 = ssub.s32 1, %s4
  %s7 = scalar_select 0, %s6, %s4
  // Predicated region
  $region2: #{vit_encoder_forward.2} parent=0 // pred_check
    _
  $region3: #{vit_encoder_forward.2} parent=0 // pred_check_branch
    %9 = sbr.rel (0) target = $region5
  $region4: #{vit_encoder_forward.2} parent=0 // pred_region
    _
  $region5: #{vit_encoder_forward.2} parent=0 // pred_fallthru
    _
  // Predicated region
  $region6: #{vit_encoder_forward.2} parent=0 // pred_check
    _
  $region7: #{vit_encoder_forward.2} parent=0 // pred_check_branch
    %11 = sbr.rel (0) target = $region9
  $region8: #{vit_encoder_forward.2} parent=0 // pred_region
    _
  $region9: #{vit_encoder_forward.2} parent=0 // pred_fallthru
    _
  // Predicated region
  $region10: #{vit_encoder_forward.2} parent=0 // pred_check
    _
  $region11: #{vit_encoder_forward.2} parent=0 // pred_check_branch
    %13 = sbr.rel (0) target = $region13
  $region12: #{vit_encoder_forward.2} parent=0 // pred_region
    _
  $region13: #{vit_encoder_forward.2} parent=0 // pred_fallthru
    _
  %v15 = vld [vmem:[%s0] sm:$0xff]
  %v16 = vld [vmem:[%s0 + $0x8] sm:$0xff]
  %v17 = vld [vmem:[%s0 + $0x10] sm:$0xff]
  %v18 = vld [vmem:[%s0 + $0x18] sm:$0xff]
  %v19 = vld [vmem:[%s0 + $0x20] sm:$0xff]
  %v20 = vld [vmem:[%s0 + $0x28] sm:$0xff]
  %v21 = vld [vmem:[%s0 + $0x30] sm:$0xff]
  %v22 = vld [vmem:[%s0 + $0x38] sm:$0xff]
  %v23 = vld [vmem:[%s0 + $0x40] sm:$0xff]
  %v24 = vld [vmem:[%s0 + $0x48] sm:$0xff]
  %v25 = vld [vmem:[%s0 + $0x50] sm:$0xff]
  %v26 = vld [vmem:[%s0 + $0x58] sm:$0xff]
  %v27 = vld [vmem:[%s0 + $0x60] sm:$0x11]
  %v28 = vld [vmem:[%s1] sm:$0xf]
  %v29 = vld [vmem:[%s1 + $0x4] sm:$0xf]
  %v30 = vld [vmem:[%s1 + $0x8] sm:$0xf]
  %v31 = vld [vmem:[%s1 + $0xc] sm:$0xf]
  %v32 = vld [vmem:[%s1 + $0x10] sm:$0xf]
  %v33 = vld [vmem:[%s1 + $0x14] sm:$0xf]
  %v34 = vld [vmem:[%s1 + $0x18] sm:$0xf]
  %v35 = vld [vmem:[%s1 + $0x1c] sm:$0xf]
  %v36 = vld [vmem:[%s1 + $0x20] sm:$0xf]
  %v37 = vld [vmem:[%s1 + $0x24] sm:$0xf]
  %v38 = vld [vmem:[%s1 + $0x28] sm:$0xf]
  %v39 = vld [vmem:[%s1 + $0x2c] sm:$0xf]
  %v40 = vld [vmem:[%s1 + $0x30] sm:$0xf]
  %v41 = vld [vmem:[%s1 + $0x34] sm:$0xf]
  %v42 = vld [vmem:[%s1 + $0x38] sm:$0xf]
  %v43 = vld [vmem:[%s1 + $0x3c] sm:$0xf]
  %v44 = vld [vmem:[%s1 + $0x40] sm:$0xf]
  %v45 = vld [vmem:[%s1 + $0x44] sm:$0xf]
  %v46 = vld [vmem:[%s1 + $0x48] sm:$0xf]
  %v47 = vld [vmem:[%s1 + $0x4c] sm:$0xf]
  %v48 = vld [vmem:[%s1 + $0x50] sm:$0xf]
  %v49 = vld [vmem:[%s1 + $0x54] sm:$0xf]
  %v50 = vld [vmem:[%s1 + $0x58] sm:$0xf]
  %v51 = vld [vmem:[%s1 + $0x5c] sm:$0xf]
  %v52 = vld [vmem:[%s2] sm:$0x1]
  %v54 = vperm.slane %v52, 0
  %v69 = vunpack.c.l.b16 %v15
  %v70 = vunpack.c.h.b16 %v15
  %v71 = vunpack.c.l.b16 %v16
  %v72 = vunpack.c.h.b16 %v16
  %v73 = vunpack.c.l.b16 %v17
  %v74 = vunpack.c.h.b16 %v17
  %v75 = vunpack.c.l.b16 %v18
  %v76 = vunpack.c.h.b16 %v18
  %v77 = vunpack.c.l.b16 %v19
  %v78 = vunpack.c.h.b16 %v19
  %v79 = vunpack.c.l.b16 %v20
  %v80 = vunpack.c.h.b16 %v20
  %v81 = vunpack.c.l.b16 %v21
  %v82 = vunpack.c.h.b16 %v21
  %v83 = vunpack.c.l.b16 %v22
  %v84 = vunpack.c.h.b16 %v22
  %v85 = vunpack.c.l.b16 %v23
  %v86 = vunpack.c.h.b16 %v23
  %v87 = vunpack.c.l.b16 %v24
  %v88 = vunpack.c.h.b16 %v24
  %v89 = vunpack.c.l.b16 %v25
  %v90 = vunpack.c.h.b16 %v25
  %v91 = vunpack.c.l.b16 %v26
  %v92 = vunpack.c.h.b16 %v26
  %v93 = vunpack.c.l.b16 %v27
  %v94 = vunpack.c.h.b16 %v27
  %v95 = vpack.c.b16 %v71, %v69
  %v96 = vpack.c.b16 %v72, %v70
  %v97 = vpack.c.b16 %v75, %v73
  %v98 = vpack.c.b16 %v76, %v74
  %v99 = vpack.c.b16 %v79, %v77
  %v100 = vpack.c.b16 %v80, %v78
  %v101 = vpack.c.b16 %v83, %v81
  %v102 = vpack.c.b16 %v84, %v82
  %v103 = vpack.c.b16 %v87, %v85
  %v104 = vpack.c.b16 %v88, %v86
  %v105 = vpack.c.b16 %v91, %v89
  %v106 = vpack.c.b16 %v92, %v90
  %v107 = vpack.c.b16 %v93, %v93
  %v108 = vpack.c.b16 %v94, %v94
  %v140 = vunpack.c.l.b16 %v28
  %v141 = vunpack.c.l.b16 %v29
  %v142 = vunpack.c.l.b16 %v30
  %v143 = vunpack.c.l.b16 %v31
  %v144 = vunpack.c.l.b16 %v32
  %v145 = vunpack.c.l.b16 %v33
  %v146 = vunpack.c.l.b16 %v34
  %v147 = vunpack.c.l.b16 %v35
  %v148 = vunpack.c.l.b16 %v36
  %v149 = vunpack.c.l.b16 %v37
  %v150 = vunpack.c.l.b16 %v38
  %v151 = vunpack.c.l.b16 %v39
  %v152 = vunpack.c.l.b16 %v40
  %v153 = vunpack.c.l.b16 %v41
  %v154 = vunpack.c.l.b16 %v42
  %v155 = vunpack.c.l.b16 %v43
  %v156 = vunpack.c.l.b16 %v44
  %v157 = vunpack.c.l.b16 %v45
  %v158 = vunpack.c.l.b16 %v46
  %v159 = vunpack.c.l.b16 %v47
  %v160 = vunpack.c.l.b16 %v48
  %v161 = vunpack.c.l.b16 %v49
  %v162 = vunpack.c.l.b16 %v50
  %v163 = vunpack.c.l.b16 %v51
  %v164 = vpack.c.b16 %v141, %v140
  %v165 = vpack.c.b16 %v143, %v142
  %v166 = vpack.c.b16 %v145, %v144
  %v167 = vpack.c.b16 %v147, %v146
  %v168 = vpack.c.b16 %v149, %v148
  %v169 = vpack.c.b16 %v151, %v150
  %v170 = vpack.c.b16 %v153, %v152
  %v171 = vpack.c.b16 %v155, %v154
  %v172 = vpack.c.b16 %v157, %v156
  %v173 = vpack.c.b16 %v159, %v158
  %v174 = vpack.c.b16 %v161, %v160
  %v175 = vpack.c.b16 %v163, %v162
  %vm188 = vcmask 523264
  %v190 = vsel %vm188, %v96, 0
  %v193 = vsel %vm188, %v98, 0
  %v196 = vsel %vm188, %v100, 0
  %v199 = vsel %vm188, %v102, 0
  %v202 = vsel %vm188, %v104, 0
  %v205 = vsel %vm188, %v106, 0
  %v208 = vsel %vm188, %v108, 0
  %210 = vmatpush.bf16.msra.mxu0 %v171
  %211 = vmatpush.bf16.msra.mxu0 %v170
  %212 = vmatpush.bf16.msra.mxu0 %v169
  %213 = vmatpush.bf16.msra.mxu0 %v168
  %214 = vmatpush.bf16.msra.mxu0 %v167
  %215 = vmatpush.bf16.msra.mxu0 %v166
  %216 = vmatpush.bf16.msra.mxu0 %v165
  %217 = vmatpush.bf16.msra.mxu0 %v164
  %218 = vmatmul.bf16.gmra.mxu0 %v95
  %v219 = vpop.f32.mrf.mxu0
  %v220 = vadd.f32 %v54, %v219
  %v221 = vpop.f32.mrf.mxu0
  %v222 = vadd.f32 %v54, %v221
  %223 = vmatmul.bf16.gmra.mxu0 %v97
  %v224 = vpop.f32.mrf.mxu0
  %v225 = vadd.f32 %v54, %v224
  %v226 = vpop.f32.mrf.mxu0
  %v227 = vadd.f32 %v54, %v226
  %228 = vmatmul.bf16.gmra.mxu0 %v99
  %v229 = vpop.f32.mrf.mxu0
  %v230 = vadd.f32 %v54, %v229
  %v231 = vpop.f32.mrf.mxu0
  %v232 = vadd.f32 %v54, %v231
  %233 = vmatmul.bf16.gmra.mxu0 %v101
  %v234 = vpop.f32.mrf.mxu0
  %v235 = vadd.f32 %v54, %v234
  %v236 = vpop.f32.mrf.mxu0
  %v237 = vadd.f32 %v54, %v236
  %238 = vmatmul.bf16.gmra.mxu0 %v103
  %v239 = vpop.f32.mrf.mxu0
  %v240 = vadd.f32 %v54, %v239
  %v241 = vpop.f32.mrf.mxu0
  %v242 = vadd.f32 %v54, %v241
  %243 = vmatmul.bf16.gmra.mxu0 %v105
  %v244 = vpop.f32.mrf.mxu0
  %v245 = vadd.f32 %v54, %v244
  %v246 = vpop.f32.mrf.mxu0
  %v247 = vadd.f32 %v54, %v246
  %248 = vmatmul.bf16.gmra.mxu0 %v107
  %v249 = vpop.f32.mrf.mxu0
  %v250 = vadd.f32 %v54, %v249
  %v251 = vpop.f32.mrf.mxu0
  %252 = vdwg.mxu0
  %253 = vmatpush.bf16.msra.mxu0 0
  %254 = vmatpush.bf16.msra.mxu0 0
  %255 = vmatpush.bf16.msra.mxu0 0
  %256 = vmatpush.bf16.msra.mxu0 0
  %257 = vmatpush.bf16.msra.mxu0 %v175
  %258 = vmatpush.bf16.msra.mxu0 %v174
  %259 = vmatpush.bf16.msra.mxu0 %v173
  %260 = vmatpush.bf16.msra.mxu0 %v172
  %261 = vmatmul.bf16.gmra.mxu0 %v190
  %v262 = vpop.f32.mrf.mxu0
  %v263 = vadd.f32 %v220, %v262
  %v264 = vpop.f32.mrf.mxu0
  %v265 = vadd.f32 %v222, %v264
  %266 = vmatmul.bf16.gmra.mxu0 %v193
  %v267 = vpop.f32.mrf.mxu0
  %v268 = vadd.f32 %v225, %v267
  %v269 = vpop.f32.mrf.mxu0
  %v270 = vadd.f32 %v227, %v269
  %271 = vmatmul.bf16.gmra.mxu0 %v196
  %v272 = vpop.f32.mrf.mxu0
  %v273 = vadd.f32 %v230, %v272
  %v274 = vpop.f32.mrf.mxu0
  %v275 = vadd.f32 %v232, %v274
  %276 = vmatmul.bf16.gmra.mxu0 %v199
  %v277 = vpop.f32.mrf.mxu0
  %v278 = vadd.f32 %v235, %v277
  %v279 = vpop.f32.mrf.mxu0
  %v280 = vadd.f32 %v237, %v279
  %281 = vmatmul.bf16.gmra.mxu0 %v202
  %v282 = vpop.f32.mrf.mxu0
  %v283 = vadd.f32 %v240, %v282
  %v284 = vpop.f32.mrf.mxu0
  %v285 = vadd.f32 %v242, %v284
  %286 = vmatmul.bf16.gmra.mxu0 %v205
  %v287 = vpop.f32.mrf.mxu0
  %v288 = vadd.f32 %v245, %v287
  %v289 = vpop.f32.mrf.mxu0
  %v290 = vadd.f32 %v247, %v289
  %291 = vmatmul.bf16.gmra.mxu0 %v208
  %v292 = vpop.f32.mrf.mxu0
  %v293 = vadd.f32 %v250, %v292
  %v294 = vpop.f32.mrf.mxu0
  %295 = vdwg.mxu0
  %v296 = vmax.f32 %v263, 0.0
  %v297 = vmax.f32 %v265, 0.0
  %v298 = vmax.f32 %v268, 0.0
  %v299 = vmax.f32 %v270, 0.0
  %v300 = vmax.f32 %v273, 0.0
  %v301 = vmax.f32 %v275, 0.0
  %v302 = vmax.f32 %v278, 0.0
  %v303 = vmax.f32 %v280, 0.0
  %v304 = vmax.f32 %v283, 0.0
  %v305 = vmax.f32 %v285, 0.0
  %v306 = vmax.f32 %v288, 0.0
  %v307 = vmax.f32 %v290, 0.0
  %v308 = vmax.f32 %v293, 0.0
  %v309 = vpack.c.bf16 %v296, %v296
  %v310 = vpack.c.bf16 %v297, %v297
  %v311 = vpack.c.bf16 %v298, %v298
  %v312 = vpack.c.bf16 %v299, %v299
  %v313 = vpack.c.bf16 %v300, %v300
  %v314 = vpack.c.bf16 %v301, %v301
  %v315 = vpack.c.bf16 %v302, %v302
  %v316 = vpack.c.bf16 %v303, %v303
  %v317 = vpack.c.bf16 %v304, %v304
  %v318 = vpack.c.bf16 %v305, %v305
  %v319 = vpack.c.bf16 %v306, %v306
  %v320 = vpack.c.bf16 %v307, %v307
  %v321 = vpack.c.bf16 %v308, %v308
  %322 = vst [vmem:[%s3] sm:$0xf] %v309
  %323 = vst [vmem:[%s3 + $0x4] sm:$0xf] %v310
  %324 = vst [vmem:[%s3 + $0x8] sm:$0xf] %v311
  %325 = vst [vmem:[%s3 + $0xc] sm:$0xf] %v312
  %326 = vst [vmem:[%s3 + $0x10] sm:$0xf] %v313
  %327 = vst [vmem:[%s3 + $0x14] sm:$0xf] %v314
  %328 = vst [vmem:[%s3 + $0x18] sm:$0xf] %v315
  %329 = vst [vmem:[%s3 + $0x1c] sm:$0xf] %v316
  %330 = vst [vmem:[%s3 + $0x20] sm:$0xf] %v317
  %331 = vst [vmem:[%s3 + $0x24] sm:$0xf] %v318
  %332 = vst [vmem:[%s3 + $0x28] sm:$0xf] %v319
  %333 = vst [vmem:[%s3 + $0x2c] sm:$0xf] %v320
  %334 = vst [vmem:[%s3 + $0x30] sm:$0x1] %v321
  // Predicated region
  $region14: #{vit_encoder_forward.2} parent=0 // pred_check
    _
  $region15: #{vit_encoder_forward.2} parent=0 // pred_check_branch
    %336 = sbr.rel (0) target = $region17
  $region16: #{vit_encoder_forward.2} parent=0 // pred_region
    _
  $region17: #{vit_encoder_forward.2} parent=0 // pred_fallthru
    _
  // Predicated region
  $region18: #{vit_encoder_forward.2} parent=0 // pred_check
    _
  $region19: #{vit_encoder_forward.2} parent=0 // pred_check_branch
    %338 = sbr.rel (0) target = $region21
  $region20: #{vit_encoder_forward.2} parent=0 // pred_region
    _
  $region21: #{vit_encoder_forward.2} parent=0 // pred_fallthru
    _

// kernel: vit_encoder_forward.3
$region0: #{vit_encoder_forward.3}
  #allocation0 [shape = 'u32[]', space=smem, size = 0x4, offset = 0x4, fixed_abs, tag = 'smem constant byte address 0x4 - core index']
  #allocation1 [shape = 'u32[72,128]{1,0:T(1,128)}', space=vmem, size = 0x9000, scoped, tag = 'internal scratch']
  %s0 = inlined_call_operand.vmem [shape: bf16[2,9,1152], index: 0, kind: input, shape index: {}]
  %s1 = inlined_call_operand.vmem [shape: f32[9,128], index: 1, kind: input, shape index: {}]
  %s2 = inlined_call_operand.vmem [shape: f32[1,2048], index: 2, kind: input, shape index: {}]
  %s3 = inlined_call_operand.vmem [shape: bf16[1152,128], index: 3, kind: input, shape index: {}]
  %s4 = inlined_call_operand.vmem [shape: bf16[128,384], index: 4, kind: input, shape index: {}]
  %s5 = inlined_call_operand.vmem [shape: bf16[128,128], index: 5, kind: input, shape index: {}]
  %s6 = inlined_call_operand.vmem [shape: bf16[128,512], index: 6, kind: input, shape index: {}]
  %s7 = inlined_call_operand.vmem [shape: bf16[512,128], index: 7, kind: input, shape index: {}]
  %s8 = inlined_call_operand.vmem [shape: f32[2,9,128], index: 8, kind: output, shape index: {}]
  %s9 = sld [smem:[#allocation0]]
  $region42: #{vit_encoder_forward.3} parent=0
    _
  %s11 = ssub.s32 1, %s9
  %s12 = scalar_select 0, %s11, %s9
  // Predicated region
  $region2: #{vit_encoder_forward.3} parent=0 // pred_check
    _
  $region3: #{vit_encoder_forward.3} parent=0 // pred_check_branch
    %14 = sbr.rel (0) target = $region5
  $region4: #{vit_encoder_forward.3} parent=0 // pred_region
    _
  $region5: #{vit_encoder_forward.3} parent=0 // pred_fallthru
    _
  // Predicated region
  $region6: #{vit_encoder_forward.3} parent=0 // pred_check
    _
  $region7: #{vit_encoder_forward.3} parent=0 // pred_check_branch
    %16 = sbr.rel (0) target = $region9
  $region8: #{vit_encoder_forward.3} parent=0 // pred_region
    _
  $region9: #{vit_encoder_forward.3} parent=0 // pred_fallthru
    _
  // Predicated region
  $region10: #{vit_encoder_forward.3} parent=0 // pred_check
    _
  $region11: #{vit_encoder_forward.3} parent=0 // pred_check_branch
    %18 = sbr.rel (0) target = $region13
  $region12: #{vit_encoder_forward.3} parent=0 // pred_region
    _
  $region13: #{vit_encoder_forward.3} parent=0 // pred_fallthru
    _
  // Predicated region
  $region14: #{vit_encoder_forward.3} parent=0 // pred_check
    _
  $region15: #{vit_encoder_forward.3} parent=0 // pred_check_branch
    %20 = sbr.rel (0) target = $region17
  $region16: #{vit_encoder_forward.3} parent=0 // pred_region
    _
  $region17: #{vit_encoder_forward.3} parent=0 // pred_fallthru
    _
  // Predicated region
  $region18: #{vit_encoder_forward.3} parent=0 // pred_check
    _
  $region19: #{vit_encoder_forward.3} parent=0 // pred_check_branch
    %22 = sbr.rel (0) target = $region21
  $region20: #{vit_encoder_forward.3} parent=0 // pred_region
    _
  $region21: #{vit_encoder_forward.3} parent=0 // pred_fallthru
    _
  // Predicated region
  $region22: #{vit_encoder_forward.3} parent=0 // pred_check
    _
  $region23: #{vit_encoder_forward.3} parent=0 // pred_check_branch
    %24 = sbr.rel (0) target = $region25
  $region24: #{vit_encoder_forward.3} parent=0 // pred_region
    _
  $region25: #{vit_encoder_forward.3} parent=0 // pred_fallthru
    _
  // Predicated region
  $region26: #{vit_encoder_forward.3} parent=0 // pred_check
    _
  $region27: #{vit_encoder_forward.3} parent=0 // pred_check_branch
    %26 = sbr.rel (0) target = $region29
  $region28: #{vit_encoder_forward.3} parent=0 // pred_region
    _
  $region29: #{vit_encoder_forward.3} parent=0 // pred_fallthru
    _
  // Predicated region
  $region30: #{vit_encoder_forward.3} parent=0 // pred_check
    _
  $region31: #{vit_encoder_forward.3} parent=0 // pred_check_branch
    %28 = sbr.rel (0) target = $region33
  $region32: #{vit_encoder_forward.3} parent=0 // pred_region
    _
  $region33: #{vit_encoder_forward.3} parent=0 // pred_fallthru
    _
  %v30 = vld [vmem:[%s2] sm:$0x1]
  %v31 = vld [vmem:[%s0] sm:$0xff]
  %v32 = vld [vmem:[%s0 + $0x8] sm:$0xff]
  %v33 = vld [vmem:[%s0 + $0x10] sm:$0xff]
  %v34 = vld [vmem:[%s0 + $0x18] sm:$0xff]
  %v35 = vld [vmem:[%s0 + $0x20] sm:$0xf]
  %v36 = vld [vmem:[%s0 + $0x24] sm:$0x11]
  %v37 = vld [vmem:[%s0 + $0x2c] sm:$0x11]
  %v38 = vld [vmem:[%s0 + $0x34] sm:$0x11]
  %v39 = vld [vmem:[%s0 + $0x3c] sm:$0x11]
  %v40 = vld [vmem:[%s0 + $0x44] sm:$0x1]
  %v41 = vld [vmem:[%s0 + $0x48] sm:$0xff]
  %v42 = vld [vmem:[%s0 + $0x50] sm:$0xff]
  %v43 = vld [vmem:[%s0 + $0x58] sm:$0xff]
  %v44 = vld [vmem:[%s0 + $0x60] sm:$0xff]
  %v45 = vld [vmem:[%s0 + $0x68] sm:$0xf]
  %v46 = vld [vmem:[%s0 + $0x6c] sm:$0x11]
  %v47 = vld [vmem:[%s0 + $0x74] sm:$0x11]
  %v48 = vld [vmem:[%s0 + $0x7c] sm:$0x11]
  %v49 = vld [vmem:[%s0 + $0x84] sm:$0x11]
  %v50 = vld [vmem:[%s0 + $0x8c] sm:$0x1]
  %v71 = vrot.slane %v31, 3
  %v72 = vrot.slane %v32, 6
  %v73 = vrot.slane %v32, 1
  %v74 = vrot.slane %v33, 4
  %v75 = vrot.slane %v33, 7
  %v76 = vrot.slane %v34, 2
  %v77 = vrot.slane %v34, 5
  %v78 = vrot.slane %v35, 3
  %v79 = vrot.slane %v36, 3
  %v80 = vrot.slane %v37, 6
  %v81 = vrot.slane %v37, 1
  %v82 = vrot.slane %v38, 4
  %v83 = vrot.slane %v38, 7
  %v84 = vrot.slane %v39, 2
  %v85 = vrot.slane %v39, 5
  %v86 = vrot.slane %v40, 3
  %v87 = vrot.slane %v41, 3
  %v88 = vrot.slane %v42, 6
  %v89 = vrot.slane %v42, 1
  %v90 = vrot.slane %v43, 4
  %v91 = vrot.slane %v43, 7
  %v92 = vrot.slane %v44, 2
  %v93 = vrot.slane %v44, 5
  %v94 = vrot.slane %v45, 3
  %v95 = vrot.slane %v46, 3
  %v96 = vrot.slane %v47, 6
  %v97 = vrot.slane %v47, 1
  %v98 = vrot.slane %v48, 4
  %v99 = vrot.slane %v48, 7
  %v100 = vrot.slane %v49, 2
  %v101 = vrot.slane %v49, 5
  %v102 = vrot.slane %v50, 3
  %vm103 = vcmask 1040384
  %v106 = vsel %vm103, %v31, %v71
  %vm107 = vcmask 1042434
  %v110 = vsel %vm107, %v72, %v73
  %vm111 = vcmask 1041408
  %v112 = vsel %vm111, %v106, %v110
  %vm113 = vcmask 1044484
  %v116 = vsel %vm113, %v74, %v75
  %vm117 = vcmask 1046534
  %v120 = vsel %vm117, %v76, %v77
  %vm121 = vcmask 1045508
  %v122 = vsel %vm121, %v116, %v120
  %vm123 = vcmask 1043456
  %v124 = vsel %vm123, %v112, %v122
  %v128 = vsel %vm103, %v35, %v78
  %vm130 = vcmask 1041409
  %v131 = vsel %vm130, %v31, %v71
  %vm132 = vcmask 1043459
  %v133 = vsel %vm132, %v72, %v73
  %vm134 = vcmask 1042433
  %v135 = vsel %vm134, %v131, %v133
  %vm136 = vcmask 1045509
  %v137 = vsel %vm136, %v74, %v75
  %vm138 = vcmask 1046528
  %v139 = vsel %vm138, %v77, %v76
  %vm140 = vcmask 1046533
  %v141 = vsel %vm140, %v137, %v139
  %vm142 = vcmask 1044481
  %v143 = vsel %vm142, %v135, %v141
  %v145 = vrot.slane %v143, 1
  %v146 = vsel %vm130, %v35, %v78
  %v148 = vrot.slane %v146, 1
  %v149 = vsel %vm107, %v31, %v71
  %v150 = vsel %vm113, %v72, %v73
  %vm151 = vcmask 1043458
  %v152 = vsel %vm151, %v149, %v150
  %v153 = vsel %vm117, %v74, %v75
  %v154 = vsel %vm103, %v76, %v77
  %vm155 = vcmask 1045504
  %v156 = vsel %vm155, %v154, %v153
  %vm157 = vcmask 1045506
  %v158 = vsel %vm157, %v152, %v156
  %v160 = vrot.slane %v158, 2
  %v161 = vsel %vm107, %v35, %v78
  %v163 = vrot.slane %v161, 2
  %v164 = vsel %vm132, %v31, %v71
  %v165 = vsel %vm136, %v72, %v73
  %vm166 = vcmask 1044483
  %v167 = vsel %vm166, %v164, %v165
  %v168 = vsel %vm138, %v75, %v74
  %v169 = vsel %vm130, %v76, %v77
  %vm170 = vcmask 1046529
  %v171 = vsel %vm170, %v169, %v168
  %vm172 = vcmask 1046531
  %v173 = vsel %vm172, %v167, %v171
  %v175 = vrot.slane %v173, 3
  %v176 = vsel %vm132, %v35, %v78
  %v178 = vrot.slane %v176, 3
  %v181 = vsel %vm103, %v36, %v79
  %v184 = vsel %vm107, %v80, %v81
  %v185 = vsel %vm111, %v181, %v184
  %v188 = vsel %vm113, %v82, %v83
  %v191 = vsel %vm117, %v84, %v85
  %v192 = vsel %vm121, %v188, %v191
  %v193 = vsel %vm123, %v185, %v192
  %v197 = vsel %vm103, %v40, %v86
  %v201 = vsel %vm103, %v41, %v87
  %v204 = vsel %vm107, %v88, %v89
  %v205 = vsel %vm111, %v201, %v204
  %v208 = vsel %vm113, %v90, %v91
  %v211 = vsel %vm117, %v92, %v93
  %v212 = vsel %vm121, %v208, %v211
  %v213 = vsel %vm123, %v205, %v212
  %v217 = vsel %vm103, %v45, %v94
  %v219 = vsel %vm130, %v41, %v87
  %v220 = vsel %vm132, %v88, %v89
  %v221 = vsel %vm134, %v219, %v220
  %v222 = vsel %vm136, %v90, %v91
  %v223 = vsel %vm138, %v93, %v92
  %v224 = vsel %vm140, %v222, %v223
  %v225 = vsel %vm142, %v221, %v224
  %v227 = vrot.slane %v225, 1
  %v228 = vsel %vm130, %v45, %v94
  %v230 = vrot.slane %v228, 1
  %v231 = vsel %vm107, %v41, %v87
  %v232 = vsel %vm113, %v88, %v89
  %v233 = vsel %vm151, %v231, %v232
  %v234 = vsel %vm117, %v90, %v91
  %v235 = vsel %vm103, %v92, %v93
  %v236 = vsel %vm155, %v235, %v234
  %v237 = vsel %vm157, %v233, %v236
  %v239 = vrot.slane %v237, 2
  %v240 = vsel %vm107, %v45, %v94
  %v242 = vrot.slane %v240, 2
  %v243 = vsel %vm132, %v41, %v87
  %v244 = vsel %vm136, %v88, %v89
  %v245 = vsel %vm166, %v243, %v244
  %v246 = vsel %vm138, %v91, %v90
  %v247 = vsel %vm130, %v92, %v93
  %v248 = vsel %vm170, %v247, %v246
  %v249 = vsel %vm172, %v245, %v248
  %v251 = vrot.slane %v249, 3
  %v252 = vsel %vm132, %v45, %v94
  %v254 = vrot.slane %v252, 3
  %v257 = vsel %vm103, %v46, %v95
  %v260 = vsel %vm107, %v96, %v97
  %v261 = vsel %vm111, %v257, %v260
  %v264 = vsel %vm113, %v98, %v99
  %v267 = vsel %vm117, %v100, %v101
  %v268 = vsel %vm121, %v264, %v267
  %v269 = vsel %vm123, %v261, %v268
  %v273 = vsel %vm103, %v50, %v102
  %v275 = vunpack.i.l.s16 %v124
  %v276 = vunpack.i.l.s16 %v128
  %v277 = vunpack.i.h.s16 %v124
  %v278 = vunpack.i.h.s16 %v128
  %v279 = vunpack.i.l.s16 %v145
  %v280 = vunpack.i.l.s16 %v148
  %v281 = vunpack.i.h.s16 %v145
  %v282 = vunpack.i.h.s16 %v148
  %v283 = vunpack.i.l.s16 %v160
  %v284 = vunpack.i.l.s16 %v163
  %v285 = vunpack.i.h.s16 %v160
  %v286 = vunpack.i.h.s16 %v163
  %v287 = vunpack.i.l.s16 %v175
  %v288 = vunpack.i.l.s16 %v178
  %v289 = vunpack.i.h.s16 %v175
  %v290 = vunpack.i.h.s16 %v178
  %v291 = vunpack.i.l.s16 %v193
  %v292 = vunpack.i.l.s16 %v197
  %v293 = vunpack.i.l.s16 %v213
  %v294 = vunpack.i.l.s16 %v217
  %v295 = vunpack.i.h.s16 %v213
  %v296 = vunpack.i.h.s16 %v217
  %v297 = vunpack.i.l.s16 %v227
  %v298 = vunpack.i.l.s16 %v230
  %v299 = vunpack.i.h.s16 %v227
  %v300 = vunpack.i.h.s16 %v230
  %v301 = vunpack.i.l.s16 %v239
  %v302 = vunpack.i.l.s16 %v242
  %v303 = vunpack.i.h.s16 %v239
  %v304 = vunpack.i.h.s16 %v242
  %v305 = vunpack.i.l.s16 %v251
  %v306 = vunpack.i.l.s16 %v254
  %v307 = vunpack.i.h.s16 %v251
  %v308 = vunpack.i.h.s16 %v254
  %v309 = vunpack.i.l.s16 %v269
  %v310 = vunpack.i.l.s16 %v273
  %v311 = vld [vmem:[%s3] sm:$0xf]
  %v312 = vld [vmem:[%s3 + $0x4] sm:$0xf]
  %v313 = vld [vmem:[%s3 + $0x8] sm:$0xf]
  %v314 = vld [vmem:[%s3 + $0xc] sm:$0xf]
  %v315 = vld [vmem:[%s3 + $0x10] sm:$0xf]
  %v316 = vld [vmem:[%s3 + $0x14] sm:$0xf]
  %v317 = vld [vmem:[%s3 + $0x18] sm:$0xf]
  %v318 = vld [vmem:[%s3 + $0x1c] sm:$0xf]
  %v319 = vld [vmem:[%s3 + $0x20] sm:$0xf]
  %v320 = vld [vmem:[%s3 + $0x24] sm:$0xf]
  %v321 = vld [vmem:[%s3 + $0x28] sm:$0xf]
  %v322 = vld [vmem:[%s3 + $0x2c] sm:$0xf]
  %v323 = vld [vmem:[%s3 + $0x30] sm:$0xf]
  %v324 = vld [vmem:[%s3 + $0x34] sm:$0xf]
  %v325 = vld [vmem:[%s3 + $0x38] sm:$0xf]
  %v326 = vld [vmem:[%s3 + $0x3c] sm:$0xf]
  %v327 = vld [vmem:[%s3 + $0x40] sm:$0xf]
  %v328 = vld [vmem:[%s3 + $0x44] sm:$0xf]
  %v329 = vld [vmem:[%s3 + $0x48] sm:$0xf]
  %v330 = vld [vmem:[%s3 + $0x4c] sm:$0xf]
  %v331 = vld [vmem:[%s3 + $0x50] sm:$0xf]
  %v332 = vld [vmem:[%s3 + $0x54] sm:$0xf]
  %v333 = vld [vmem:[%s3 + $0x58] sm:$0xf]
  %v334 = vld [vmem:[%s3 + $0x5c] sm:$0xf]
  %v335 = vld [vmem:[%s3 + $0x60] sm:$0xf]
  %v336 = vld [vmem:[%s3 + $0x64] sm:$0xf]
  %v337 = vld [vmem:[%s3 + $0x68] sm:$0xf]
  %v338 = vld [vmem:[%s3 + $0x6c] sm:$0xf]
  %v339 = vld [vmem:[%s3 + $0x70] sm:$0xf]
  %v340 = vld [vmem:[%s3 + $0x74] sm:$0xf]
  %v341 = vld [vmem:[%s3 + $0x78] sm:$0xf]
  %v342 = vld [vmem:[%s3 + $0x7c] sm:$0xf]
  %v343 = vld [vmem:[%s3 + $0x80] sm:$0xf]
  %v344 = vld [vmem:[%s3 + $0x84] sm:$0xf]
  %v345 = vld [vmem:[%s3 + $0x88] sm:$0xf]
  %v346 = vld [vmem:[%s3 + $0x8c] sm:$0xf]
  %v347 = vld [vmem:[%s3 + $0x90] sm:$0xf]
  %v348 = vld [vmem:[%s3 + $0x94] sm:$0xf]
  %v349 = vld [vmem:[%s3 + $0x98] sm:$0xf]
  %v350 = vld [vmem:[%s3 + $0x9c] sm:$0xf]
  %v351 = vld [vmem:[%s3 + $0xa0] sm:$0xf]
  %v352 = vld [vmem:[%s3 + $0xa4] sm:$0xf]
  %v353 = vld [vmem:[%s3 + $0xa8] sm:$0xf]
  %v354 = vld [vmem:[%s3 + $0xac] sm:$0xf]
  %v355 = vld [vmem:[%s3 + $0xb0] sm:$0xf]
  %v356 = vld [vmem:[%s3 + $0xb4] sm:$0xf]
  %v357 = vld [vmem:[%s3 + $0xb8] sm:$0xf]
  %v358 = vld [vmem:[%s3 + $0xbc] sm:$0xf]
  %v359 = vld [vmem:[%s3 + $0xc0] sm:$0xf]
  %v360 = vld [vmem:[%s3 + $0xc4] sm:$0xf]
  %v361 = vld [vmem:[%s3 + $0xc8] sm:$0xf]
  %v362 = vld [vmem:[%s3 + $0xcc] sm:$0xf]
  %v363 = vld [vmem:[%s3 + $0xd0] sm:$0xf]
  %v364 = vld [vmem:[%s3 + $0xd4] sm:$0xf]
  %v365 = vld [vmem:[%s3 + $0xd8] sm:$0xf]
  %v366 = vld [vmem:[%s3 + $0xdc] sm:$0xf]
  %v367 = vld [vmem:[%s3 + $0xe0] sm:$0xf]
  %v368 = vld [vmem:[%s3 + $0xe4] sm:$0xf]
  %v369 = vld [vmem:[%s3 + $0xe8] sm:$0xf]
  %v370 = vld [vmem:[%s3 + $0xec] sm:$0xf]
  %v371 = vld [vmem:[%s3 + $0xf0] sm:$0xf]
  %v372 = vld [vmem:[%s3 + $0xf4] sm:$0xf]
  %v373 = vld [vmem:[%s3 + $0xf8] sm:$0xf]
  %v374 = vld [vmem:[%s3 + $0xfc] sm:$0xf]
  %v375 = vld [vmem:[%s3 + $0x100] sm:$0xf]
  %v376 = vld [vmem:[%s3 + $0x104] sm:$0xf]
  %v377 = vld [vmem:[%s3 + $0x108] sm:$0xf]
  %v378 = vld [vmem:[%s3 + $0x10c] sm:$0xf]
  %v379 = vld [vmem:[%s3 + $0x110] sm:$0xf]
  %v380 = vld [vmem:[%s3 + $0x114] sm:$0xf]
  %v381 = vld [vmem:[%s3 + $0x118] sm:$0xf]
  %v382 = vld [vmem:[%s3 + $0x11c] sm:$0xf]
  %v383 = vld [vmem:[%s3 + $0x120] sm:$0xf]
  %v384 = vld [vmem:[%s3 + $0x124] sm:$0xf]
  %v385 = vld [vmem:[%s3 + $0x128] sm:$0xf]
  %v386 = vld [vmem:[%s3 + $0x12c] sm:$0xf]
  %v387 = vld [vmem:[%s3 + $0x130] sm:$0xf]
  %v388 = vld [vmem:[%s3 + $0x134] sm:$0xf]
  %v389 = vld [vmem:[%s3 + $0x138] sm:$0xf]
  %v390 = vld [vmem:[%s3 + $0x13c] sm:$0xf]
  %v391 = vld [vmem:[%s3 + $0x140] sm:$0xf]
  %v392 = vld [vmem:[%s3 + $0x144] sm:$0xf]
  %v393 = vld [vmem:[%s3 + $0x148] sm:$0xf]
  %v394 = vld [vmem:[%s3 + $0x14c] sm:$0xf]
  %v395 = vld [vmem:[%s3 + $0x150] sm:$0xf]
  %v396 = vld [vmem:[%s3 + $0x154] sm:$0xf]
  %v397 = vld [vmem:[%s3 + $0x158] sm:$0xf]
  %v398 = vld [vmem:[%s3 + $0x15c] sm:$0xf]
  %v399 = vld [vmem:[%s3 + $0x160] sm:$0xf]
  %v400 = vld [vmem:[%s3 + $0x164] sm:$0xf]
  %v401 = vld [vmem:[%s3 + $0x168] sm:$0xf]
  %v402 = vld [vmem:[%s3 + $0x16c] sm:$0xf]
  %v403 = vld [vmem:[%s3 + $0x170] sm:$0xf]
  %v404 = vld [vmem:[%s3 + $0x174] sm:$0xf]
  %v405 = vld [vmem:[%s3 + $0x178] sm:$0xf]
  %v406 = vld [vmem:[%s3 + $0x17c] sm:$0xf]
  %v407 = vld [vmem:[%s3 + $0x180] sm:$0xf]
  %v408 = vld [vmem:[%s3 + $0x184] sm:$0xf]
  %v409 = vld [vmem:[%s3 + $0x188] sm:$0xf]
  %v410 = vld [vmem:[%s3 + $0x18c] sm:$0xf]
  %v411 = vld [vmem:[%s3 + $0x190] sm:$0xf]
  %v412 = vld [vmem:[%s3 + $0x194] sm:$0xf]
  %v413 = vld [vmem:[%s3 + $0x198] sm:$0xf]
  %v414 = vld [vmem:[%s3 + $0x19c] sm:$0xf]
  %v415 = vld [vmem:[%s3 + $0x1a0] sm:$0xf]
  %v416 = vld [vmem:[%s3 + $0x1a4] sm:$0xf]
  %v417 = vld [vmem:[%s3 + $0x1a8] sm:$0xf]
  %v418 = vld [vmem:[%s3 + $0x1ac] sm:$0xf]
  %v419 = vld [vmem:[%s3 + $0x1b0] sm:$0xf]
  %v420 = vld [vmem:[%s3 + $0x1b4] sm:$0xf]
  %v421 = vld [vmem:[%s3 + $0x1b8] sm:$0xf]
  %v422 = vld [vmem:[%s3 + $0x1bc] sm:$0xf]
  %v423 = vld [vmem:[%s3 + $0x1c0] sm:$0xf]
  %v424 = vld [vmem:[%s3 + $0x1c4] sm:$0xf]
  %v425 = vld [vmem:[%s3 + $0x1c8] sm:$0xf]
  %v426 = vld [vmem:[%s3 + $0x1cc] sm:$0xf]
  %v427 = vld [vmem:[%s3 + $0x1d0] sm:$0xf]
  %v428 = vld [vmem:[%s3 + $0x1d4] sm:$0xf]
  %v429 = vld [vmem:[%s3 + $0x1d8] sm:$0xf]
  %v430 = vld [vmem:[%s3 + $0x1dc] sm:$0xf]
  %v431 = vld [vmem:[%s3 + $0x1e0] sm:$0xf]
  %v432 = vld [vmem:[%s3 + $0x1e4] sm:$0xf]
  %v433 = vld [vmem:[%s3 + $0x1e8] sm:$0xf]
  %v434 = vld [vmem:[%s3 + $0x1ec] sm:$0xf]
  %v435 = vld [vmem:[%s3 + $0x1f0] sm:$0xf]
  %v436 = vld [vmem:[%s3 + $0x1f4] sm:$0xf]
  %v437 = vld [vmem:[%s3 + $0x1f8] sm:$0xf]
  %v438 = vld [vmem:[%s3 + $0x1fc] sm:$0xf]
  %v439 = vld [vmem:[%s3 + $0x200] sm:$0xf]
  %v440 = vld [vmem:[%s3 + $0x204] sm:$0xf]
  %v441 = vld [vmem:[%s3 + $0x208] sm:$0xf]
  %v442 = vld [vmem:[%s3 + $0x20c] sm:$0xf]
  %v443 = vld [vmem:[%s3 + $0x210] sm:$0xf]
  %v444 = vld [vmem:[%s3 + $0x214] sm:$0xf]
  %v445 = vld [vmem:[%s3 + $0x218] sm:$0xf]
  %v446 = vld [vmem:[%s3 + $0x21c] sm:$0xf]
  %v447 = vld [vmem:[%s3 + $0x220] sm:$0xf]
  %v448 = vld [vmem:[%s3 + $0x224] sm:$0xf]
  %v449 = vld [vmem:[%s3 + $0x228] sm:$0xf]
  %v450 = vld [vmem:[%s3 + $0x22c] sm:$0xf]
  %v451 = vld [vmem:[%s3 + $0x230] sm:$0xf]
  %v452 = vld [vmem:[%s3 + $0x234] sm:$0xf]
  %v453 = vld [vmem:[%s3 + $0x238] sm:$0xf]
  %v454 = vld [vmem:[%s3 + $0x23c] sm:$0xf]
  %v456 = vperm.slane %v30, 0
  %v458 = vpack.i.b16 %v277, %v275
  %v459 = vpack.i.b16 %v278, %v276
  %v460 = vpack.i.b16 %v281, %v279
  %v461 = vpack.i.b16 %v282, %v280
  %v462 = vpack.i.b16 %v285, %v283
  %v463 = vpack.i.b16 %v286, %v284
  %v464 = vpack.i.b16 %v289, %v287
  %v465 = vpack.i.b16 %v290, %v288
  %v466 = vpack.i.b16 %v293, %v291
  %v467 = vpack.i.b16 %v294, %v292
  %v468 = vpack.i.b16 %v297, %v295
  %v469 = vpack.i.b16 %v298, %v296
  %v470 = vpack.i.b16 %v301, %v299
  %v471 = vpack.i.b16 %v302, %v300
  %v472 = vpack.i.b16 %v305, %v303
  %v473 = vpack.i.b16 %v306, %v304
  %v474 = vpack.i.b16 %v309, %v307
  %v475 = vpack.i.b16 %v310, %v308
  %477 = vst [vmem:[#allocation1] ss:$9 sm:$0xff] %v458
  %s479 = scalar_lea.vmem [#allocation1], 1
  %480 = vst [vmem:[%s479] ss:$9 sm:$0xff] %v460
  %s482 = scalar_lea.vmem [#allocation1], 2
  %483 = vst [vmem:[%s482] ss:$9 sm:$0xff] %v462
  %s485 = scalar_lea.vmem [#allocation1], 3
  %486 = vst [vmem:[%s485] ss:$9 sm:$0xff] %v464
  %s488 = scalar_lea.vmem [#allocation1], 4
  %489 = vst [vmem:[%s488] ss:$9 sm:$0xff] %v466
  %s491 = scalar_lea.vmem [#allocation1], 5
  %492 = vst [vmem:[%s491] ss:$9 sm:$0xff] %v468
  %s494 = scalar_lea.vmem [#allocation1], 6
  %495 = vst [vmem:[%s494] ss:$9 sm:$0xff] %v470
  %s497 = scalar_lea.vmem [#allocation1], 7
  %498 = vst [vmem:[%s497] ss:$9 sm:$0xff] %v472
  %v499 = vld [vmem:[#allocation1] sm:$0xff]
  %v500 = vld [vmem:[#allocation1 + $0x9] sm:$0xff]
  %v501 = vld [vmem:[#allocation1 + $0x12] sm:$0xff]
  %v502 = vld [vmem:[#allocation1 + $0x1b] sm:$0xff]
  %v503 = vld [vmem:[#allocation1 + $0x24] sm:$0xff]
  %v504 = vld [vmem:[#allocation1 + $0x2d] sm:$0xff]
  %v505 = vld [vmem:[#allocation1 + $0x36] sm:$0xff]
  %v506 = vld [vmem:[#allocation1 + $0x3f] sm:$0xff]
  %508 = vst [vmem:[#allocation1] ss:$9 sm:$0xff] %v459
  %510 = vst [vmem:[%s479] ss:$9 sm:$0xff] %v461
  %512 = vst [vmem:[%s482] ss:$9 sm:$0xff] %v463
  %514 = vst [vmem:[%s485] ss:$9 sm:$0xff] %v465
  %516 = vst [vmem:[%s488] ss:$9 sm:$0xff] %v467
  %518 = vst [vmem:[%s491] ss:$9 sm:$0xff] %v469
  %520 = vst [vmem:[%s494] ss:$9 sm:$0xff] %v471
  %522 = vst [vmem:[%s497] ss:$9 sm:$0xff] %v473
  %v523 = vld [vmem:[#allocation1] sm:$0xff]
  %525 = vst [vmem:[#allocation1] ss:$9 sm:$0xff] %v474
  %v526 = vld [vmem:[#allocation1] sm:$0xff]
  %v527 = vld [vmem:[#allocation1 + $0x9] sm:$0xff]
  %v528 = vld [vmem:[#allocation1 + $0x12] sm:$0xff]
  %v529 = vld [vmem:[#allocation1 + $0x1b] sm:$0xff]
  %v530 = vld [vmem:[#allocation1 + $0x24] sm:$0xff]
  %v531 = vld [vmem:[#allocation1 + $0x2d] sm:$0xff]
  %v532 = vld [vmem:[#allocation1 + $0x36] sm:$0xff]
  %v533 = vld [vmem:[#allocation1 + $0x3f] sm:$0xff]
  %535 = vst [vmem:[#allocation1] ss:$9 sm:$0xff] %v475
  %v536 = vld [vmem:[#allocation1] sm:$0xff]
  %v699 = vunpack.c.l.b16 %v311
  %v700 = vunpack.c.l.b16 %v312
  %v701 = vunpack.c.l.b16 %v313
  %v702 = vunpack.c.l.b16 %v314
  %v703 = vunpack.c.l.b16 %v315
  %v704 = vunpack.c.l.b16 %v316
  %v705 = vunpack.c.l.b16 %v317
  %v706 = vunpack.c.l.b16 %v318
  %v707 = vunpack.c.l.b16 %v319
  %v708 = vunpack.c.l.b16 %v320
  %v709 = vunpack.c.l.b16 %v321
  %v710 = vunpack.c.l.b16 %v322
  %v711 = vunpack.c.l.b16 %v323
  %v712 = vunpack.c.l.b16 %v324
  %v713 = vunpack.c.l.b16 %v325
  %v714 = vunpack.c.l.b16 %v326
  %v715 = vunpack.c.l.b16 %v327
  %v716 = vunpack.c.l.b16 %v328
  %v717 = vunpack.c.l.b16 %v329
  %v718 = vunpack.c.l.b16 %v330
  %v719 = vunpack.c.l.b16 %v331
  %v720 = vunpack.c.l.b16 %v332
  %v721 = vunpack.c.l.b16 %v333
  %v722 = vunpack.c.l.b16 %v334
  %v723 = vunpack.c.l.b16 %v335
  %v724 = vunpack.c.l.b16 %v336
  %v725 = vunpack.c.l.b16 %v337
  %v726 = vunpack.c.l.b16 %v338
  %v727 = vunpack.c.l.b16 %v339
  %v728 = vunpack.c.l.b16 %v340
  %v729 = vunpack.c.l.b16 %v341
  %v730 = vunpack.c.l.b16 %v342
  %v731 = vunpack.c.l.b16 %v343
  %v732 = vunpack.c.l.b16 %v344
  %v733 = vunpack.c.l.b16 %v345
  %v734 = vunpack.c.l.b16 %v346
  %v735 = vunpack.c.l.b16 %v347
  %v736 = vunpack.c.l.b16 %v348
  %v737 = vunpack.c.l.b16 %v349
  %v738 = vunpack.c.l.b16 %v350
  %v739 = vunpack.c.l.b16 %v351
  %v740 = vunpack.c.l.b16 %v352
  %v741 = vunpack.c.l.b16 %v353
  %v742 = vunpack.c.l.b16 %v354
  %v743 = vunpack.c.l.b16 %v355
  %v744 = vunpack.c.l.b16 %v356
  %v745 = vunpack.c.l.b16 %v357
  %v746 = vunpack.c.l.b16 %v358
  %v747 = vunpack.c.l.b16 %v359
  %v748 = vunpack.c.l.b16 %v360
  %v749 = vunpack.c.l.b16 %v361
  %v750 = vunpack.c.l.b16 %v362
  %v751 = vunpack.c.l.b16 %v363
  %v752 = vunpack.c.l.b16 %v364
  %v753 = vunpack.c.l.b16 %v365
  %v754 = vunpack.c.l.b16 %v366
  %v755 = vunpack.c.l.b16 %v367
  %v756 = vunpack.c.l.b16 %v368
  %v757 = vunpack.c.l.b16 %v369
  %v758 = vunpack.c.l.b16 %v370
  %v759 = vunpack.c.l.b16 %v371
  %v760 = vunpack.c.l.b16 %v372
  %v761 = vunpack.c.l.b16 %v373
  %v762 = vunpack.c.l.b16 %v374
  %v763 = vunpack.c.l.b16 %v375
  %v764 = vunpack.c.l.b16 %v376
  %v765 = vunpack.c.l.b16 %v377
  %v766 = vunpack.c.l.b16 %v378
  %v767 = vunpack.c.l.b16 %v379
  %v768 = vunpack.c.l.b16 %v380
  %v769 = vunpack.c.l.b16 %v381
  %v770 = vunpack.c.l.b16 %v382
  %v771 = vunpack.c.l.b16 %v383
  %v772 = vunpack.c.l.b16 %v384
  %v773 = vunpack.c.l.b16 %v385
  %v774 = vunpack.c.l.b16 %v386
  %v775 = vunpack.c.l.b16 %v387
  %v776 = vunpack.c.l.b16 %v388
  %v777 = vunpack.c.l.b16 %v389
  %v778 = vunpack.c.l.b16 %v390
  %v779 = vunpack.c.l.b16 %v391
  %v780 = vunpack.c.l.b16 %v392
  %v781 = vunpack.c.l.b16 %v393
  %v782 = vunpack.c.l.b16 %v394
  %v783 = vunpack.c.l.b16 %v395
  %v784 = vunpack.c.l.b16 %v396
  %v785 = vunpack.c.l.b16 %v397
  %v786 = vunpack.c.l.b16 %v398
  %v787 = vunpack.c.l.b16 %v399
  %v788 = vunpack.c.l.b16 %v400
  %v789 = vunpack.c.l.b16 %v401
  %v790 = vunpack.c.l.b16 %v402
  %v791 = vunpack.c.l.b16 %v403
  %v792 = vunpack.c.l.b16 %v404
  %v793 = vunpack.c.l.b16 %v405
  %v794 = vunpack.c.l.b16 %v406
  %v795 = vunpack.c.l.b16 %v407
  %v796 = vunpack.c.l.b16 %v408
  %v797 = vunpack.c.l.b16 %v409
  %v798 = vunpack.c.l.b16 %v410
  %v799 = vunpack.c.l.b16 %v411
  %v800 = vunpack.c.l.b16 %v412
  %v801 = vunpack.c.l.b16 %v413
  %v802 = vunpack.c.l.b16 %v414
  %v803 = vunpack.c.l.b16 %v415
  %v804 = vunpack.c.l.b16 %v416
  %v805 = vunpack.c.l.b16 %v417
  %v806 = vunpack.c.l.b16 %v418
  %v807 = vunpack.c.l.b16 %v419
  %v808 = vunpack.c.l.b16 %v420
  %v809 = vunpack.c.l.b16 %v421
  %v810 = vunpack.c.l.b16 %v422
  %v811 = vunpack.c.l.b16 %v423
  %v812 = vunpack.c.l.b16 %v424
  %v813 = vunpack.c.l.b16 %v425
  %v814 = vunpack.c.l.b16 %v426
  %v815 = vunpack.c.l.b16 %v427
  %v816 = vunpack.c.l.b16 %v428
  %v817 = vunpack.c.l.b16 %v429
  %v818 = vunpack.c.l.b16 %v430
  %v819 = vunpack.c.l.b16 %v431
  %v820 = vunpack.c.l.b16 %v432
  %v821 = vunpack.c.l.b16 %v433
  %v822 = vunpack.c.l.b16 %v434
  %v823 = vunpack.c.l.b16 %v435
  %v824 = vunpack.c.l.b16 %v436
  %v825 = vunpack.c.l.b16 %v437
  %v826 = vunpack.c.l.b16 %v438
  %v827 = vunpack.c.l.b16 %v439
  %v828 = vunpack.c.l.b16 %v440
  %v829 = vunpack.c.l.b16 %v441
  %v830 = vunpack.c.l.b16 %v442
  %v831 = vunpack.c.l.b16 %v443
  %v832 = vunpack.c.l.b16 %v444
  %v833 = vunpack.c.l.b16 %v445
  %v834 = vunpack.c.l.b16 %v446
  %v835 = vunpack.c.l.b16 %v447
  %v836 = vunpack.c.l.b16 %v448
  %v837 = vunpack.c.l.b16 %v449
  %v838 = vunpack.c.l.b16 %v450
  %v839 = vunpack.c.l.b16 %v451
  %v840 = vunpack.c.l.b16 %v452
  %v841 = vunpack.c.l.b16 %v453
  %v842 = vunpack.c.l.b16 %v454
  %v843 = vpack.c.b16 %v700, %v699
  %v844 = vpack.c.b16 %v702, %v701
  %v845 = vpack.c.b16 %v704, %v703
  %v846 = vpack.c.b16 %v706, %v705
  %v847 = vpack.c.b16 %v708, %v707
  %v848 = vpack.c.b16 %v710, %v709
  %v849 = vpack.c.b16 %v712, %v711
  %v850 = vpack.c.b16 %v714, %v713
  %v851 = vpack.c.b16 %v716, %v715
  %v852 = vpack.c.b16 %v718, %v717
  %v853 = vpack.c.b16 %v720, %v719
  %v854 = vpack.c.b16 %v722, %v721
  %v855 = vpack.c.b16 %v724, %v723
  %v856 = vpack.c.b16 %v726, %v725
  %v857 = vpack.c.b16 %v728, %v727
  %v858 = vpack.c.b16 %v730, %v729
  %v859 = vpack.c.b16 %v732, %v731
  %v860 = vpack.c.b16 %v734, %v733
  %v861 = vpack.c.b16 %v736, %v735
  %v862 = vpack.c.b16 %v738, %v737
  %v863 = vpack.c.b16 %v740, %v739
  %v864 = vpack.c.b16 %v742, %v741
  %v865 = vpack.c.b16 %v744, %v743
  %v866 = vpack.c.b16 %v746, %v745
  %v867 = vpack.c.b16 %v748, %v747
  %v868 = vpack.c.b16 %v750, %v749
  %v869 = vpack.c.b16 %v752, %v751
  %v870 = vpack.c.b16 %v754, %v753
  %v871 = vpack.c.b16 %v756, %v755
  %v872 = vpack.c.b16 %v758, %v757
  %v873 = vpack.c.b16 %v760, %v759
  %v874 = vpack.c.b16 %v762, %v761
  %v875 = vpack.c.b16 %v764, %v763
  %v876 = vpack.c.b16 %v766, %v765
  %v877 = vpack.c.b16 %v768, %v767
  %v878 = vpack.c.b16 %v770, %v769
  %v879 = vpack.c.b16 %v772, %v771
  %v880 = vpack.c.b16 %v774, %v773
  %v881 = vpack.c.b16 %v776, %v775
  %v882 = vpack.c.b16 %v778, %v777
  %v883 = vpack.c.b16 %v780, %v779
  %v884 = vpack.c.b16 %v782, %v781
  %v885 = vpack.c.b16 %v784, %v783
  %v886 = vpack.c.b16 %v786, %v785
  %v887 = vpack.c.b16 %v788, %v787
  %v888 = vpack.c.b16 %v790, %v789
  %v889 = vpack.c.b16 %v792, %v791
  %v890 = vpack.c.b16 %v794, %v793
  %v891 = vpack.c.b16 %v796, %v795
  %v892 = vpack.c.b16 %v798, %v797
  %v893 = vpack.c.b16 %v800, %v799
  %v894 = vpack.c.b16 %v802, %v801
  %v895 = vpack.c.b16 %v804, %v803
  %v896 = vpack.c.b16 %v806, %v805
  %v897 = vpack.c.b16 %v808, %v807
  %v898 = vpack.c.b16 %v810, %v809
  %v899 = vpack.c.b16 %v812, %v811
  %v900 = vpack.c.b16 %v814, %v813
  %v901 = vpack.c.b16 %v816, %v815
  %v902 = vpack.c.b16 %v818, %v817
  %v903 = vpack.c.b16 %v820, %v819
  %v904 = vpack.c.b16 %v822, %v821
  %v905 = vpack.c.b16 %v824, %v823
  %v906 = vpack.c.b16 %v826, %v825
  %v907 = vpack.c.b16 %v828, %v827
  %v908 = vpack.c.b16 %v830, %v829
  %v909 = vpack.c.b16 %v832, %v831
  %v910 = vpack.c.b16 %v834, %v833
  %v911 = vpack.c.b16 %v836, %v835
  %v912 = vpack.c.b16 %v838, %v837
  %v913 = vpack.c.b16 %v840, %v839
  %v914 = vpack.c.b16 %v842, %v841
  %987 = vmatpush.bf16.msra.mxu0 %v850
  %988 = vmatpush.bf16.msra.mxu0 %v849
  %989 = vmatpush.bf16.msra.mxu0 %v848
  %990 = vmatpush.bf16.msra.mxu0 %v847
  %991 = vmatpush.bf16.msra.mxu0 %v846
  %992 = vmatpush.bf16.msra.mxu0 %v845
  %993 = vmatpush.bf16.msra.mxu0 %v844
  %994 = vmatpush.bf16.msra.mxu0 %v843
  %995 = vmatmul.bf16.gmra.mxu0 %v499
  %v996 = vpop.f32.mrf.mxu0
  %v997 = vadd.f32 %v456, %v996
  %v998 = vpop.f32.mrf.mxu0
  %v999 = vadd.f32 %v456, %v998
  %1000 = vmatmul.bf16.gmra.mxu0 %v526
  %v1001 = vpop.f32.mrf.mxu0
  %v1002 = vadd.f32 %v456, %v1001
  %v1003 = vpop.f32.mrf.mxu0
  %1004 = vdwg.mxu0
  %1005 = vmatpush.bf16.msra.mxu0 %v858
  %1006 = vmatpush.bf16.msra.mxu0 %v857
  %1007 = vmatpush.bf16.msra.mxu0 %v856
  %1008 = vmatpush.bf16.msra.mxu0 %v855
  %1009 = vmatpush.bf16.msra.mxu0 %v854
  %1010 = vmatpush.bf16.msra.mxu0 %v853
  %1011 = vmatpush.bf16.msra.mxu0 %v852
  %1012 = vmatpush.bf16.msra.mxu0 %v851
  %1013 = vmatmul.bf16.gmra.mxu0 %v500
  %v1014 = vpop.f32.mrf.mxu0
  %v1015 = vadd.f32 %v997, %v1014
  %v1016 = vpop.f32.mrf.mxu0
  %v1017 = vadd.f32 %v999, %v1016
  %1018 = vmatmul.bf16.gmra.mxu0 %v527
  %v1019 = vpop.f32.mrf.mxu0
  %v1020 = vadd.f32 %v1002, %v1019
  %v1021 = vpop.f32.mrf.mxu0
  %1022 = vdwg.mxu0
  %1023 = vmatpush.bf16.msra.mxu0 %v866
  %1024 = vmatpush.bf16.msra.mxu0 %v865
  %1025 = vmatpush.bf16.msra.mxu0 %v864
  %1026 = vmatpush.bf16.msra.mxu0 %v863
  %1027 = vmatpush.bf16.msra.mxu0 %v862
  %1028 = vmatpush.bf16.msra.mxu0 %v861
  %1029 = vmatpush.bf16.msra.mxu0 %v860
  %1030 = vmatpush.bf16.msra.mxu0 %v859
  %1031 = vmatmul.bf16.gmra.mxu0 %v501
  %v1032 = vpop.f32.mrf.mxu0
  %v1033 = vadd.f32 %v1015, %v1032
  %v1034 = vpop.f32.mrf.mxu0
  %v1035 = vadd.f32 %v1017, %v1034
  %1036 = vmatmul.bf16.gmra.mxu0 %v528
  %v1037 = vpop.f32.mrf.mxu0
  %v1038 = vadd.f32 %v1020, %v1037
  %v1039 = vpop.f32.mrf.mxu0
  %1040 = vdwg.mxu0
  %1041 = vmatpush.bf16.msra.mxu0 %v874
  %1042 = vmatpush.bf16.msra.mxu0 %v873
  %1043 = vmatpush.bf16.msra.mxu0 %v872
  %1044 = vmatpush.bf16.msra.mxu0 %v871
  %1045 = vmatpush.bf16.msra.mxu0 %v870
  %1046 = vmatpush.bf16.msra.mxu0 %v869
  %1047 = vmatpush.bf16.msra.mxu0 %v868
  %1048 = vmatpush.bf16.msra.mxu0 %v867
  %1049 = vmatmul.bf16.gmra.mxu0 %v502
  %v1050 = vpop.f32.mrf.mxu0
  %v1051 = vadd.f32 %v1033, %v1050
  %v1052 = vpop.f32.mrf.mxu0
  %v1053 = vadd.f32 %v1035, %v1052
  %1054 = vmatmul.bf16.gmra.mxu0 %v529
  %v1055 = vpop.f32.mrf.mxu0
  %v1056 = vadd.f32 %v1038, %v1055
  %v1057 = vpop.f32.mrf.mxu0
  %1058 = vdwg.mxu0
  %1059 = vmatpush.bf16.msra.mxu0 %v882
  %1060 = vmatpush.bf16.msra.mxu0 %v881
  %1061 = vmatpush.bf16.msra.mxu0 %v880
  %1062 = vmatpush.bf16.msra.mxu0 %v879
  %1063 = vmatpush.bf16.msra.mxu0 %v878
  %1064 = vmatpush.bf16.msra.mxu0 %v877
  %1065 = vmatpush.bf16.msra.mxu0 %v876
  %1066 = vmatpush.bf16.msra.mxu0 %v875
  %1067 = vmatmul.bf16.gmra.mxu0 %v503
  %v1068 = vpop.f32.mrf.mxu0
  %v1069 = vadd.f32 %v1051, %v1068
  %v1070 = vpop.f32.mrf.mxu0
  %v1071 = vadd.f32 %v1053, %v1070
  %1072 = vmatmul.bf16.gmra.mxu0 %v530
  %v1073 = vpop.f32.mrf.mxu0
  %v1074 = vadd.f32 %v1056, %v1073
  %v1075 = vpop.f32.mrf.mxu0
  %1076 = vdwg.mxu0
  %1077 = vmatpush.bf16.msra.mxu0 %v890
  %1078 = vmatpush.bf16.msra.mxu0 %v889
  %1079 = vmatpush.bf16.msra.mxu0 %v888
  %1080 = vmatpush.bf16.msra.mxu0 %v887
  %1081 = vmatpush.bf16.msra.mxu0 %v886
  %1082 = vmatpush.bf16.msra.mxu0 %v885
  %1083 = vmatpush.bf16.msra.mxu0 %v884
  %1084 = vmatpush.bf16.msra.mxu0 %v883
  %1085 = vmatmul.bf16.gmra.mxu0 %v504
  %v1086 = vpop.f32.mrf.mxu0
  %v1087 = vadd.f32 %v1069, %v1086
  %v1088 = vpop.f32.mrf.mxu0
  %v1089 = vadd.f32 %v1071, %v1088
  %1090 = vmatmul.bf16.gmra.mxu0 %v531
  %v1091 = vpop.f32.mrf.mxu0
  %v1092 = vadd.f32 %v1074, %v1091
  %v1093 = vpop.f32.mrf.mxu0
  %1094 = vdwg.mxu0
  %1095 = vmatpush.bf16.msra.mxu0 %v898
  %1096 = vmatpush.bf16.msra.mxu0 %v897
  %1097 = vmatpush.bf16.msra.mxu0 %v896
  %1098 = vmatpush.bf16.msra.mxu0 %v895
  %1099 = vmatpush.bf16.msra.mxu0 %v894
  %1100 = vmatpush.bf16.msra.mxu0 %v893
  %1101 = vmatpush.bf16.msra.mxu0 %v892
  %1102 = vmatpush.bf16.msra.mxu0 %v891
  %1103 = vmatmul.bf16.gmra.mxu0 %v505
  %v1104 = vpop.f32.mrf.mxu0
  %v1105 = vadd.f32 %v1087, %v1104
  %v1106 = vpop.f32.mrf.mxu0
  %v1107 = vadd.f32 %v1089, %v1106
  %1108 = vmatmul.bf16.gmra.mxu0 %v532
  %v1109 = vpop.f32.mrf.mxu0
  %v1110 = vadd.f32 %v1092, %v1109
  %v1111 = vpop.f32.mrf.mxu0
  %1112 = vdwg.mxu0
  %1113 = vmatpush.bf16.msra.mxu0 %v906
  %1114 = vmatpush.bf16.msra.mxu0 %v905
  %1115 = vmatpush.bf16.msra.mxu0 %v904
  %1116 = vmatpush.bf16.msra.mxu0 %v903
  %1117 = vmatpush.bf16.msra.mxu0 %v902
  %1118 = vmatpush.bf16.msra.mxu0 %v901
  %1119 = vmatpush.bf16.msra.mxu0 %v900
  %1120 = vmatpush.bf16.msra.mxu0 %v899
  %1121 = vmatmul.bf16.gmra.mxu0 %v506
  %v1122 = vpop.f32.mrf.mxu0
  %v1123 = vadd.f32 %v1105, %v1122
  %v1124 = vpop.f32.mrf.mxu0
  %v1125 = vadd.f32 %v1107, %v1124
  %1126 = vmatmul.bf16.gmra.mxu0 %v533
  %v1127 = vpop.f32.mrf.mxu0
  %v1128 = vadd.f32 %v1110, %v1127
  %v1129 = vpop.f32.mrf.mxu0
  %1130 = vdwg.mxu0
  %1131 = vmatpush.bf16.msra.mxu0 %v914
  %1132 = vmatpush.bf16.msra.mxu0 %v913
  %1133 = vmatpush.bf16.msra.mxu0 %v912
  %1134 = vmatpush.bf16.msra.mxu0 %v911
  %1135 = vmatpush.bf16.msra.mxu0 %v910
  %1136 = vmatpush.bf16.msra.mxu0 %v909
  %1137 = vmatpush.bf16.msra.mxu0 %v908
  %1138 = vmatpush.bf16.msra.mxu0 %v907
  %1139 = vmatmul.bf16.gmra.mxu0 %v523
  %v1140 = vpop.f32.mrf.mxu0
  %v1141 = vadd.f32 %v1123, %v1140
  %v1142 = vpop.f32.mrf.mxu0
  %v1143 = vadd.f32 %v1125, %v1142
  %1144 = vmatmul.bf16.gmra.mxu0 %v536
  %v1145 = vpop.f32.mrf.mxu0
  %v1146 = vadd.f32 %v1128, %v1145
  %v1147 = vpop.f32.mrf.mxu0
  %1148 = vdwg.mxu0
  %v1152 = vrot.slane %v1141, 1
  %v1153 = vrot.slane %v1141, 2
  %v1154 = vrot.slane %v1141, 3
  %v1155 = vrot.slane %v1141, 4
  %v1156 = vrot.slane %v1141, 5
  %v1157 = vrot.slane %v1141, 6
  %v1158 = vrot.slane %v1141, 7
  %v1159 = vrot.slane %v1143, 1
  %v1160 = vrot.slane %v1143, 2
  %v1161 = vrot.slane %v1143, 3
  %v1162 = vrot.slane %v1143, 4
  %v1163 = vrot.slane %v1143, 5
  %v1164 = vrot.slane %v1143, 6
  %v1165 = vrot.slane %v1143, 7
  %v1166 = vrot.slane %v1146, 1
  %v1182 = vld [vmem:[%s1] sm:$0xff]
  %v1183 = vld [vmem:[%s1 + $0x8] sm:$0x1]
  %v1185 = vrot.slane %v1182, 1
  %v1186 = vrot.slane %v1182, 2
  %v1187 = vrot.slane %v1182, 3
  %v1188 = vrot.slane %v1182, 4
  %v1189 = vrot.slane %v1182, 5
  %v1190 = vrot.slane %v1182, 6
  %v1191 = vrot.slane %v1182, 7
  %v1199 = vadd.f32 %v1141, %v1182
  %v1200 = vadd.f32 %v1152, %v1185
  %v1201 = vadd.f32 %v1153, %v1186
  %v1202 = vadd.f32 %v1154, %v1187
  %v1203 = vadd.f32 %v1155, %v1188
  %v1204 = vadd.f32 %v1156, %v1189
  %v1205 = vadd.f32 %v1157, %v1190
  %v1206 = vadd.f32 %v1158, %v1191
  %v1207 = vadd.f32 %v1143, %v1183
  %v1208 = vadd.f32 %v1159, %v1182
  %v1209 = vadd.f32 %v1160, %v1185
  %v1210 = vadd.f32 %v1161, %v1186
  %v1211 = vadd.f32 %v1162, %v1187
  %v1212 = vadd.f32 %v1163, %v1188
  %v1213 = vadd.f32 %v1164, %v1189
  %v1214 = vadd.f32 %v1165, %v1190
  %v1215 = vadd.f32 %v1146, %v1191
  %v1216 = vadd.f32 %v1166, %v1183
  %v1217 = vld [vmem:[%s2 + $0x1] sm:$0x1]
  %v1218 = vld [vmem:[%s2 + $0x2] sm:$0x1]
  %v1219 = vld [vmem:[%s2 + $0x3] sm:$0x7]
  %v1220 = vld [vmem:[%s2 + $0x6] sm:$0x1]
  %v1221 = vld [vmem:[%s2 + $0x7] sm:$0x1]
  %v1222 = vld [vmem:[%s2 + $0x8] sm:$0x1]
  %v1223 = vld [vmem:[%s2 + $0x9] sm:$0xf]
  %v1224 = vld [vmem:[%s2 + $0xd] sm:$0x1]
  %1243 = vst [vmem:[#allocation1] ss:$9 sm:$0xff] %v1199
  %s1244 = scalar_lea.vmem [#allocation1], 1
  %1245 = vst [vmem:[%s1244] ss:$9 sm:$0xff] %v1200
  %s1246 = scalar_lea.vmem [#allocation1], 2
  %1247 = vst [vmem:[%s1246] ss:$9 sm:$0xff] %v1201
  %s1248 = scalar_lea.vmem [#allocation1], 3
  %1249 = vst [vmem:[%s1248] ss:$9 sm:$0xff] %v1202
  %s1250 = scalar_lea.vmem [#allocation1], 4
  %1251 = vst [vmem:[%s1250] ss:$9 sm:$0xff] %v1203
  %s1252 = scalar_lea.vmem [#allocation1], 5
  %1253 = vst [vmem:[%s1252] ss:$9 sm:$0xff] %v1204
  %s1254 = scalar_lea.vmem [#allocation1], 6
  %1255 = vst [vmem:[%s1254] ss:$9 sm:$0xff] %v1205
  %s1256 = scalar_lea.vmem [#allocation1], 7
  %1257 = vst [vmem:[%s1256] ss:$9 sm:$0xff] %v1206
  %v1258 = vld [vmem:[#allocation1] sm:$0xff]
  %1259 = vst [vmem:[#allocation1] ss:$9 sm:$0xff] %v1207
  %1260 = vst [vmem:[%s1244] ss:$9 sm:$0xff] %v1208
  %1261 = vst [vmem:[%s1246] ss:$9 sm:$0xff] %v1209
  %1262 = vst [vmem:[%s1248] ss:$9 sm:$0xff] %v1210
  %1263 = vst [vmem:[%s1250] ss:$9 sm:$0xff] %v1211
  %1264 = vst [vmem:[%s1252] ss:$9 sm:$0xff] %v1212
  %1265 = vst [vmem:[%s1254] ss:$9 sm:$0xff] %v1213
  %1266 = vst [vmem:[%s1256] ss:$9 sm:$0xff] %v1214
  %v1267 = vld [vmem:[#allocation1] sm:$0xff]
  %1268 = vst [vmem:[#allocation1] ss:$9 sm:$0xff] %v1215
  %1269 = vst [vmem:[%s1244] ss:$9 sm:$0xff] %v1216
  %v1270 = vld [vmem:[#allocation1] sm:$0xff]
  %1274 = vadd.xlane.f32.xlu0 %v1258
  %v1275 = vpop.xlane.xlu0 %1274
  %1276 = vadd.xlane.f32.xlu0 %v1267
  %v1277 = vpop.xlane.xlu0 %1276
  %v1278 = vsel %vm111, %v1270, 0.0
  %1279 = vadd.xlane.f32.xlu0 %v1278
  %v1280 = vpop.xlane.xlu0 %1279
  %v1281 = vrcp.pop 128.0
  %v1282 = vmul.f32 128.0, %v1281
  %v1283 = vsub.f32 1.0, %v1282
  %v1284 = vmul.f32 %v1281, %v1283
  %v1285 = vadd.f32 %v1281, %v1284
  %vm1286 = vweird.f32 %v1281
  %v1287 = vsel %vm1286, %v1281, %v1285
  %v1288 = vmul.f32 %v1275, %v1287
  %v1289 = vmul.f32 %v1277, %v1287
  %v1290 = vmul.f32 %v1280, %v1287
  %v1294 = vperm.slane %v1288, 0
  %v1295 = vperm.slane %v1288, 1
  %v1296 = vperm.slane %v1288, 2
  %v1297 = vperm.slane %v1288, 3
  %v1298 = vperm.slane %v1288, 4
  %v1299 = vperm.slane %v1288, 5
  %v1300 = vperm.slane %v1288, 6
  %v1301 = vperm.slane %v1288, 7
  %v1302 = vperm.slane %v1289, 0
  %v1303 = vperm.slane %v1289, 1
  %v1304 = vperm.slane %v1289, 2
  %v1305 = vperm.slane %v1289, 3
  %v1306 = vperm.slane %v1289, 4
  %v1307 = vperm.slane %v1289, 5
  %v1308 = vperm.slane %v1289, 6
  %v1309 = vperm.slane %v1289, 7
  %v1310 = vperm.slane %v1290, 0
  %v1311 = vperm.slane %v1290, 1
  %v1330 = vsub.f32 %v1199, %v1294
  %v1331 = vsub.f32 %v1200, %v1295
  %v1332 = vsub.f32 %v1201, %v1296
  %v1333 = vsub.f32 %v1202, %v1297
  %v1334 = vsub.f32 %v1203, %v1298
  %v1335 = vsub.f32 %v1204, %v1299
  %v1336 = vsub.f32 %v1205, %v1300
  %v1337 = vsub.f32 %v1206, %v1301
  %v1338 = vsub.f32 %v1207, %v1302
  %v1339 = vsub.f32 %v1208, %v1303
  %v1340 = vsub.f32 %v1209, %v1304
  %v1341 = vsub.f32 %v1210, %v1305
  %v1342 = vsub.f32 %v1211, %v1306
  %v1343 = vsub.f32 %v1212, %v1307
  %v1344 = vsub.f32 %v1213, %v1308
  %v1345 = vsub.f32 %v1214, %v1309
  %v1346 = vsub.f32 %v1215, %v1310
  %v1347 = vsub.f32 %v1216, %v1311
  %v1348 = vmul.f32 %v1330, %v1330
  %v1349 = vmul.f32 %v1331, %v1331
  %v1350 = vmul.f32 %v1332, %v1332
  %v1351 = vmul.f32 %v1333, %v1333
  %v1352 = vmul.f32 %v1334, %v1334
  %v1353 = vmul.f32 %v1335, %v1335
  %v1354 = vmul.f32 %v1336, %v1336
  %v1355 = vmul.f32 %v1337, %v1337
  %v1356 = vmul.f32 %v1338, %v1338
  %v1357 = vmul.f32 %v1339, %v1339
  %v1358 = vmul.f32 %v1340, %v1340
  %v1359 = vmul.f32 %v1341, %v1341
  %v1360 = vmul.f32 %v1342, %v1342
  %v1361 = vmul.f32 %v1343, %v1343
  %v1362 = vmul.f32 %v1344, %v1344
  %v1363 = vmul.f32 %v1345, %v1345
  %v1364 = vmul.f32 %v1346, %v1346
  %v1365 = vmul.f32 %v1347, %v1347
  %1384 = vst [vmem:[#allocation1] ss:$9 sm:$0xff] %v1348
  %s1385 = scalar_lea.vmem [#allocation1], 1
  %1386 = vst [vmem:[%s1385] ss:$9 sm:$0xff] %v1349
  %s1387 = scalar_lea.vmem [#allocation1], 2
  %1388 = vst [vmem:[%s1387] ss:$9 sm:$0xff] %v1350
  %s1389 = scalar_lea.vmem [#allocation1], 3
  %1390 = vst [vmem:[%s1389] ss:$9 sm:$0xff] %v1351
  %s1391 = scalar_lea.vmem [#allocation1], 4
  %1392 = vst [vmem:[%s1391] ss:$9 sm:$0xff] %v1352
  %s1393 = scalar_lea.vmem [#allocation1], 5
  %1394 = vst [vmem:[%s1393] ss:$9 sm:$0xff] %v1353
  %s1395 = scalar_lea.vmem [#allocation1], 6
  %1396 = vst [vmem:[%s1395] ss:$9 sm:$0xff] %v1354
  %s1397 = scalar_lea.vmem [#allocation1], 7
  %1398 = vst [vmem:[%s1397] ss:$9 sm:$0xff] %v1355
  %v1399 = vld [vmem:[#allocation1] sm:$0xff]
  %1400 = vst [vmem:[#allocation1] ss:$9 sm:$0xff] %v1356
  %1401 = vst [vmem:[%s1385] ss:$9 sm:$0xff] %v1357
  %1402 = vst [vmem:[%s1387] ss:$9 sm:$0xff] %v1358
  %1403 = vst [vmem:[%s1389] ss:$9 sm:$0xff] %v1359
  %1404 = vst [vmem:[%s1391] ss:$9 sm:$0xff] %v1360
  %1405 = vst [vmem:[%s1393] ss:$9 sm:$0xff] %v1361
  %1406 = vst [vmem:[%s1395] ss:$9 sm:$0xff] %v1362
  %1407 = vst [vmem:[%s1397] ss:$9 sm:$0xff] %v1363
  %v1408 = vld [vmem:[#allocation1] sm:$0xff]
  %1409 = vst [vmem:[#allocation1] ss:$9 sm:$0xff] %v1364
  %1410 = vst [vmem:[%s1385] ss:$9 sm:$0xff] %v1365
  %v1411 = vld [vmem:[#allocation1] sm:$0xff]
  %1415 = vadd.xlane.f32.xlu0 %v1399
  %v1416 = vpop.xlane.xlu0 %1415
  %1417 = vadd.xlane.f32.xlu0 %v1408
  %v1418 = vpop.xlane.xlu0 %1417
  %v1419 = vsel %vm111, %v1411, 0.0
  %1420 = vadd.xlane.f32.xlu0 %v1419
  %v1421 = vpop.xlane.xlu0 %1420
  %v1422 = vmul.f32 %v1416, %v1287
  %v1423 = vmul.f32 %v1418, %v1287
  %v1424 = vmul.f32 %v1421, %v1287
  %v1425 = vadd.f32 %v1422, 1e-05
  %v1426 = vadd.f32 %v1423, 1e-05
  %v1427 = vadd.f32 %v1424, 1e-05
  %v1428 = vrsqrt.pop %v1425
  %v1429 = vmul.f32 %v1428, %v1425
  %v1430 = vmul.f32 %v1429, %v1428
  %v1431 = vmul.f32 0.5, %v1430
  %v1432 = vsub.f32 1.5, %v1431
  %v1433 = vmul.f32 %v1428, %v1432
  %v1434 = vmul.f32 %v1425, %v1433
  %vm1435 = vcmp.eq.f32.partialorder %v1425, inf
  %v1436 = vsel %vm1435, %v1425, %v1434
  %vm1437 = vcmp.eq.f32.partialorder %v1425, 0.0
  %v1438 = vand.u32 %v1425, 2147483648
  %v1439 = vsel %vm1437, %v1438, %v1436
  %v1440 = vrsqrt.pop %v1426
  %v1441 = vmul.f32 %v1440, %v1426
  %v1442 = vmul.f32 %v1441, %v1440
  %v1443 = vmul.f32 0.5, %v1442
  %v1444 = vsub.f32 1.5, %v1443
  %v1445 = vmul.f32 %v1440, %v1444
  %v1446 = vmul.f32 %v1426, %v1445
  %vm1447 = vcmp.eq.f32.partialorder %v1426, inf
  %v1448 = vsel %vm1447, %v1426, %v1446
  %vm1449 = vcmp.eq.f32.partialorder %v1426, 0.0
  %v1450 = vand.u32 %v1426, 2147483648
  %v1451 = vsel %vm1449, %v1450, %v1448
  %v1452 = vrsqrt.pop %v1427
  %v1453 = vmul.f32 %v1452, %v1427
  %v1454 = vmul.f32 %v1453, %v1452
  %v1455 = vmul.f32 0.5, %v1454
  %v1456 = vsub.f32 1.5, %v1455
  %v1457 = vmul.f32 %v1452, %v1456
  %v1458 = vmul.f32 %v1427, %v1457
  %vm1459 = vcmp.eq.f32.partialorder %v1427, inf
  %v1460 = vsel %vm1459, %v1427, %v1458
  %vm1461 = vcmp.eq.f32.partialorder %v1427, 0.0
  %v1462 = vand.u32 %v1427, 2147483648
  %v1463 = vsel %vm1461, %v1462, %v1460
  %v1467 = vperm.slane %v1439, 0
  %v1468 = vperm.slane %v1439, 1
  %v1469 = vperm.slane %v1439, 2
  %v1470 = vperm.slane %v1439, 3
  %v1471 = vperm.slane %v1439, 4
  %v1472 = vperm.slane %v1439, 5
  %v1473 = vperm.slane %v1439, 6
  %v1474 = vperm.slane %v1439, 7
  %v1475 = vperm.slane %v1451, 0
  %v1476 = vperm.slane %v1451, 1
  %v1477 = vperm.slane %v1451, 2
  %v1478 = vperm.slane %v1451, 3
  %v1479 = vperm.slane %v1451, 4
  %v1480 = vperm.slane %v1451, 5
  %v1481 = vperm.slane %v1451, 6
  %v1482 = vperm.slane %v1451, 7
  %v1483 = vperm.slane %v1463, 0
  %v1484 = vperm.slane %v1463, 1
  %v1503 = vrcp.pop %v1467
  %v1504 = vmul.f32 %v1467, %v1503
  %v1505 = vsub.f32 1.0, %v1504
  %v1506 = vmul.f32 %v1503, %v1505
  %v1507 = vadd.f32 %v1503, %v1506
  %vm1508 = vweird.f32 %v1467
  %vm1509 = vweird.f32 %v1503
  %vm1510 = vmor %vm1508, %vm1509
  %v1511 = vsel %vm1510, %v1503, %v1507
  %v1512 = vand.u32 2147483647, %v1467
  %vm1513 = vcmp.eq.f32.partialorder %v1512, 8.507059e+37
  %v1514 = vand.u32 %v1467, 2147483648
  %v1515 = vor.u32 1.1754944e-38, %v1514
  %v1516 = vsel %vm1513, %v1515, %v1511
  %v1517 = vmul.f32 %v1330, %v1516
  %v1518 = vrcp.pop %v1468
  %v1519 = vmul.f32 %v1468, %v1518
  %v1520 = vsub.f32 1.0, %v1519
  %v1521 = vmul.f32 %v1518, %v1520
  %v1522 = vadd.f32 %v1518, %v1521
  %vm1523 = vweird.f32 %v1468
  %vm1524 = vweird.f32 %v1518
  %vm1525 = vmor %vm1523, %vm1524
  %v1526 = vsel %vm1525, %v1518, %v1522
  %v1527 = vand.u32 2147483647, %v1468
  %vm1528 = vcmp.eq.f32.partialorder %v1527, 8.507059e+37
  %v1529 = vand.u32 %v1468, 2147483648
  %v1530 = vor.u32 1.1754944e-38, %v1529
  %v1531 = vsel %vm1528, %v1530, %v1526
  %v1532 = vmul.f32 %v1331, %v1531
  %v1533 = vrcp.pop %v1469
  %v1534 = vmul.f32 %v1469, %v1533
  %v1535 = vsub.f32 1.0, %v1534
  %v1536 = vmul.f32 %v1533, %v1535
  %v1537 = vadd.f32 %v1533, %v1536
  %vm1538 = vweird.f32 %v1469
  %vm1539 = vweird.f32 %v1533
  %vm1540 = vmor %vm1538, %vm1539
  %v1541 = vsel %vm1540, %v1533, %v1537
  %v1542 = vand.u32 2147483647, %v1469
  %vm1543 = vcmp.eq.f32.partialorder %v1542, 8.507059e+37
  %v1544 = vand.u32 %v1469, 2147483648
  %v1545 = vor.u32 1.1754944e-38, %v1544
  %v1546 = vsel %vm1543, %v1545, %v1541
  %v1547 = vmul.f32 %v1332, %v1546
  %v1548 = vrcp.pop %v1470
  %v1549 = vmul.f32 %v1470, %v1548
  %v1550 = vsub.f32 1.0, %v1549
  %v1551 = vmul.f32 %v1548, %v1550
  %v1552 = vadd.f32 %v1548, %v1551
  %vm1553 = vweird.f32 %v1470
  %vm1554 = vweird.f32 %v1548
  %vm1555 = vmor %vm1553, %vm1554
  %v1556 = vsel %vm1555, %v1548, %v1552
  %v1557 = vand.u32 2147483647, %v1470
  %vm1558 = vcmp.eq.f32.partialorder %v1557, 8.507059e+37
  %v1559 = vand.u32 %v1470, 2147483648
  %v1560 = vor.u32 1.1754944e-38, %v1559
  %v1561 = vsel %vm1558, %v1560, %v1556
  %v1562 = vmul.f32 %v1333, %v1561
  %v1563 = vrcp.pop %v1471
  %v1564 = vmul.f32 %v1471, %v1563
  %v1565 = vsub.f32 1.0, %v1564
  %v1566 = vmul.f32 %v1563, %v1565
  %v1567 = vadd.f32 %v1563, %v1566
  %vm1568 = vweird.f32 %v1471
  %vm1569 = vweird.f32 %v1563
  %vm1570 = vmor %vm1568, %vm1569
  %v1571 = vsel %vm1570, %v1563, %v1567
  %v1572 = vand.u32 2147483647, %v1471
  %vm1573 = vcmp.eq.f32.partialorder %v1572, 8.507059e+37
  %v1574 = vand.u32 %v1471, 2147483648
  %v1575 = vor.u32 1.1754944e-38, %v1574
  %v1576 = vsel %vm1573, %v1575, %v1571
  %v1577 = vmul.f32 %v1334, %v1576
  %v1578 = vrcp.pop %v1472
  %v1579 = vmul.f32 %v1472, %v1578
  %v1580 = vsub.f32 1.0, %v1579
  %v1581 = vmul.f32 %v1578, %v1580
  %v1582 = vadd.f32 %v1578, %v1581
  %vm1583 = vweird.f32 %v1472
  %vm1584 = vweird.f32 %v1578
  %vm1585 = vmor %vm1583, %vm1584
  %v1586 = vsel %vm1585, %v1578, %v1582
  %v1587 = vand.u32 2147483647, %v1472
  %vm1588 = vcmp.eq.f32.partialorder %v1587, 8.507059e+37
  %v1589 = vand.u32 %v1472, 2147483648
  %v1590 = vor.u32 1.1754944e-38, %v1589
  %v1591 = vsel %vm1588, %v1590, %v1586
  %v1592 = vmul.f32 %v1335, %v1591
  %v1593 = vrcp.pop %v1473
  %v1594 = vmul.f32 %v1473, %v1593
  %v1595 = vsub.f32 1.0, %v1594
  %v1596 = vmul.f32 %v1593, %v1595
  %v1597 = vadd.f32 %v1593, %v1596
  %vm1598 = vweird.f32 %v1473
  %vm1599 = vweird.f32 %v1593
  %vm1600 = vmor %vm1598, %vm1599
  %v1601 = vsel %vm1600, %v1593, %v1597
  %v1602 = vand.u32 2147483647, %v1473
  %vm1603 = vcmp.eq.f32.partialorder %v1602, 8.507059e+37
  %v1604 = vand.u32 %v1473, 2147483648
  %v1605 = vor.u32 1.1754944e-38, %v1604
  %v1606 = vsel %vm1603, %v1605, %v1601
  %v1607 = vmul.f32 %v1336, %v1606
  %v1608 = vrcp.pop %v1474
  %v1609 = vmul.f32 %v1474, %v1608
  %v1610 = vsub.f32 1.0, %v1609
  %v1611 = vmul.f32 %v1608, %v1610
  %v1612 = vadd.f32 %v1608, %v1611
  %vm1613 = vweird.f32 %v1474
  %vm1614 = vweird.f32 %v1608
  %vm1615 = vmor %vm1613, %vm1614
  %v1616 = vsel %vm1615, %v1608, %v1612
  %v1617 = vand.u32 2147483647, %v1474
  %vm1618 = vcmp.eq.f32.partialorder %v1617, 8.507059e+37
  %v1619 = vand.u32 %v1474, 2147483648
  %v1620 = vor.u32 1.1754944e-38, %v1619
  %v1621 = vsel %vm1618, %v1620, %v1616
  %v1622 = vmul.f32 %v1337, %v1621
  %v1623 = vrcp.pop %v1475
  %v1624 = vmul.f32 %v1475, %v1623
  %v1625 = vsub.f32 1.0, %v1624
  %v1626 = vmul.f32 %v1623, %v1625
  %v1627 = vadd.f32 %v1623, %v1626
  %vm1628 = vweird.f32 %v1475
  %vm1629 = vweird.f32 %v1623
  %vm1630 = vmor %vm1628, %vm1629
  %v1631 = vsel %vm1630, %v1623, %v1627
  %v1632 = vand.u32 2147483647, %v1475
  %vm1633 = vcmp.eq.f32.partialorder %v1632, 8.507059e+37
  %v1634 = vand.u32 %v1475, 2147483648
  %v1635 = vor.u32 1.1754944e-38, %v1634
  %v1636 = vsel %vm1633, %v1635, %v1631
  %v1637 = vmul.f32 %v1338, %v1636
  %v1638 = vrcp.pop %v1476
  %v1639 = vmul.f32 %v1476, %v1638
  %v1640 = vsub.f32 1.0, %v1639
  %v1641 = vmul.f32 %v1638, %v1640
  %v1642 = vadd.f32 %v1638, %v1641
  %vm1643 = vweird.f32 %v1476
  %vm1644 = vweird.f32 %v1638
  %vm1645 = vmor %vm1643, %vm1644
  %v1646 = vsel %vm1645, %v1638, %v1642
  %v1647 = vand.u32 2147483647, %v1476
  %vm1648 = vcmp.eq.f32.partialorder %v1647, 8.507059e+37
  %v1649 = vand.u32 %v1476, 2147483648
  %v1650 = vor.u32 1.1754944e-38, %v1649
  %v1651 = vsel %vm1648, %v1650, %v1646
  %v1652 = vmul.f32 %v1339, %v1651
  %v1653 = vrcp.pop %v1477
  %v1654 = vmul.f32 %v1477, %v1653
  %v1655 = vsub.f32 1.0, %v1654
  %v1656 = vmul.f32 %v1653, %v1655
  %v1657 = vadd.f32 %v1653, %v1656
  %vm1658 = vweird.f32 %v1477
  %vm1659 = vweird.f32 %v1653
  %vm1660 = vmor %vm1658, %vm1659
  %v1661 = vsel %vm1660, %v1653, %v1657
  %v1662 = vand.u32 2147483647, %v1477
  %vm1663 = vcmp.eq.f32.partialorder %v1662, 8.507059e+37
  %v1664 = vand.u32 %v1477, 2147483648
  %v1665 = vor.u32 1.1754944e-38, %v1664
  %v1666 = vsel %vm1663, %v1665, %v1661
  %v1667 = vmul.f32 %v1340, %v1666
  %v1668 = vrcp.pop %v1478
  %v1669 = vmul.f32 %v1478, %v1668
  %v1670 = vsub.f32 1.0, %v1669
  %v1671 = vmul.f32 %v1668, %v1670
  %v1672 = vadd.f32 %v1668, %v1671
  %vm1673 = vweird.f32 %v1478
  %vm1674 = vweird.f32 %v1668
  %vm1675 = vmor %vm1673, %vm1674
  %v1676 = vsel %vm1675, %v1668, %v1672
  %v1677 = vand.u32 2147483647, %v1478
  %vm1678 = vcmp.eq.f32.partialorder %v1677, 8.507059e+37
  %v1679 = vand.u32 %v1478, 2147483648
  %v1680 = vor.u32 1.1754944e-38, %v1679
  %v1681 = vsel %vm1678, %v1680, %v1676
  %v1682 = vmul.f32 %v1341, %v1681
  %v1683 = vrcp.pop %v1479
  %v1684 = vmul.f32 %v1479, %v1683
  %v1685 = vsub.f32 1.0, %v1684
  %v1686 = vmul.f32 %v1683, %v1685
  %v1687 = vadd.f32 %v1683, %v1686
  %vm1688 = vweird.f32 %v1479
  %vm1689 = vweird.f32 %v1683
  %vm1690 = vmor %vm1688, %vm1689
  %v1691 = vsel %vm1690, %v1683, %v1687
  %v1692 = vand.u32 2147483647, %v1479
  %vm1693 = vcmp.eq.f32.partialorder %v1692, 8.507059e+37
  %v1694 = vand.u32 %v1479, 2147483648
  %v1695 = vor.u32 1.1754944e-38, %v1694
  %v1696 = vsel %vm1693, %v1695, %v1691
  %v1697 = vmul.f32 %v1342, %v1696
  %v1698 = vrcp.pop %v1480
  %v1699 = vmul.f32 %v1480, %v1698
  %v1700 = vsub.f32 1.0, %v1699
  %v1701 = vmul.f32 %v1698, %v1700
  %v1702 = vadd.f32 %v1698, %v1701
  %vm1703 = vweird.f32 %v1480
  %vm1704 = vweird.f32 %v1698
  %vm1705 = vmor %vm1703, %vm1704
  %v1706 = vsel %vm1705, %v1698, %v1702
  %v1707 = vand.u32 2147483647, %v1480
  %vm1708 = vcmp.eq.f32.partialorder %v1707, 8.507059e+37
  %v1709 = vand.u32 %v1480, 2147483648
  %v1710 = vor.u32 1.1754944e-38, %v1709
  %v1711 = vsel %vm1708, %v1710, %v1706
  %v1712 = vmul.f32 %v1343, %v1711
  %v1713 = vrcp.pop %v1481
  %v1714 = vmul.f32 %v1481, %v1713
  %v1715 = vsub.f32 1.0, %v1714
  %v1716 = vmul.f32 %v1713, %v1715
  %v1717 = vadd.f32 %v1713, %v1716
  %vm1718 = vweird.f32 %v1481
  %vm1719 = vweird.f32 %v1713
  %vm1720 = vmor %vm1718, %vm1719
  %v1721 = vsel %vm1720, %v1713, %v1717
  %v1722 = vand.u32 2147483647, %v1481
  %vm1723 = vcmp.eq.f32.partialorder %v1722, 8.507059e+37
  %v1724 = vand.u32 %v1481, 2147483648
  %v1725 = vor.u32 1.1754944e-38, %v1724
  %v1726 = vsel %vm1723, %v1725, %v1721
  %v1727 = vmul.f32 %v1344, %v1726
  %v1728 = vrcp.pop %v1482
  %v1729 = vmul.f32 %v1482, %v1728
  %v1730 = vsub.f32 1.0, %v1729
  %v1731 = vmul.f32 %v1728, %v1730
  %v1732 = vadd.f32 %v1728, %v1731
  %vm1733 = vweird.f32 %v1482
  %vm1734 = vweird.f32 %v1728
  %vm1735 = vmor %vm1733, %vm1734
  %v1736 = vsel %vm1735, %v1728, %v1732
  %v1737 = vand.u32 2147483647, %v1482
  %vm1738 = vcmp.eq.f32.partialorder %v1737, 8.507059e+37
  %v1739 = vand.u32 %v1482, 2147483648
  %v1740 = vor.u32 1.1754944e-38, %v1739
  %v1741 = vsel %vm1738, %v1740, %v1736
  %v1742 = vmul.f32 %v1345, %v1741
  %v1743 = vrcp.pop %v1483
  %v1744 = vmul.f32 %v1483, %v1743
  %v1745 = vsub.f32 1.0, %v1744
  %v1746 = vmul.f32 %v1743, %v1745
  %v1747 = vadd.f32 %v1743, %v1746
  %vm1748 = vweird.f32 %v1483
  %vm1749 = vweird.f32 %v1743
  %vm1750 = vmor %vm1748, %vm1749
  %v1751 = vsel %vm1750, %v1743, %v1747
  %v1752 = vand.u32 2147483647, %v1483
  %vm1753 = vcmp.eq.f32.partialorder %v1752, 8.507059e+37
  %v1754 = vand.u32 %v1483, 2147483648
  %v1755 = vor.u32 1.1754944e-38, %v1754
  %v1756 = vsel %vm1753, %v1755, %v1751
  %v1757 = vmul.f32 %v1346, %v1756
  %v1758 = vrcp.pop %v1484
  %v1759 = vmul.f32 %v1484, %v1758
  %v1760 = vsub.f32 1.0, %v1759
  %v1761 = vmul.f32 %v1758, %v1760
  %v1762 = vadd.f32 %v1758, %v1761
  %vm1763 = vweird.f32 %v1484
  %vm1764 = vweird.f32 %v1758
  %vm1765 = vmor %vm1763, %vm1764
  %v1766 = vsel %vm1765, %v1758, %v1762
  %v1767 = vand.u32 2147483647, %v1484
  %vm1768 = vcmp.eq.f32.partialorder %v1767, 8.507059e+37
  %v1769 = vand.u32 %v1484, 2147483648
  %v1770 = vor.u32 1.1754944e-38, %v1769
  %v1771 = vsel %vm1768, %v1770, %v1766
  %v1772 = vmul.f32 %v1347, %v1771
  %v1774 = vperm.slane %v1217, 0
  %v1776 = vrot.slane %v1774, 1
  %v1777 = vrot.slane %v1774, 2
  %v1778 = vrot.slane %v1774, 3
  %v1779 = vrot.slane %v1774, 4
  %v1780 = vrot.slane %v1774, 5
  %v1781 = vrot.slane %v1774, 6
  %v1782 = vrot.slane %v1774, 7
  %v1790 = vmul.f32 %v1517, %v1774
  %v1791 = vmul.f32 %v1532, %v1776
  %v1792 = vmul.f32 %v1547, %v1777
  %v1793 = vmul.f32 %v1562, %v1778
  %v1794 = vmul.f32 %v1577, %v1779
  %v1795 = vmul.f32 %v1592, %v1780
  %v1796 = vmul.f32 %v1607, %v1781
  %v1797 = vmul.f32 %v1622, %v1782
  %v1798 = vmul.f32 %v1637, %v1774
  %v1799 = vmul.f32 %v1652, %v1776
  %v1800 = vmul.f32 %v1667, %v1777
  %v1801 = vmul.f32 %v1682, %v1778
  %v1802 = vmul.f32 %v1697, %v1779
  %v1803 = vmul.f32 %v1712, %v1780
  %v1804 = vmul.f32 %v1727, %v1781
  %v1805 = vmul.f32 %v1742, %v1782
  %v1806 = vmul.f32 %v1757, %v1774
  %v1807 = vmul.f32 %v1772, %v1776
  %v1809 = vperm.slane %v1218, 0
  %v1811 = vrot.slane %v1809, 1
  %v1812 = vrot.slane %v1809, 2
  %v1813 = vrot.slane %v1809, 3
  %v1814 = vrot.slane %v1809, 4
  %v1815 = vrot.slane %v1809, 5
  %v1816 = vrot.slane %v1809, 6
  %v1817 = vrot.slane %v1809, 7
  %v1825 = vadd.f32 %v1790, %v1809
  %v1826 = vadd.f32 %v1791, %v1811
  %v1827 = vadd.f32 %v1792, %v1812
  %v1828 = vadd.f32 %v1793, %v1813
  %v1829 = vadd.f32 %v1794, %v1814
  %v1830 = vadd.f32 %v1795, %v1815
  %v1831 = vadd.f32 %v1796, %v1816
  %v1832 = vadd.f32 %v1797, %v1817
  %v1833 = vadd.f32 %v1798, %v1809
  %v1834 = vadd.f32 %v1799, %v1811
  %v1835 = vadd.f32 %v1800, %v1812
  %v1836 = vadd.f32 %v1801, %v1813
  %v1837 = vadd.f32 %v1802, %v1814
  %v1838 = vadd.f32 %v1803, %v1815
  %v1839 = vadd.f32 %v1804, %v1816
  %v1840 = vadd.f32 %v1805, %v1817
  %v1841 = vadd.f32 %v1806, %v1809
  %v1842 = vadd.f32 %v1807, %v1811
  %1861 = vst [vmem:[#allocation1] ss:$9 sm:$0xff] %v1825
  %s1862 = scalar_lea.vmem [#allocation1], 1
  %1863 = vst [vmem:[%s1862] ss:$9 sm:$0xff] %v1826
  %s1864 = scalar_lea.vmem [#allocation1], 2
  %1865 = vst [vmem:[%s1864] ss:$9 sm:$0xff] %v1827
  %s1866 = scalar_lea.vmem [#allocation1], 3
  %1867 = vst [vmem:[%s1866] ss:$9 sm:$0xff] %v1828
  %s1868 = scalar_lea.vmem [#allocation1], 4
  %1869 = vst [vmem:[%s1868] ss:$9 sm:$0xff] %v1829
  %s1870 = scalar_lea.vmem [#allocation1], 5
  %1871 = vst [vmem:[%s1870] ss:$9 sm:$0xff] %v1830
  %s1872 = scalar_lea.vmem [#allocation1], 6
  %1873 = vst [vmem:[%s1872] ss:$9 sm:$0xff] %v1831
  %s1874 = scalar_lea.vmem [#allocation1], 7
  %1875 = vst [vmem:[%s1874] ss:$9 sm:$0xff] %v1832
  %v1876 = vld [vmem:[#allocation1] sm:$0xff]
  %1877 = vst [vmem:[#allocation1] ss:$9 sm:$0xff] %v1833
  %1878 = vst [vmem:[%s1862] ss:$9 sm:$0xff] %v1834
  %1879 = vst [vmem:[%s1864] ss:$9 sm:$0xff] %v1835
  %1880 = vst [vmem:[%s1866] ss:$9 sm:$0xff] %v1836
  %1881 = vst [vmem:[%s1868] ss:$9 sm:$0xff] %v1837
  %1882 = vst [vmem:[%s1870] ss:$9 sm:$0xff] %v1838
  %1883 = vst [vmem:[%s1872] ss:$9 sm:$0xff] %v1839
  %1884 = vst [vmem:[%s1874] ss:$9 sm:$0xff] %v1840
  %v1885 = vld [vmem:[#allocation1] sm:$0xff]
  %1886 = vst [vmem:[#allocation1] ss:$9 sm:$0xff] %v1841
  %1887 = vst [vmem:[%s1862] ss:$9 sm:$0xff] %v1842
  %v1888 = vld [vmem:[#allocation1] sm:$0xff]
  %v1892 = vpack.c.bf16 %v1885, %v1876
  %v1893 = vpack.c.bf16 %v1888, %v1888
  %v1894 = vld [vmem:[%s4] sm:$0xff]
  %v1895 = vld [vmem:[%s4 + $0x8] sm:$0xf]
  %v1896 = vld [vmem:[%s4 + $0xc] sm:$0xff]
  %v1897 = vld [vmem:[%s4 + $0x14] sm:$0xf]
  %v1898 = vld [vmem:[%s4 + $0x18] sm:$0xff]
  %v1899 = vld [vmem:[%s4 + $0x20] sm:$0xf]
  %v1900 = vld [vmem:[%s4 + $0x24] sm:$0xff]
  %v1901 = vld [vmem:[%s4 + $0x2c] sm:$0xf]
  %v1902 = vld [vmem:[%s4 + $0x30] sm:$0xff]
  %v1903 = vld [vmem:[%s4 + $0x38] sm:$0xf]
  %v1904 = vld [vmem:[%s4 + $0x3c] sm:$0xff]
  %v1905 = vld [vmem:[%s4 + $0x44] sm:$0xf]
  %v1906 = vld [vmem:[%s4 + $0x48] sm:$0xff]
  %v1907 = vld [vmem:[%s4 + $0x50] sm:$0xf]
  %v1908 = vld [vmem:[%s4 + $0x54] sm:$0xff]
  %v1909 = vld [vmem:[%s4 + $0x5c] sm:$0xf]
  %v1910 = vld [vmem:[%s4 + $0x60] sm:$0xff]
  %v1911 = vld [vmem:[%s4 + $0x68] sm:$0xf]
  %v1912 = vld [vmem:[%s4 + $0x6c] sm:$0xff]
  %v1913 = vld [vmem:[%s4 + $0x74] sm:$0xf]
  %v1914 = vld [vmem:[%s4 + $0x78] sm:$0xff]
  %v1915 = vld [vmem:[%s4 + $0x80] sm:$0xf]
  %v1916 = vld [vmem:[%s4 + $0x84] sm:$0xff]
  %v1917 = vld [vmem:[%s4 + $0x8c] sm:$0xf]
  %v1918 = vld [vmem:[%s4 + $0x90] sm:$0xff]
  %v1919 = vld [vmem:[%s4 + $0x98] sm:$0xf]
  %v1920 = vld [vmem:[%s4 + $0x9c] sm:$0xff]
  %v1921 = vld [vmem:[%s4 + $0xa4] sm:$0xf]
  %v1922 = vld [vmem:[%s4 + $0xa8] sm:$0xff]
  %v1923 = vld [vmem:[%s4 + $0xb0] sm:$0xf]
  %v1924 = vld [vmem:[%s4 + $0xb4] sm:$0xff]
  %v1925 = vld [vmem:[%s4 + $0xbc] sm:$0xf]
  %v1927 = vperm.slane %v1219, 0
  %v1928 = vperm.slane %v1219, 1
  %v1929 = vperm.slane %v1219, 2
  %v1965 = vunpack.c.l.b16 %v1894
  %v1966 = vunpack.c.h.b16 %v1894
  %v1967 = vunpack.c.l.b16 %v1895
  %v1968 = vunpack.c.l.b16 %v1896
  %v1969 = vunpack.c.h.b16 %v1896
  %v1970 = vunpack.c.l.b16 %v1897
  %v1971 = vunpack.c.l.b16 %v1898
  %v1972 = vunpack.c.h.b16 %v1898
  %v1973 = vunpack.c.l.b16 %v1899
  %v1974 = vunpack.c.l.b16 %v1900
  %v1975 = vunpack.c.h.b16 %v1900
  %v1976 = vunpack.c.l.b16 %v1901
  %v1977 = vunpack.c.l.b16 %v1902
  %v1978 = vunpack.c.h.b16 %v1902
  %v1979 = vunpack.c.l.b16 %v1903
  %v1980 = vunpack.c.l.b16 %v1904
  %v1981 = vunpack.c.h.b16 %v1904
  %v1982 = vunpack.c.l.b16 %v1905
  %v1983 = vunpack.c.l.b16 %v1906
  %v1984 = vunpack.c.h.b16 %v1906
  %v1985 = vunpack.c.l.b16 %v1907
  %v1986 = vunpack.c.l.b16 %v1908
  %v1987 = vunpack.c.h.b16 %v1908
  %v1988 = vunpack.c.l.b16 %v1909
  %v1989 = vunpack.c.l.b16 %v1910
  %v1990 = vunpack.c.h.b16 %v1910
  %v1991 = vunpack.c.l.b16 %v1911
  %v1992 = vunpack.c.l.b16 %v1912
  %v1993 = vunpack.c.h.b16 %v1912
  %v1994 = vunpack.c.l.b16 %v1913
  %v1995 = vunpack.c.l.b16 %v1914
  %v1996 = vunpack.c.h.b16 %v1914
  %v1997 = vunpack.c.l.b16 %v1915
  %v1998 = vunpack.c.l.b16 %v1916
  %v1999 = vunpack.c.h.b16 %v1916
  %v2000 = vunpack.c.l.b16 %v1917
  %v2001 = vunpack.c.l.b16 %v1918
  %v2002 = vunpack.c.h.b16 %v1918
  %v2003 = vunpack.c.l.b16 %v1919
  %v2004 = vunpack.c.l.b16 %v1920
  %v2005 = vunpack.c.h.b16 %v1920
  %v2006 = vunpack.c.l.b16 %v1921
  %v2007 = vunpack.c.l.b16 %v1922
  %v2008 = vunpack.c.h.b16 %v1922
  %v2009 = vunpack.c.l.b16 %v1923
  %v2010 = vunpack.c.l.b16 %v1924
  %v2011 = vunpack.c.h.b16 %v1924
  %v2012 = vunpack.c.l.b16 %v1925
  %v2013 = vpack.c.b16 %v1968, %v1965
  %v2014 = vpack.c.b16 %v1969, %v1966
  %v2015 = vpack.c.b16 %v1970, %v1967
  %v2016 = vpack.c.b16 %v1974, %v1971
  %v2017 = vpack.c.b16 %v1975, %v1972
  %v2018 = vpack.c.b16 %v1976, %v1973
  %v2019 = vpack.c.b16 %v1980, %v1977
  %v2020 = vpack.c.b16 %v1981, %v1978
  %v2021 = vpack.c.b16 %v1982, %v1979
  %v2022 = vpack.c.b16 %v1986, %v1983
  %v2023 = vpack.c.b16 %v1987, %v1984
  %v2024 = vpack.c.b16 %v1988, %v1985
  %v2025 = vpack.c.b16 %v1992, %v1989
  %v2026 = vpack.c.b16 %v1993, %v1990
  %v2027 = vpack.c.b16 %v1994, %v1991
  %v2028 = vpack.c.b16 %v1998, %v1995
  %v2029 = vpack.c.b16 %v1999, %v1996
  %v2030 = vpack.c.b16 %v2000, %v1997
  %v2031 = vpack.c.b16 %v2004, %v2001
  %v2032 = vpack.c.b16 %v2005, %v2002
  %v2033 = vpack.c.b16 %v2006, %v2003
  %v2034 = vpack.c.b16 %v2010, %v2007
  %v2035 = vpack.c.b16 %v2011, %v2008
  %v2036 = vpack.c.b16 %v2012, %v2009
  %2061 = vmatpush.bf16.msra.mxu0 %v2034
  %2062 = vmatpush.bf16.msra.mxu0 %v2031
  %2063 = vmatpush.bf16.msra.mxu0 %v2028
  %2064 = vmatpush.bf16.msra.mxu0 %v2025
  %2065 = vmatpush.bf16.msra.mxu0 %v2022
  %2066 = vmatpush.bf16.msra.mxu0 %v2019
  %2067 = vmatpush.bf16.msra.mxu0 %v2016
  %2068 = vmatpush.bf16.msra.mxu0 %v2013
  %2069 = vmatmul.bf16.gmra.mxu0 %v1892
  %v2070 = vpop.f32.mrf.mxu0
  %v2071 = vadd.f32 %v1927, %v2070
  %v2072 = vpop.f32.mrf.mxu0
  %v2073 = vadd.f32 %v1927, %v2072
  %2074 = vmatmul.bf16.gmra.mxu0 %v1893
  %v2075 = vpop.f32.mrf.mxu0
  %v2076 = vadd.f32 %v1927, %v2075
  %v2077 = vpop.f32.mrf.mxu0
  %2078 = vdwg.mxu0
  %2079 = vmatpush.bf16.msra.mxu0 %v2035
  %2080 = vmatpush.bf16.msra.mxu0 %v2032
  %2081 = vmatpush.bf16.msra.mxu0 %v2029
  %2082 = vmatpush.bf16.msra.mxu0 %v2026
  %2083 = vmatpush.bf16.msra.mxu0 %v2023
  %2084 = vmatpush.bf16.msra.mxu0 %v2020
  %2085 = vmatpush.bf16.msra.mxu0 %v2017
  %2086 = vmatpush.bf16.msra.mxu0 %v2014
  %2087 = vmatmul.bf16.gmra.mxu0 %v1892
  %v2088 = vpop.f32.mrf.mxu0
  %v2089 = vadd.f32 %v1928, %v2088
  %v2090 = vpop.f32.mrf.mxu0
  %v2091 = vadd.f32 %v1928, %v2090
  %2092 = vmatmul.bf16.gmra.mxu0 %v1893
  %v2093 = vpop.f32.mrf.mxu0
  %v2094 = vadd.f32 %v1928, %v2093
  %v2095 = vpop.f32.mrf.mxu0
  %2096 = vdwg.mxu0
  %2097 = vmatpush.bf16.msra.mxu0 %v2036
  %2098 = vmatpush.bf16.msra.mxu0 %v2033
  %2099 = vmatpush.bf16.msra.mxu0 %v2030
  %2100 = vmatpush.bf16.msra.mxu0 %v2027
  %2101 = vmatpush.bf16.msra.mxu0 %v2024
  %2102 = vmatpush.bf16.msra.mxu0 %v2021
  %2103 = vmatpush.bf16.msra.mxu0 %v2018
  %2104 = vmatpush.bf16.msra.mxu0 %v2015
  %2105 = vmatmul.bf16.gmra.mxu0 %v1892
  %v2106 = vpop.f32.mrf.mxu0
  %v2107 = vadd.f32 %v1929, %v2106
  %v2108 = vpop.f32.mrf.mxu0
  %v2109 = vadd.f32 %v1929, %v2108
  %2110 = vmatmul.bf16.gmra.mxu0 %v1893
  %v2111 = vpop.f32.mrf.mxu0
  %v2112 = vadd.f32 %v1929, %v2111
  %v2113 = vpop.f32.mrf.mxu0
  %2114 = vdwg.mxu0
  %v2118 = vrot.slane %v2071, 1
  %v2119 = vrot.slane %v2071, 2
  %v2120 = vrot.slane %v2071, 3
  %v2121 = vrot.slane %v2071, 4
  %v2122 = vrot.slane %v2071, 5
  %v2123 = vrot.slane %v2071, 6
  %v2124 = vrot.slane %v2071, 7
  %v2125 = vrot.slane %v2073, 1
  %v2126 = vrot.slane %v2073, 2
  %v2127 = vrot.slane %v2073, 3
  %v2128 = vrot.slane %v2073, 4
  %v2129 = vrot.slane %v2073, 5
  %v2130 = vrot.slane %v2073, 6
  %v2131 = vrot.slane %v2073, 7
  %v2132 = vrot.slane %v2076, 1
  %v2136 = vrot.slane %v2089, 1
  %v2137 = vrot.slane %v2089, 2
  %v2138 = vrot.slane %v2089, 3
  %v2139 = vrot.slane %v2089, 4
  %v2140 = vrot.slane %v2089, 5
  %v2141 = vrot.slane %v2089, 6
  %v2142 = vrot.slane %v2089, 7
  %v2143 = vrot.slane %v2091, 1
  %v2144 = vrot.slane %v2091, 2
  %v2145 = vrot.slane %v2091, 3
  %v2146 = vrot.slane %v2091, 4
  %v2147 = vrot.slane %v2091, 5
  %v2148 = vrot.slane %v2091, 6
  %v2149 = vrot.slane %v2091, 7
  %v2150 = vrot.slane %v2094, 1
  %v2154 = vrot.slane %v2107, 1
  %v2155 = vrot.slane %v2107, 2
  %v2156 = vrot.slane %v2107, 3
  %v2157 = vrot.slane %v2107, 4
  %v2158 = vrot.slane %v2107, 5
  %v2159 = vrot.slane %v2107, 6
  %v2160 = vrot.slane %v2107, 7
  %v2161 = vrot.slane %v2109, 1
  %v2162 = vrot.slane %v2109, 2
  %v2163 = vrot.slane %v2109, 3
  %v2164 = vrot.slane %v2109, 4
  %v2165 = vrot.slane %v2109, 5
  %v2166 = vrot.slane %v2109, 6
  %v2167 = vrot.slane %v2109, 7
  %v2168 = vrot.slane %v2112, 1
  %2169 = vst [vmem:[#allocation1] ss:$9 sm:$0xff] %v2071
  %s2170 = scalar_lea.vmem [#allocation1], 1
  %2171 = vst [vmem:[%s2170] ss:$9 sm:$0xff] %v2118
  %s2172 = scalar_lea.vmem [#allocation1], 2
  %2173 = vst [vmem:[%s2172] ss:$9 sm:$0xff] %v2119
  %s2174 = scalar_lea.vmem [#allocation1], 3
  %2175 = vst [vmem:[%s2174] ss:$9 sm:$0xff] %v2120
  %s2176 = scalar_lea.vmem [#allocation1], 4
  %2177 = vst [vmem:[%s2176] ss:$9 sm:$0xff] %v2121
  %s2178 = scalar_lea.vmem [#allocation1], 5
  %2179 = vst [vmem:[%s2178] ss:$9 sm:$0xff] %v2122
  %s2180 = scalar_lea.vmem [#allocation1], 6
  %2181 = vst [vmem:[%s2180] ss:$9 sm:$0xff] %v2123
  %s2182 = scalar_lea.vmem [#allocation1], 7
  %2183 = vst [vmem:[%s2182] ss:$9 sm:$0xff] %v2124
  %v2184 = vld [vmem:[#allocation1] sm:$0xff]
  %2185 = vst [vmem:[#allocation1] ss:$9 sm:$0xff] %v2073
  %v2186 = vld [vmem:[#allocation1] sm:$0xff]
  %2187 = vst [vmem:[#allocation1] ss:$9 sm:$0xff] %v2125
  %2188 = vst [vmem:[%s2170] ss:$9 sm:$0xff] %v2126
  %2189 = vst [vmem:[%s2172] ss:$9 sm:$0xff] %v2127
  %2190 = vst [vmem:[%s2174] ss:$9 sm:$0xff] %v2128
  %2191 = vst [vmem:[%s2176] ss:$9 sm:$0xff] %v2129
  %2192 = vst [vmem:[%s2178] ss:$9 sm:$0xff] %v2130
  %2193 = vst [vmem:[%s2180] ss:$9 sm:$0xff] %v2131
  %2194 = vst [vmem:[%s2182] ss:$9 sm:$0xff] %v2076
  %v2195 = vld [vmem:[#allocation1] sm:$0xff]
  %2196 = vst [vmem:[#allocation1] ss:$9 sm:$0xff] %v2132
  %v2197 = vld [vmem:[#allocation1] sm:$0xff]
  %v2202 = vpack.c.bf16 %v2184, %v2184
  %v2203 = vpack.c.bf16 %v2186, %v2186
  %v2204 = vpack.c.bf16 %v2195, %v2195
  %v2205 = vpack.c.bf16 %v2197, %v2197
  %2206 = vst [vmem:[#allocation1] ss:$9 sm:$0xff] %v2089
  %s2207 = scalar_lea.vmem [#allocation1], 1
  %2208 = vst [vmem:[%s2207] ss:$9 sm:$0xff] %v2136
  %s2209 = scalar_lea.vmem [#allocation1], 2
  %2210 = vst [vmem:[%s2209] ss:$9 sm:$0xff] %v2137
  %s2211 = scalar_lea.vmem [#allocation1], 3
  %2212 = vst [vmem:[%s2211] ss:$9 sm:$0xff] %v2138
  %s2213 = scalar_lea.vmem [#allocation1], 4
  %2214 = vst [vmem:[%s2213] ss:$9 sm:$0xff] %v2139
  %s2215 = scalar_lea.vmem [#allocation1], 5
  %2216 = vst [vmem:[%s2215] ss:$9 sm:$0xff] %v2140
  %s2217 = scalar_lea.vmem [#allocation1], 6
  %2218 = vst [vmem:[%s2217] ss:$9 sm:$0xff] %v2141
  %s2219 = scalar_lea.vmem [#allocation1], 7
  %2220 = vst [vmem:[%s2219] ss:$9 sm:$0xff] %v2142
  %v2221 = vld [vmem:[#allocation1] sm:$0xff]
  %2222 = vst [vmem:[#allocation1] ss:$9 sm:$0xff] %v2091
  %v2223 = vld [vmem:[#allocation1] sm:$0xff]
  %2224 = vst [vmem:[#allocation1] ss:$9 sm:$0xff] %v2143
  %2225 = vst [vmem:[%s2207] ss:$9 sm:$0xff] %v2144
  %2226 = vst [vmem:[%s2209] ss:$9 sm:$0xff] %v2145
  %2227 = vst [vmem:[%s2211] ss:$9 sm:$0xff] %v2146
  %2228 = vst [vmem:[%s2213] ss:$9 sm:$0xff] %v2147
  %2229 = vst [vmem:[%s2215] ss:$9 sm:$0xff] %v2148
  %2230 = vst [vmem:[%s2217] ss:$9 sm:$0xff] %v2149
  %2231 = vst [vmem:[%s2219] ss:$9 sm:$0xff] %v2094
  %v2232 = vld [vmem:[#allocation1] sm:$0xff]
  %2233 = vst [vmem:[#allocation1] ss:$9 sm:$0xff] %v2150
  %v2234 = vld [vmem:[#allocation1] sm:$0xff]
  %v2239 = vpack.c.bf16 %v2221, %v2221
  %v2240 = vpack.c.bf16 %v2223, %v2223
  %v2241 = vpack.c.bf16 %v2232, %v2232
  %v2242 = vpack.c.bf16 %v2234, %v2234
  %2243 = vst [vmem:[#allocation1] ss:$9 sm:$0xff] %v2107
  %s2244 = scalar_lea.vmem [#allocation1], 1
  %2245 = vst [vmem:[%s2244] ss:$9 sm:$0xff] %v2154
  %s2246 = scalar_lea.vmem [#allocation1], 2
  %2247 = vst [vmem:[%s2246] ss:$9 sm:$0xff] %v2155
  %s2248 = scalar_lea.vmem [#allocation1], 3
  %2249 = vst [vmem:[%s2248] ss:$9 sm:$0xff] %v2156
  %s2250 = scalar_lea.vmem [#allocation1], 4
  %2251 = vst [vmem:[%s2250] ss:$9 sm:$0xff] %v2157
  %s2252 = scalar_lea.vmem [#allocation1], 5
  %2253 = vst [vmem:[%s2252] ss:$9 sm:$0xff] %v2158
  %s2254 = scalar_lea.vmem [#allocation1], 6
  %2255 = vst [vmem:[%s2254] ss:$9 sm:$0xff] %v2159
  %s2256 = scalar_lea.vmem [#allocation1], 7
  %2257 = vst [vmem:[%s2256] ss:$9 sm:$0xff] %v2160
  %v2258 = vld [vmem:[#allocation1] sm:$0xff]
  %2259 = vst [vmem:[#allocation1] ss:$9 sm:$0xff] %v2109
  %v2260 = vld [vmem:[#allocation1] sm:$0xff]
  %2261 = vst [vmem:[#allocation1] ss:$9 sm:$0xff] %v2161
  %2262 = vst [vmem:[%s2244] ss:$9 sm:$0xff] %v2162
  %2263 = vst [vmem:[%s2246] ss:$9 sm:$0xff] %v2163
  %2264 = vst [vmem:[%s2248] ss:$9 sm:$0xff] %v2164
  %2265 = vst [vmem:[%s2250] ss:$9 sm:$0xff] %v2165
  %2266 = vst [vmem:[%s2252] ss:$9 sm:$0xff] %v2166
  %2267 = vst [vmem:[%s2254] ss:$9 sm:$0xff] %v2167
  %2268 = vst [vmem:[%s2256] ss:$9 sm:$0xff] %v2112
  %v2269 = vld [vmem:[#allocation1] sm:$0xff]
  %2270 = vst [vmem:[#allocation1] ss:$9 sm:$0xff] %v2168
  %v2271 = vld [vmem:[#allocation1] sm:$0xff]
  %v2276 = vpack.c.bf16 %v2258, %v2258
  %v2277 = vpack.c.bf16 %v2260, %v2260
  %v2278 = vpack.c.bf16 %v2269, %v2269
  %v2279 = vpack.c.bf16 %v2271, %v2271
  %v2282 = vunpack.c.l.b16 %v2202
  %v2283 = vunpack.c.l.b16 %v2203
  %v2284 = vpack.c.b16 %v2283, %v2282
  %v2287 = vunpack.c.l.b16 %v2239
  %v2288 = vunpack.c.l.b16 %v2240
  %v2289 = vpack.c.b16 %v2288, %v2287
  %vm2290 = vcmask 261120
  %v2292 = vsel %vm2290, %v2284, 0
  %v2295 = vsel %vm2290, %v2289, 0
  %2297 = vmatpush.bf16.xpose.msra.mxu0 0
  %2298 = vmatpush.bf16.xpose.msra.mxu0 0
  %2299 = vmatpush.bf16.xpose.msra.mxu0 0
  %2300 = vmatpush.bf16.xpose.msra.mxu0 0
  %2301 = vmatpush.bf16.xpose.msra.mxu0 0
  %2302 = vmatpush.bf16.xpose.msra.mxu0 0
  %2303 = vmatpush.bf16.xpose.msra.mxu0 0
  %2304 = vmatpush.bf16.xpose.msra.mxu0 %v2295
  %2305 = vmatmul.bf16.gmra.mxu0 %v2292
  %v2306 = vpop.f32.mrf.mxu0
  %v2307 = vadd.f32 0.0, %v2306
  %v2308 = vpop.f32.mrf.mxu0
  %v2309 = vadd.f32 0.0, %v2308
  %2310 = vdwg.mxu0
  %v2313 = vunpack.c.l.b16 %v2204
  %v2314 = vunpack.c.l.b16 %v2205
  %v2315 = vpack.c.b16 %v2314, %v2313
  %v2318 = vunpack.c.l.b16 %v2241
  %v2319 = vunpack.c.l.b16 %v2242
  %v2320 = vpack.c.b16 %v2319, %v2318
  %v2322 = vsel %vm2290, %v2315, 0
  %v2325 = vsel %vm2290, %v2320, 0
  %2327 = vmatpush.bf16.xpose.msra.mxu0 0
  %2328 = vmatpush.bf16.xpose.msra.mxu0 0
  %2329 = vmatpush.bf16.xpose.msra.mxu0 0
  %2330 = vmatpush.bf16.xpose.msra.mxu0 0
  %2331 = vmatpush.bf16.xpose.msra.mxu0 0
  %2332 = vmatpush.bf16.xpose.msra.mxu0 0
  %2333 = vmatpush.bf16.xpose.msra.mxu0 0
  %2334 = vmatpush.bf16.xpose.msra.mxu0 %v2325
  %2335 = vmatmul.bf16.gmra.mxu0 %v2322
  %v2336 = vpop.f32.mrf.mxu0
  %v2337 = vadd.f32 0.0, %v2336
  %v2338 = vpop.f32.mrf.mxu0
  %v2339 = vadd.f32 0.0, %v2338
  %2340 = vdwg.mxu0
  %vm2341 = vcmask 72704
  %v2342 = vsel %vm2341, %v2307, -inf
  %2343 = vmax.xlane.f32.xlu0 %v2342
  %v2344 = vpop.xlane.xlu0 %2343
  %vm2345 = vcmask 65536
  %v2346 = vsel %vm2345, %v2309, -inf
  %2347 = vmax.xlane.f32.xlu0 %v2346
  %v2348 = vpop.xlane.xlu0 %2347
  %v2349 = vsel %vm2341, %v2337, -inf
  %2350 = vmax.xlane.f32.xlu0 %v2349
  %v2351 = vpop.xlane.xlu0 %2350
  %v2352 = vsel %vm2345, %v2339, -inf
  %2353 = vmax.xlane.f32.xlu0 %v2352
  %v2354 = vpop.xlane.xlu0 %2353
  %v2355 = vsub.f32 %v2307, %v2344
  %v2356 = vsub.f32 %v2309, %v2348
  %v2357 = vsub.f32 %v2337, %v2351
  %v2358 = vsub.f32 %v2339, %v2354
  %v2359 = vmul.f32 %v2355, 1.442695
  %v2360 = vpow.pop %v2359
  %v2361 = vmul.f32 %v2356, 1.442695
  %v2362 = vpow.pop %v2361
  %v2363 = vmul.f32 %v2357, 1.442695
  %v2364 = vpow.pop %v2363
  %v2365 = vmul.f32 %v2358, 1.442695
  %v2366 = vpow.pop %v2365
  %v2367 = vsel %vm2341, %v2360, 0.0
  %2368 = vadd.xlane.f32.xlu0 %v2367
  %v2369 = vpop.xlane.xlu0 %2368
  %v2370 = vsel %vm2345, %v2362, 0.0
  %2371 = vadd.xlane.f32.xlu0 %v2370
  %v2372 = vpop.xlane.xlu0 %2371
  %v2373 = vsel %vm2341, %v2364, 0.0
  %2374 = vadd.xlane.f32.xlu0 %v2373
  %v2375 = vpop.xlane.xlu0 %2374
  %v2376 = vsel %vm2345, %v2366, 0.0
  %2377 = vadd.xlane.f32.xlu0 %v2376
  %v2378 = vpop.xlane.xlu0 %2377
  %v2379 = vrcp.pop %v2369
  %v2380 = vrcp.pop %v2372
  %v2381 = vrcp.pop %v2375
  %v2382 = vrcp.pop %v2378
  %v2383 = vmul.f32 %v2360, %v2379
  %v2384 = vmul.f32 %v2362, %v2380
  %v2385 = vmul.f32 %v2364, %v2381
  %v2386 = vmul.f32 %v2366, %v2382
  %v2387 = vpack.c.bf16 %v2383, %v2383
  %v2388 = vpack.c.bf16 %v2384, %v2384
  %v2389 = vpack.c.bf16 %v2385, %v2385
  %v2390 = vpack.c.bf16 %v2386, %v2386
  %v2393 = vunpack.c.l.b16 %v2387
  %v2394 = vunpack.c.l.b16 %v2388
  %v2395 = vpack.c.b16 %v2394, %v2393
  %v2398 = vunpack.c.l.b16 %v2276
  %v2399 = vunpack.c.l.b16 %v2277
  %v2400 = vpack.c.b16 %v2399, %v2398
  %v2402 = vsel %vm2341, %v2395, 0
  %vm2404 = vcmask 1044480
  %v2405 = vsel %vm123, 4294967295, 65535
  %v2406 = vsel %vm2404, %v2405, 0
  %v2408 = vand.u32 %v2400, %v2406
  %2410 = vmatpush.bf16.msra.mxu0 0
  %2411 = vmatpush.bf16.msra.mxu0 0
  %2412 = vmatpush.bf16.msra.mxu0 0
  %2413 = vmatpush.bf16.msra.mxu0 0
  %2414 = vmatpush.bf16.msra.mxu0 0
  %2415 = vmatpush.bf16.msra.mxu0 0
  %2416 = vmatpush.bf16.msra.mxu0 0
  %2417 = vmatpush.bf16.msra.mxu0 %v2408
  %2418 = vmatmul.bf16.gmra.mxu0 %v2402
  %v2419 = vpop.f32.mrf.mxu0
  %v2420 = vadd.f32 0.0, %v2419
  %v2421 = vpop.f32.mrf.mxu0
  %v2422 = vadd.f32 0.0, %v2421
  %2423 = vdwg.mxu0
  %v2426 = vunpack.c.l.b16 %v2389
  %v2427 = vunpack.c.l.b16 %v2390
  %v2428 = vpack.c.b16 %v2427, %v2426
  %v2431 = vunpack.c.l.b16 %v2278
  %v2432 = vunpack.c.l.b16 %v2279
  %v2433 = vpack.c.b16 %v2432, %v2431
  %v2435 = vsel %vm2341, %v2428, 0
  %v2438 = vand.u32 %v2433, %v2406
  %2440 = vmatpush.bf16.msra.mxu0 0
  %2441 = vmatpush.bf16.msra.mxu0 0
  %2442 = vmatpush.bf16.msra.mxu0 0
  %2443 = vmatpush.bf16.msra.mxu0 0
  %2444 = vmatpush.bf16.msra.mxu0 0
  %2445 = vmatpush.bf16.msra.mxu0 0
  %2446 = vmatpush.bf16.msra.mxu0 0
  %2447 = vmatpush.bf16.msra.mxu0 %v2438
  %2448 = vmatmul.bf16.gmra.mxu0 %v2435
  %v2449 = vpop.f32.mrf.mxu0
  %v2450 = vadd.f32 0.0, %v2449
  %v2451 = vpop.f32.mrf.mxu0
  %v2452 = vadd.f32 0.0, %v2451
  %2453 = vdwg.mxu0
  %2454 = vst [vmem:[#allocation1] ss:$9 sm:$0xff] %v2071
  %s2455 = scalar_lea.vmem [#allocation1], 1
  %2456 = vst [vmem:[%s2455] ss:$9 sm:$0xff] %v2118
  %s2457 = scalar_lea.vmem [#allocation1], 2
  %2458 = vst [vmem:[%s2457] ss:$9 sm:$0xff] %v2119
  %s2459 = scalar_lea.vmem [#allocation1], 3
  %2460 = vst [vmem:[%s2459] ss:$9 sm:$0xff] %v2120
  %s2461 = scalar_lea.vmem [#allocation1], 4
  %2462 = vst [vmem:[%s2461] ss:$9 sm:$0xff] %v2121
  %s2463 = scalar_lea.vmem [#allocation1], 5
  %2464 = vst [vmem:[%s2463] ss:$9 sm:$0xff] %v2122
  %s2465 = scalar_lea.vmem [#allocation1], 6
  %2466 = vst [vmem:[%s2465] ss:$9 sm:$0xff] %v2123
  %s2467 = scalar_lea.vmem [#allocation1], 7
  %2468 = vst [vmem:[%s2467] ss:$9 sm:$0xff] %v2124
  %v2469 = vld [vmem:[#allocation1] sm:$0xff]
  %2470 = vst [vmem:[#allocation1] ss:$9 sm:$0xff] %v2073
  %v2471 = vld [vmem:[#allocation1] sm:$0xff]
  %2472 = vst [vmem:[#allocation1] ss:$9 sm:$0xff] %v2125
  %2473 = vst [vmem:[%s2455] ss:$9 sm:$0xff] %v2126
  %2474 = vst [vmem:[%s2457] ss:$9 sm:$0xff] %v2127
  %2475 = vst [vmem:[%s2459] ss:$9 sm:$0xff] %v2128
  %2476 = vst [vmem:[%s2461] ss:$9 sm:$0xff] %v2129
  %2477 = vst [vmem:[%s2463] ss:$9 sm:$0xff] %v2130
  %2478 = vst [vmem:[%s2465] ss:$9 sm:$0xff] %v2131
  %2479 = vst [vmem:[%s2467] ss:$9 sm:$0xff] %v2076
  %v2480 = vld [vmem:[#allocation1] sm:$0xff]
  %2481 = vst [vmem:[#allocation1] ss:$9 sm:$0xff] %v2132
  %v2482 = vld [vmem:[#allocation1] sm:$0xff]
  %v2487 = vpack.c.bf16 %v2469, %v2469
  %v2488 = vpack.c.bf16 %v2471, %v2471
  %v2489 = vpack.c.bf16 %v2480, %v2480
  %v2490 = vpack.c.bf16 %v2482, %v2482
  %2491 = vst [vmem:[#allocation1] ss:$9 sm:$0xff] %v2089
  %s2492 = scalar_lea.vmem [#allocation1], 1
  %2493 = vst [vmem:[%s2492] ss:$9 sm:$0xff] %v2136
  %s2494 = scalar_lea.vmem [#allocation1], 2
  %2495 = vst [vmem:[%s2494] ss:$9 sm:$0xff] %v2137
  %s2496 = scalar_lea.vmem [#allocation1], 3
  %2497 = vst [vmem:[%s2496] ss:$9 sm:$0xff] %v2138
  %s2498 = scalar_lea.vmem [#allocation1], 4
  %2499 = vst [vmem:[%s2498] ss:$9 sm:$0xff] %v2139
  %s2500 = scalar_lea.vmem [#allocation1], 5
  %2501 = vst [vmem:[%s2500] ss:$9 sm:$0xff] %v2140
  %s2502 = scalar_lea.vmem [#allocation1], 6
  %2503 = vst [vmem:[%s2502] ss:$9 sm:$0xff] %v2141
  %s2504 = scalar_lea.vmem [#allocation1], 7
  %2505 = vst [vmem:[%s2504] ss:$9 sm:$0xff] %v2142
  %v2506 = vld [vmem:[#allocation1] sm:$0xff]
  %2507 = vst [vmem:[#allocation1] ss:$9 sm:$0xff] %v2091
  %v2508 = vld [vmem:[#allocation1] sm:$0xff]
  %2509 = vst [vmem:[#allocation1] ss:$9 sm:$0xff] %v2143
  %2510 = vst [vmem:[%s2492] ss:$9 sm:$0xff] %v2144
  %2511 = vst [vmem:[%s2494] ss:$9 sm:$0xff] %v2145
  %2512 = vst [vmem:[%s2496] ss:$9 sm:$0xff] %v2146
  %2513 = vst [vmem:[%s2498] ss:$9 sm:$0xff] %v2147
  %2514 = vst [vmem:[%s2500] ss:$9 sm:$0xff] %v2148
  %2515 = vst [vmem:[%s2502] ss:$9 sm:$0xff] %v2149
  %2516 = vst [vmem:[%s2504] ss:$9 sm:$0xff] %v2094
  %v2517 = vld [vmem:[#allocation1] sm:$0xff]
  %2518 = vst [vmem:[#allocation1] ss:$9 sm:$0xff] %v2150
  %v2519 = vld [vmem:[#allocation1] sm:$0xff]
  %v2524 = vpack.c.bf16 %v2506, %v2506
  %v2525 = vpack.c.bf16 %v2508, %v2508
  %v2526 = vpack.c.bf16 %v2517, %v2517
  %v2527 = vpack.c.bf16 %v2519, %v2519
  %2528 = vst [vmem:[#allocation1] ss:$9 sm:$0xff] %v2107
  %s2529 = scalar_lea.vmem [#allocation1], 1
  %2530 = vst [vmem:[%s2529] ss:$9 sm:$0xff] %v2154
  %s2531 = scalar_lea.vmem [#allocation1], 2
  %2532 = vst [vmem:[%s2531] ss:$9 sm:$0xff] %v2155
  %s2533 = scalar_lea.vmem [#allocation1], 3
  %2534 = vst [vmem:[%s2533] ss:$9 sm:$0xff] %v2156
  %s2535 = scalar_lea.vmem [#allocation1], 4
  %2536 = vst [vmem:[%s2535] ss:$9 sm:$0xff] %v2157
  %s2537 = scalar_lea.vmem [#allocation1], 5
  %2538 = vst [vmem:[%s2537] ss:$9 sm:$0xff] %v2158
  %s2539 = scalar_lea.vmem [#allocation1], 6
  %2540 = vst [vmem:[%s2539] ss:$9 sm:$0xff] %v2159
  %s2541 = scalar_lea.vmem [#allocation1], 7
  %2542 = vst [vmem:[%s2541] ss:$9 sm:$0xff] %v2160
  %v2543 = vld [vmem:[#allocation1] sm:$0xff]
  %2544 = vst [vmem:[#allocation1] ss:$9 sm:$0xff] %v2109
  %v2545 = vld [vmem:[#allocation1] sm:$0xff]
  %2546 = vst [vmem:[#allocation1] ss:$9 sm:$0xff] %v2161
  %2547 = vst [vmem:[%s2529] ss:$9 sm:$0xff] %v2162
  %2548 = vst [vmem:[%s2531] ss:$9 sm:$0xff] %v2163
  %2549 = vst [vmem:[%s2533] ss:$9 sm:$0xff] %v2164
  %2550 = vst [vmem:[%s2535] ss:$9 sm:$0xff] %v2165
  %2551 = vst [vmem:[%s2537] ss:$9 sm:$0xff] %v2166
  %2552 = vst [vmem:[%s2539] ss:$9 sm:$0xff] %v2167
  %2553 = vst [vmem:[%s2541] ss:$9 sm:$0xff] %v2112
  %v2554 = vld [vmem:[#allocation1] sm:$0xff]
  %2555 = vst [vmem:[#allocation1] ss:$9 sm:$0xff] %v2168
  %v2556 = vld [vmem:[#allocation1] sm:$0xff]
  %v2561 = vpack.c.bf16 %v2543, %v2543
  %v2562 = vpack.c.bf16 %v2545, %v2545
  %v2563 = vpack.c.bf16 %v2554, %v2554
  %v2564 = vpack.c.bf16 %v2556, %v2556
  %v2567 = vunpack.c.l.b16 %v2487
  %v2568 = vunpack.c.l.b16 %v2488
  %v2569 = vpack.c.b16 %v2568, %v2567
  %2570 = vrot.lane.b32.xlu0 %v2569, 96
  %v2571 = vpop.permute.xlu0 %2570
  %v2574 = vunpack.c.l.b16 %v2524
  %v2575 = vunpack.c.l.b16 %v2525
  %v2576 = vpack.c.b16 %v2575, %v2574
  %2577 = vrot.lane.b32.xlu0 %v2576, 96
  %v2578 = vpop.permute.xlu0 %2577
  %v2580 = vsel %vm2290, %v2571, 0
  %v2583 = vsel %vm2290, %v2578, 0
  %2585 = vmatpush.bf16.xpose.msra.mxu0 0
  %2586 = vmatpush.bf16.xpose.msra.mxu0 0
  %2587 = vmatpush.bf16.xpose.msra.mxu0 0
  %2588 = vmatpush.bf16.xpose.msra.mxu0 0
  %2589 = vmatpush.bf16.xpose.msra.mxu0 0
  %2590 = vmatpush.bf16.xpose.msra.mxu0 0
  %2591 = vmatpush.bf16.xpose.msra.mxu0 0
  %2592 = vmatpush.bf16.xpose.msra.mxu0 %v2583
  %2593 = vmatmul.bf16.gmra.mxu0 %v2580
  %v2594 = vpop.f32.mrf.mxu0
  %v2595 = vadd.f32 0.0, %v2594
  %v2596 = vpop.f32.mrf.mxu0
  %v2597 = vadd.f32 0.0, %v2596
  %2598 = vdwg.mxu0
  %v2601 = vunpack.c.l.b16 %v2489
  %v2602 = vunpack.c.l.b16 %v2490
  %v2603 = vpack.c.b16 %v2602, %v2601
  %2604 = vrot.lane.b32.xlu0 %v2603, 96
  %v2605 = vpop.permute.xlu0 %2604
  %v2608 = vunpack.c.l.b16 %v2526
  %v2609 = vunpack.c.l.b16 %v2527
  %v2610 = vpack.c.b16 %v2609, %v2608
  %2611 = vrot.lane.b32.xlu0 %v2610, 96
  %v2612 = vpop.permute.xlu0 %2611
  %v2614 = vsel %vm2290, %v2605, 0
  %v2617 = vsel %vm2290, %v2612, 0
  %2619 = vmatpush.bf16.xpose.msra.mxu0 0
  %2620 = vmatpush.bf16.xpose.msra.mxu0 0
  %2621 = vmatpush.bf16.xpose.msra.mxu0 0
  %2622 = vmatpush.bf16.xpose.msra.mxu0 0
  %2623 = vmatpush.bf16.xpose.msra.mxu0 0
  %2624 = vmatpush.bf16.xpose.msra.mxu0 0
  %2625 = vmatpush.bf16.xpose.msra.mxu0 0
  %2626 = vmatpush.bf16.xpose.msra.mxu0 %v2617
  %2627 = vmatmul.bf16.gmra.mxu0 %v2614
  %v2628 = vpop.f32.mrf.mxu0
  %v2629 = vadd.f32 0.0, %v2628
  %v2630 = vpop.f32.mrf.mxu0
  %v2631 = vadd.f32 0.0, %v2630
  %2632 = vdwg.mxu0
  %v2633 = vsel %vm2341, %v2595, -inf
  %2634 = vmax.xlane.f32.xlu0 %v2633
  %v2635 = vpop.xlane.xlu0 %2634
  %v2636 = vsel %vm2345, %v2597, -inf
  %2637 = vmax.xlane.f32.xlu0 %v2636
  %v2638 = vpop.xlane.xlu0 %2637
  %v2639 = vsel %vm2341, %v2629, -inf
  %2640 = vmax.xlane.f32.xlu0 %v2639
  %v2641 = vpop.xlane.xlu0 %2640
  %v2642 = vsel %vm2345, %v2631, -inf
  %2643 = vmax.xlane.f32.xlu0 %v2642
  %v2644 = vpop.xlane.xlu0 %2643
  %v2645 = vsub.f32 %v2595, %v2635
  %v2646 = vsub.f32 %v2597, %v2638
  %v2647 = vsub.f32 %v2629, %v2641
  %v2648 = vsub.f32 %v2631, %v2644
  %v2649 = vmul.f32 %v2645, 1.442695
  %v2650 = vpow.pop %v2649
  %v2651 = vmul.f32 %v2646, 1.442695
  %v2652 = vpow.pop %v2651
  %v2653 = vmul.f32 %v2647, 1.442695
  %v2654 = vpow.pop %v2653
  %v2655 = vmul.f32 %v2648, 1.442695
  %v2656 = vpow.pop %v2655
  %v2657 = vsel %vm2341, %v2650, 0.0
  %2658 = vadd.xlane.f32.xlu0 %v2657
  %v2659 = vpop.xlane.xlu0 %2658
  %v2660 = vsel %vm2345, %v2652, 0.0
  %2661 = vadd.xlane.f32.xlu0 %v2660
  %v2662 = vpop.xlane.xlu0 %2661
  %v2663 = vsel %vm2341, %v2654, 0.0
  %2664 = vadd.xlane.f32.xlu0 %v2663
  %v2665 = vpop.xlane.xlu0 %2664
  %v2666 = vsel %vm2345, %v2656, 0.0
  %2667 = vadd.xlane.f32.xlu0 %v2666
  %v2668 = vpop.xlane.xlu0 %2667
  %v2669 = vrcp.pop %v2659
  %v2670 = vrcp.pop %v2662
  %v2671 = vrcp.pop %v2665
  %v2672 = vrcp.pop %v2668
  %v2673 = vmul.f32 %v2650, %v2669
  %v2674 = vmul.f32 %v2652, %v2670
  %v2675 = vmul.f32 %v2654, %v2671
  %v2676 = vmul.f32 %v2656, %v2672
  %v2677 = vpack.c.bf16 %v2673, %v2673
  %v2678 = vpack.c.bf16 %v2674, %v2674
  %v2679 = vpack.c.bf16 %v2675, %v2675
  %v2680 = vpack.c.bf16 %v2676, %v2676
  %v2683 = vunpack.c.l.b16 %v2677
  %v2684 = vunpack.c.l.b16 %v2678
  %v2685 = vpack.c.b16 %v2684, %v2683
  %v2688 = vunpack.c.l.b16 %v2561
  %v2689 = vunpack.c.l.b16 %v2562
  %v2690 = vpack.c.b16 %v2689, %v2688
  %2691 = vrot.lane.b32.xlu0 %v2690, 96
  %v2692 = vpop.permute.xlu0 %2691
  %v2694 = vsel %vm2341, %v2685, 0
  %v2697 = vand.u32 %v2692, %v2406
  %2699 = vmatpush.bf16.msra.mxu0 0
  %2700 = vmatpush.bf16.msra.mxu0 0
  %2701 = vmatpush.bf16.msra.mxu0 0
  %2702 = vmatpush.bf16.msra.mxu0 0
  %2703 = vmatpush.bf16.msra.mxu0 0
  %2704 = vmatpush.bf16.msra.mxu0 0
  %2705 = vmatpush.bf16.msra.mxu0 0
  %2706 = vmatpush.bf16.msra.mxu0 %v2697
  %2707 = vmatmul.bf16.gmra.mxu0 %v2694
  %v2708 = vpop.f32.mrf.mxu0
  %v2709 = vadd.f32 0.0, %v2708
  %v2710 = vpop.f32.mrf.mxu0
  %v2711 = vadd.f32 0.0, %v2710
  %2712 = vdwg.mxu0
  %v2715 = vunpack.c.l.b16 %v2679
  %v2716 = vunpack.c.l.b16 %v2680
  %v2717 = vpack.c.b16 %v2716, %v2715
  %v2720 = vunpack.c.l.b16 %v2563
  %v2721 = vunpack.c.l.b16 %v2564
  %v2722 = vpack.c.b16 %v2721, %v2720
  %2723 = vrot.lane.b32.xlu0 %v2722, 96
  %v2724 = vpop.permute.xlu0 %2723
  %v2726 = vsel %vm2341, %v2717, 0
  %v2729 = vand.u32 %v2724, %v2406
  %2731 = vmatpush.bf16.msra.mxu0 0
  %2732 = vmatpush.bf16.msra.mxu0 0
  %2733 = vmatpush.bf16.msra.mxu0 0
  %2734 = vmatpush.bf16.msra.mxu0 0
  %2735 = vmatpush.bf16.msra.mxu0 0
  %2736 = vmatpush.bf16.msra.mxu0 0
  %2737 = vmatpush.bf16.msra.mxu0 0
  %2738 = vmatpush.bf16.msra.mxu0 %v2729
  %2739 = vmatmul.bf16.gmra.mxu0 %v2726
  %v2740 = vpop.f32.mrf.mxu0
  %v2741 = vadd.f32 0.0, %v2740
  %v2742 = vpop.f32.mrf.mxu0
  %v2743 = vadd.f32 0.0, %v2742
  %2744 = vdwg.mxu0
  %2745 = vst [vmem:[#allocation1] ss:$9 sm:$0xff] %v2071
  %s2746 = scalar_lea.vmem [#allocation1], 1
  %2747 = vst [vmem:[%s2746] ss:$9 sm:$0xff] %v2118
  %s2748 = scalar_lea.vmem [#allocation1], 2
  %2749 = vst [vmem:[%s2748] ss:$9 sm:$0xff] %v2119
  %s2750 = scalar_lea.vmem [#allocation1], 3
  %2751 = vst [vmem:[%s2750] ss:$9 sm:$0xff] %v2120
  %s2752 = scalar_lea.vmem [#allocation1], 4
  %2753 = vst [vmem:[%s2752] ss:$9 sm:$0xff] %v2121
  %s2754 = scalar_lea.vmem [#allocation1], 5
  %2755 = vst [vmem:[%s2754] ss:$9 sm:$0xff] %v2122
  %s2756 = scalar_lea.vmem [#allocation1], 6
  %2757 = vst [vmem:[%s2756] ss:$9 sm:$0xff] %v2123
  %s2758 = scalar_lea.vmem [#allocation1], 7
  %2759 = vst [vmem:[%s2758] ss:$9 sm:$0xff] %v2124
  %v2760 = vld [vmem:[#allocation1] sm:$0xff]
  %2761 = vst [vmem:[#allocation1] ss:$9 sm:$0xff] %v2073
  %v2762 = vld [vmem:[#allocation1] sm:$0xff]
  %2763 = vst [vmem:[#allocation1] ss:$9 sm:$0xff] %v2125
  %2764 = vst [vmem:[%s2746] ss:$9 sm:$0xff] %v2126
  %2765 = vst [vmem:[%s2748] ss:$9 sm:$0xff] %v2127
  %2766 = vst [vmem:[%s2750] ss:$9 sm:$0xff] %v2128
  %2767 = vst [vmem:[%s2752] ss:$9 sm:$0xff] %v2129
  %2768 = vst [vmem:[%s2754] ss:$9 sm:$0xff] %v2130
  %2769 = vst [vmem:[%s2756] ss:$9 sm:$0xff] %v2131
  %2770 = vst [vmem:[%s2758] ss:$9 sm:$0xff] %v2076
  %v2771 = vld [vmem:[#allocation1] sm:$0xff]
  %2772 = vst [vmem:[#allocation1] ss:$9 sm:$0xff] %v2132
  %v2773 = vld [vmem:[#allocation1] sm:$0xff]
  %v2778 = vpack.c.bf16 %v2760, %v2760
  %v2779 = vpack.c.bf16 %v2762, %v2762
  %v2780 = vpack.c.bf16 %v2771, %v2771
  %v2781 = vpack.c.bf16 %v2773, %v2773
  %2782 = vst [vmem:[#allocation1] ss:$9 sm:$0xff] %v2089
  %s2783 = scalar_lea.vmem [#allocation1], 1
  %2784 = vst [vmem:[%s2783] ss:$9 sm:$0xff] %v2136
  %s2785 = scalar_lea.vmem [#allocation1], 2
  %2786 = vst [vmem:[%s2785] ss:$9 sm:$0xff] %v2137
  %s2787 = scalar_lea.vmem [#allocation1], 3
  %2788 = vst [vmem:[%s2787] ss:$9 sm:$0xff] %v2138
  %s2789 = scalar_lea.vmem [#allocation1], 4
  %2790 = vst [vmem:[%s2789] ss:$9 sm:$0xff] %v2139
  %s2791 = scalar_lea.vmem [#allocation1], 5
  %2792 = vst [vmem:[%s2791] ss:$9 sm:$0xff] %v2140
  %s2793 = scalar_lea.vmem [#allocation1], 6
  %2794 = vst [vmem:[%s2793] ss:$9 sm:$0xff] %v2141
  %s2795 = scalar_lea.vmem [#allocation1], 7
  %2796 = vst [vmem:[%s2795] ss:$9 sm:$0xff] %v2142
  %v2797 = vld [vmem:[#allocation1] sm:$0xff]
  %2798 = vst [vmem:[#allocation1] ss:$9 sm:$0xff] %v2091
  %v2799 = vld [vmem:[#allocation1] sm:$0xff]
  %2800 = vst [vmem:[#allocation1] ss:$9 sm:$0xff] %v2143
  %2801 = vst [vmem:[%s2783] ss:$9 sm:$0xff] %v2144
  %2802 = vst [vmem:[%s2785] ss:$9 sm:$0xff] %v2145
  %2803 = vst [vmem:[%s2787] ss:$9 sm:$0xff] %v2146
  %2804 = vst [vmem:[%s2789] ss:$9 sm:$0xff] %v2147
  %2805 = vst [vmem:[%s2791] ss:$9 sm:$0xff] %v2148
  %2806 = vst [vmem:[%s2793] ss:$9 sm:$0xff] %v2149
  %2807 = vst [vmem:[%s2795] ss:$9 sm:$0xff] %v2094
  %v2808 = vld [vmem:[#allocation1] sm:$0xff]
  %2809 = vst [vmem:[#allocation1] ss:$9 sm:$0xff] %v2150
  %v2810 = vld [vmem:[#allocation1] sm:$0xff]
  %v2815 = vpack.c.bf16 %v2797, %v2797
  %v2816 = vpack.c.bf16 %v2799, %v2799
  %v2817 = vpack.c.bf16 %v2808, %v2808
  %v2818 = vpack.c.bf16 %v2810, %v2810
  %2819 = vst [vmem:[#allocation1] ss:$9 sm:$0xff] %v2107
  %s2820 = scalar_lea.vmem [#allocation1], 1
  %2821 = vst [vmem:[%s2820] ss:$9 sm:$0xff] %v2154
  %s2822 = scalar_lea.vmem [#allocation1], 2
  %2823 = vst [vmem:[%s2822] ss:$9 sm:$0xff] %v2155
  %s2824 = scalar_lea.vmem [#allocation1], 3
  %2825 = vst [vmem:[%s2824] ss:$9 sm:$0xff] %v2156
  %s2826 = scalar_lea.vmem [#allocation1], 4
  %2827 = vst [vmem:[%s2826] ss:$9 sm:$0xff] %v2157
  %s2828 = scalar_lea.vmem [#allocation1], 5
  %2829 = vst [vmem:[%s2828] ss:$9 sm:$0xff] %v2158
  %s2830 = scalar_lea.vmem [#allocation1], 6
  %2831 = vst [vmem:[%s2830] ss:$9 sm:$0xff] %v2159
  %s2832 = scalar_lea.vmem [#allocation1], 7
  %2833 = vst [vmem:[%s2832] ss:$9 sm:$0xff] %v2160
  %v2834 = vld [vmem:[#allocation1] sm:$0xff]
  %2835 = vst [vmem:[#allocation1] ss:$9 sm:$0xff] %v2109
  %v2836 = vld [vmem:[#allocation1] sm:$0xff]
  %2837 = vst [vmem:[#allocation1] ss:$9 sm:$0xff] %v2161
  %2838 = vst [vmem:[%s2820] ss:$9 sm:$0xff] %v2162
  %2839 = vst [vmem:[%s2822] ss:$9 sm:$0xff] %v2163
  %2840 = vst [vmem:[%s2824] ss:$9 sm:$0xff] %v2164
  %2841 = vst [vmem:[%s2826] ss:$9 sm:$0xff] %v2165
  %2842 = vst [vmem:[%s2828] ss:$9 sm:$0xff] %v2166
  %2843 = vst [vmem:[%s2830] ss:$9 sm:$0xff] %v2167
  %2844 = vst [vmem:[%s2832] ss:$9 sm:$0xff] %v2112
  %v2845 = vld [vmem:[#allocation1] sm:$0xff]
  %2846 = vst [vmem:[#allocation1] ss:$9 sm:$0xff] %v2168
  %v2847 = vld [vmem:[#allocation1] sm:$0xff]
  %v2852 = vpack.c.bf16 %v2834, %v2834
  %v2853 = vpack.c.bf16 %v2836, %v2836
  %v2854 = vpack.c.bf16 %v2845, %v2845
  %v2855 = vpack.c.bf16 %v2847, %v2847
  %v2858 = vunpack.c.l.b16 %v2778
  %v2859 = vunpack.c.l.b16 %v2779
  %v2860 = vpack.c.b16 %v2859, %v2858
  %2861 = vrot.lane.b32.xlu0 %v2860, 64
  %v2862 = vpop.permute.xlu0 %2861
  %v2865 = vunpack.c.l.b16 %v2815
  %v2866 = vunpack.c.l.b16 %v2816
  %v2867 = vpack.c.b16 %v2866, %v2865
  %2868 = vrot.lane.b32.xlu0 %v2867, 64
  %v2869 = vpop.permute.xlu0 %2868
  %v2871 = vsel %vm2290, %v2862, 0
  %v2874 = vsel %vm2290, %v2869, 0
  %2876 = vmatpush.bf16.xpose.msra.mxu0 0
  %2877 = vmatpush.bf16.xpose.msra.mxu0 0
  %2878 = vmatpush.bf16.xpose.msra.mxu0 0
  %2879 = vmatpush.bf16.xpose.msra.mxu0 0
  %2880 = vmatpush.bf16.xpose.msra.mxu0 0
  %2881 = vmatpush.bf16.xpose.msra.mxu0 0
  %2882 = vmatpush.bf16.xpose.msra.mxu0 0
  %2883 = vmatpush.bf16.xpose.msra.mxu0 %v2874
  %2884 = vmatmul.bf16.gmra.mxu0 %v2871
  %v2885 = vpop.f32.mrf.mxu0
  %v2886 = vadd.f32 0.0, %v2885
  %v2887 = vpop.f32.mrf.mxu0
  %v2888 = vadd.f32 0.0, %v2887
  %2889 = vdwg.mxu0
  %v2892 = vunpack.c.l.b16 %v2780
  %v2893 = vunpack.c.l.b16 %v2781
  %v2894 = vpack.c.b16 %v2893, %v2892
  %2895 = vrot.lane.b32.xlu0 %v2894, 64
  %v2896 = vpop.permute.xlu0 %2895
  %v2899 = vunpack.c.l.b16 %v2817
  %v2900 = vunpack.c.l.b16 %v2818
  %v2901 = vpack.c.b16 %v2900, %v2899
  %2902 = vrot.lane.b32.xlu0 %v2901, 64
  %v2903 = vpop.permute.xlu0 %2902
  %v2905 = vsel %vm2290, %v2896, 0
  %v2908 = vsel %vm2290, %v2903, 0
  %2910 = vmatpush.bf16.xpose.msra.mxu0 0
  %2911 = vmatpush.bf16.xpose.msra.mxu0 0
  %2912 = vmatpush.bf16.xpose.msra.mxu0 0
  %2913 = vmatpush.bf16.xpose.msra.mxu0 0
  %2914 = vmatpush.bf16.xpose.msra.mxu0 0
  %2915 = vmatpush.bf16.xpose.msra.mxu0 0
  %2916 = vmatpush.bf16.xpose.msra.mxu0 0
  %2917 = vmatpush.bf16.xpose.msra.mxu0 %v2908
  %2918 = vmatmul.bf16.gmra.mxu0 %v2905
  %v2919 = vpop.f32.mrf.mxu0
  %v2920 = vadd.f32 0.0, %v2919
  %v2921 = vpop.f32.mrf.mxu0
  %v2922 = vadd.f32 0.0, %v2921
  %2923 = vdwg.mxu0
  %v2924 = vsel %vm2341, %v2886, -inf
  %2925 = vmax.xlane.f32.xlu0 %v2924
  %v2926 = vpop.xlane.xlu0 %2925
  %v2927 = vsel %vm2345, %v2888, -inf
  %2928 = vmax.xlane.f32.xlu0 %v2927
  %v2929 = vpop.xlane.xlu0 %2928
  %v2930 = vsel %vm2341, %v2920, -inf
  %2931 = vmax.xlane.f32.xlu0 %v2930
  %v2932 = vpop.xlane.xlu0 %2931
  %v2933 = vsel %vm2345, %v2922, -inf
  %2934 = vmax.xlane.f32.xlu0 %v2933
  %v2935 = vpop.xlane.xlu0 %2934
  %v2936 = vsub.f32 %v2886, %v2926
  %v2937 = vsub.f32 %v2888, %v2929
  %v2938 = vsub.f32 %v2920, %v2932
  %v2939 = vsub.f32 %v2922, %v2935
  %v2940 = vmul.f32 %v2936, 1.442695
  %v2941 = vpow.pop %v2940
  %v2942 = vmul.f32 %v2937, 1.442695
  %v2943 = vpow.pop %v2942
  %v2944 = vmul.f32 %v2938, 1.442695
  %v2945 = vpow.pop %v2944
  %v2946 = vmul.f32 %v2939, 1.442695
  %v2947 = vpow.pop %v2946
  %v2948 = vsel %vm2341, %v2941, 0.0
  %2949 = vadd.xlane.f32.xlu0 %v2948
  %v2950 = vpop.xlane.xlu0 %2949
  %v2951 = vsel %vm2345, %v2943, 0.0
  %2952 = vadd.xlane.f32.xlu0 %v2951
  %v2953 = vpop.xlane.xlu0 %2952
  %v2954 = vsel %vm2341, %v2945, 0.0
  %2955 = vadd.xlane.f32.xlu0 %v2954
  %v2956 = vpop.xlane.xlu0 %2955
  %v2957 = vsel %vm2345, %v2947, 0.0
  %2958 = vadd.xlane.f32.xlu0 %v2957
  %v2959 = vpop.xlane.xlu0 %2958
  %v2960 = vrcp.pop %v2950
  %v2961 = vrcp.pop %v2953
  %v2962 = vrcp.pop %v2956
  %v2963 = vrcp.pop %v2959
  %v2964 = vmul.f32 %v2941, %v2960
  %v2965 = vmul.f32 %v2943, %v2961
  %v2966 = vmul.f32 %v2945, %v2962
  %v2967 = vmul.f32 %v2947, %v2963
  %v2968 = vpack.c.bf16 %v2964, %v2964
  %v2969 = vpack.c.bf16 %v2965, %v2965
  %v2970 = vpack.c.bf16 %v2966, %v2966
  %v2971 = vpack.c.bf16 %v2967, %v2967
  %v2974 = vunpack.c.l.b16 %v2968
  %v2975 = vunpack.c.l.b16 %v2969
  %v2976 = vpack.c.b16 %v2975, %v2974
  %v2979 = vunpack.c.l.b16 %v2852
  %v2980 = vunpack.c.l.b16 %v2853
  %v2981 = vpack.c.b16 %v2980, %v2979
  %2982 = vrot.lane.b32.xlu0 %v2981, 64
  %v2983 = vpop.permute.xlu0 %2982
  %v2985 = vsel %vm2341, %v2976, 0
  %v2988 = vand.u32 %v2983, %v2406
  %2990 = vmatpush.bf16.msra.mxu0 0
  %2991 = vmatpush.bf16.msra.mxu0 0
  %2992 = vmatpush.bf16.msra.mxu0 0
  %2993 = vmatpush.bf16.msra.mxu0 0
  %2994 = vmatpush.bf16.msra.mxu0 0
  %2995 = vmatpush.bf16.msra.mxu0 0
  %2996 = vmatpush.bf16.msra.mxu0 0
  %2997 = vmatpush.bf16.msra.mxu0 %v2988
  %2998 = vmatmul.bf16.gmra.mxu0 %v2985
  %v2999 = vpop.f32.mrf.mxu0
  %v3000 = vadd.f32 0.0, %v2999
  %v3001 = vpop.f32.mrf.mxu0
  %v3002 = vadd.f32 0.0, %v3001
  %3003 = vdwg.mxu0
  %v3006 = vunpack.c.l.b16 %v2970
  %v3007 = vunpack.c.l.b16 %v2971
  %v3008 = vpack.c.b16 %v3007, %v3006
  %v3011 = vunpack.c.l.b16 %v2854
  %v3012 = vunpack.c.l.b16 %v2855
  %v3013 = vpack.c.b16 %v3012, %v3011
  %3014 = vrot.lane.b32.xlu0 %v3013, 64
  %v3015 = vpop.permute.xlu0 %3014
  %v3017 = vsel %vm2341, %v3008, 0
  %v3020 = vand.u32 %v3015, %v2406
  %3022 = vmatpush.bf16.msra.mxu0 0
  %3023 = vmatpush.bf16.msra.mxu0 0
  %3024 = vmatpush.bf16.msra.mxu0 0
  %3025 = vmatpush.bf16.msra.mxu0 0
  %3026 = vmatpush.bf16.msra.mxu0 0
  %3027 = vmatpush.bf16.msra.mxu0 0
  %3028 = vmatpush.bf16.msra.mxu0 0
  %3029 = vmatpush.bf16.msra.mxu0 %v3020
  %3030 = vmatmul.bf16.gmra.mxu0 %v3017
  %v3031 = vpop.f32.mrf.mxu0
  %v3032 = vadd.f32 0.0, %v3031
  %v3033 = vpop.f32.mrf.mxu0
  %v3034 = vadd.f32 0.0, %v3033
  %3035 = vdwg.mxu0
  %3036 = vst [vmem:[#allocation1] ss:$9 sm:$0xff] %v2071
  %s3037 = scalar_lea.vmem [#allocation1], 1
  %3038 = vst [vmem:[%s3037] ss:$9 sm:$0xff] %v2118
  %s3039 = scalar_lea.vmem [#allocation1], 2
  %3040 = vst [vmem:[%s3039] ss:$9 sm:$0xff] %v2119
  %s3041 = scalar_lea.vmem [#allocation1], 3
  %3042 = vst [vmem:[%s3041] ss:$9 sm:$0xff] %v2120
  %s3043 = scalar_lea.vmem [#allocation1], 4
  %3044 = vst [vmem:[%s3043] ss:$9 sm:$0xff] %v2121
  %s3045 = scalar_lea.vmem [#allocation1], 5
  %3046 = vst [vmem:[%s3045] ss:$9 sm:$0xff] %v2122
  %s3047 = scalar_lea.vmem [#allocation1], 6
  %3048 = vst [vmem:[%s3047] ss:$9 sm:$0xff] %v2123
  %s3049 = scalar_lea.vmem [#allocation1], 7
  %3050 = vst [vmem:[%s3049] ss:$9 sm:$0xff] %v2124
  %v3051 = vld [vmem:[#allocation1] sm:$0xff]
  %3052 = vst [vmem:[#allocation1] ss:$9 sm:$0xff] %v2073
  %v3053 = vld [vmem:[#allocation1] sm:$0xff]
  %3054 = vst [vmem:[#allocation1] ss:$9 sm:$0xff] %v2125
  %3055 = vst [vmem:[%s3037] ss:$9 sm:$0xff] %v2126
  %3056 = vst [vmem:[%s3039] ss:$9 sm:$0xff] %v2127
  %3057 = vst [vmem:[%s3041] ss:$9 sm:$0xff] %v2128
  %3058 = vst [vmem:[%s3043] ss:$9 sm:$0xff] %v2129
  %3059 = vst [vmem:[%s3045] ss:$9 sm:$0xff] %v2130
  %3060 = vst [vmem:[%s3047] ss:$9 sm:$0xff] %v2131
  %3061 = vst [vmem:[%s3049] ss:$9 sm:$0xff] %v2076
  %v3062 = vld [vmem:[#allocation1] sm:$0xff]
  %3063 = vst [vmem:[#allocation1] ss:$9 sm:$0xff] %v2132
  %v3064 = vld [vmem:[#allocation1] sm:$0xff]
  %v3069 = vpack.c.bf16 %v3051, %v3051
  %v3070 = vpack.c.bf16 %v3053, %v3053
  %v3071 = vpack.c.bf16 %v3062, %v3062
  %v3072 = vpack.c.bf16 %v3064, %v3064
  %3073 = vst [vmem:[#allocation1] ss:$9 sm:$0xff] %v2089
  %s3074 = scalar_lea.vmem [#allocation1], 1
  %3075 = vst [vmem:[%s3074] ss:$9 sm:$0xff] %v2136
  %s3076 = scalar_lea.vmem [#allocation1], 2
  %3077 = vst [vmem:[%s3076] ss:$9 sm:$0xff] %v2137
  %s3078 = scalar_lea.vmem [#allocation1], 3
  %3079 = vst [vmem:[%s3078] ss:$9 sm:$0xff] %v2138
  %s3080 = scalar_lea.vmem [#allocation1], 4
  %3081 = vst [vmem:[%s3080] ss:$9 sm:$0xff] %v2139
  %s3082 = scalar_lea.vmem [#allocation1], 5
  %3083 = vst [vmem:[%s3082] ss:$9 sm:$0xff] %v2140
  %s3084 = scalar_lea.vmem [#allocation1], 6
  %3085 = vst [vmem:[%s3084] ss:$9 sm:$0xff] %v2141
  %s3086 = scalar_lea.vmem [#allocation1], 7
  %3087 = vst [vmem:[%s3086] ss:$9 sm:$0xff] %v2142
  %v3088 = vld [vmem:[#allocation1] sm:$0xff]
  %3089 = vst [vmem:[#allocation1] ss:$9 sm:$0xff] %v2091
  %v3090 = vld [vmem:[#allocation1] sm:$0xff]
  %3091 = vst [vmem:[#allocation1] ss:$9 sm:$0xff] %v2143
  %3092 = vst [vmem:[%s3074] ss:$9 sm:$0xff] %v2144
  %3093 = vst [vmem:[%s3076] ss:$9 sm:$0xff] %v2145
  %3094 = vst [vmem:[%s3078] ss:$9 sm:$0xff] %v2146
  %3095 = vst [vmem:[%s3080] ss:$9 sm:$0xff] %v2147
  %3096 = vst [vmem:[%s3082] ss:$9 sm:$0xff] %v2148
  %3097 = vst [vmem:[%s3084] ss:$9 sm:$0xff] %v2149
  %3098 = vst [vmem:[%s3086] ss:$9 sm:$0xff] %v2094
  %v3099 = vld [vmem:[#allocation1] sm:$0xff]
  %3100 = vst [vmem:[#allocation1] ss:$9 sm:$0xff] %v2150
  %v3101 = vld [vmem:[#allocation1] sm:$0xff]
  %v3106 = vpack.c.bf16 %v3088, %v3088
  %v3107 = vpack.c.bf16 %v3090, %v3090
  %v3108 = vpack.c.bf16 %v3099, %v3099
  %v3109 = vpack.c.bf16 %v3101, %v3101
  %3110 = vst [vmem:[#allocation1] ss:$9 sm:$0xff] %v2107
  %s3111 = scalar_lea.vmem [#allocation1], 1
  %3112 = vst [vmem:[%s3111] ss:$9 sm:$0xff] %v2154
  %s3113 = scalar_lea.vmem [#allocation1], 2
  %3114 = vst [vmem:[%s3113] ss:$9 sm:$0xff] %v2155
  %s3115 = scalar_lea.vmem [#allocation1], 3
  %3116 = vst [vmem:[%s3115] ss:$9 sm:$0xff] %v2156
  %s3117 = scalar_lea.vmem [#allocation1], 4
  %3118 = vst [vmem:[%s3117] ss:$9 sm:$0xff] %v2157
  %s3119 = scalar_lea.vmem [#allocation1], 5
  %3120 = vst [vmem:[%s3119] ss:$9 sm:$0xff] %v2158
  %s3121 = scalar_lea.vmem [#allocation1], 6
  %3122 = vst [vmem:[%s3121] ss:$9 sm:$0xff] %v2159
  %s3123 = scalar_lea.vmem [#allocation1], 7
  %3124 = vst [vmem:[%s3123] ss:$9 sm:$0xff] %v2160
  %v3125 = vld [vmem:[#allocation1] sm:$0xff]
  %3126 = vst [vmem:[#allocation1] ss:$9 sm:$0xff] %v2109
  %v3127 = vld [vmem:[#allocation1] sm:$0xff]
  %3128 = vst [vmem:[#allocation1] ss:$9 sm:$0xff] %v2161
  %3129 = vst [vmem:[%s3111] ss:$9 sm:$0xff] %v2162
  %3130 = vst [vmem:[%s3113] ss:$9 sm:$0xff] %v2163
  %3131 = vst [vmem:[%s3115] ss:$9 sm:$0xff] %v2164
  %3132 = vst [vmem:[%s3117] ss:$9 sm:$0xff] %v2165
  %3133 = vst [vmem:[%s3119] ss:$9 sm:$0xff] %v2166
  %3134 = vst [vmem:[%s3121] ss:$9 sm:$0xff] %v2167
  %3135 = vst [vmem:[%s3123] ss:$9 sm:$0xff] %v2112
  %v3136 = vld [vmem:[#allocation1] sm:$0xff]
  %3137 = vst [vmem:[#allocation1] ss:$9 sm:$0xff] %v2168
  %v3138 = vld [vmem:[#allocation1] sm:$0xff]
  %v3143 = vpack.c.bf16 %v3125, %v3125
  %v3144 = vpack.c.bf16 %v3127, %v3127
  %v3145 = vpack.c.bf16 %v3136, %v3136
  %v3146 = vpack.c.bf16 %v3138, %v3138
  %v3149 = vunpack.c.l.b16 %v3069
  %v3150 = vunpack.c.l.b16 %v3070
  %v3151 = vpack.c.b16 %v3150, %v3149
  %3152 = vrot.lane.b32.xlu0 %v3151, 32
  %v3153 = vpop.permute.xlu0 %3152
  %v3156 = vunpack.c.l.b16 %v3106
  %v3157 = vunpack.c.l.b16 %v3107
  %v3158 = vpack.c.b16 %v3157, %v3156
  %3159 = vrot.lane.b32.xlu0 %v3158, 32
  %v3160 = vpop.permute.xlu0 %3159
  %v3162 = vsel %vm2290, %v3153, 0
  %v3165 = vsel %vm2290, %v3160, 0
  %3167 = vmatpush.bf16.xpose.msra.mxu0 0
  %3168 = vmatpush.bf16.xpose.msra.mxu0 0
  %3169 = vmatpush.bf16.xpose.msra.mxu0 0
  %3170 = vmatpush.bf16.xpose.msra.mxu0 0
  %3171 = vmatpush.bf16.xpose.msra.mxu0 0
  %3172 = vmatpush.bf16.xpose.msra.mxu0 0
  %3173 = vmatpush.bf16.xpose.msra.mxu0 0
  %3174 = vmatpush.bf16.xpose.msra.mxu0 %v3165
  %3175 = vmatmul.bf16.gmra.mxu0 %v3162
  %v3176 = vpop.f32.mrf.mxu0
  %v3177 = vadd.f32 0.0, %v3176
  %v3178 = vpop.f32.mrf.mxu0
  %v3179 = vadd.f32 0.0, %v3178
  %3180 = vdwg.mxu0
  %v3183 = vunpack.c.l.b16 %v3071
  %v3184 = vunpack.c.l.b16 %v3072
  %v3185 = vpack.c.b16 %v3184, %v3183
  %3186 = vrot.lane.b32.xlu0 %v3185, 32
  %v3187 = vpop.permute.xlu0 %3186
  %v3190 = vunpack.c.l.b16 %v3108
  %v3191 = vunpack.c.l.b16 %v3109
  %v3192 = vpack.c.b16 %v3191, %v3190
  %3193 = vrot.lane.b32.xlu0 %v3192, 32
  %v3194 = vpop.permute.xlu0 %3193
  %v3196 = vsel %vm2290, %v3187, 0
  %v3199 = vsel %vm2290, %v3194, 0
  %3201 = vmatpush.bf16.xpose.msra.mxu0 0
  %3202 = vmatpush.bf16.xpose.msra.mxu0 0
  %3203 = vmatpush.bf16.xpose.msra.mxu0 0
  %3204 = vmatpush.bf16.xpose.msra.mxu0 0
  %3205 = vmatpush.bf16.xpose.msra.mxu0 0
  %3206 = vmatpush.bf16.xpose.msra.mxu0 0
  %3207 = vmatpush.bf16.xpose.msra.mxu0 0
  %3208 = vmatpush.bf16.xpose.msra.mxu0 %v3199
  %3209 = vmatmul.bf16.gmra.mxu0 %v3196
  %v3210 = vpop.f32.mrf.mxu0
  %v3211 = vadd.f32 0.0, %v3210
  %v3212 = vpop.f32.mrf.mxu0
  %v3213 = vadd.f32 0.0, %v3212
  %3214 = vdwg.mxu0
  %v3215 = vsel %vm2341, %v3177, -inf
  %3216 = vmax.xlane.f32.xlu0 %v3215
  %v3217 = vpop.xlane.xlu0 %3216
  %v3218 = vsel %vm2345, %v3179, -inf
  %3219 = vmax.xlane.f32.xlu0 %v3218
  %v3220 = vpop.xlane.xlu0 %3219
  %v3221 = vsel %vm2341, %v3211, -inf
  %3222 = vmax.xlane.f32.xlu0 %v3221
  %v3223 = vpop.xlane.xlu0 %3222
  %v3224 = vsel %vm2345, %v3213, -inf
  %3225 = vmax.xlane.f32.xlu0 %v3224
  %v3226 = vpop.xlane.xlu0 %3225
  %v3227 = vsub.f32 %v3177, %v3217
  %v3228 = vsub.f32 %v3179, %v3220
  %v3229 = vsub.f32 %v3211, %v3223
  %v3230 = vsub.f32 %v3213, %v3226
  %v3231 = vmul.f32 %v3227, 1.442695
  %v3232 = vpow.pop %v3231
  %v3233 = vmul.f32 %v3228, 1.442695
  %v3234 = vpow.pop %v3233
  %v3235 = vmul.f32 %v3229, 1.442695
  %v3236 = vpow.pop %v3235
  %v3237 = vmul.f32 %v3230, 1.442695
  %v3238 = vpow.pop %v3237
  %v3239 = vsel %vm2341, %v3232, 0.0
  %3240 = vadd.xlane.f32.xlu0 %v3239
  %v3241 = vpop.xlane.xlu0 %3240
  %v3242 = vsel %vm2345, %v3234, 0.0
  %3243 = vadd.xlane.f32.xlu0 %v3242
  %v3244 = vpop.xlane.xlu0 %3243
  %v3245 = vsel %vm2341, %v3236, 0.0
  %3246 = vadd.xlane.f32.xlu0 %v3245
  %v3247 = vpop.xlane.xlu0 %3246
  %v3248 = vsel %vm2345, %v3238, 0.0
  %3249 = vadd.xlane.f32.xlu0 %v3248
  %v3250 = vpop.xlane.xlu0 %3249
  %v3251 = vrcp.pop %v3241
  %v3252 = vrcp.pop %v3244
  %v3253 = vrcp.pop %v3247
  %v3254 = vrcp.pop %v3250
  %v3255 = vmul.f32 %v3232, %v3251
  %v3256 = vmul.f32 %v3234, %v3252
  %v3257 = vmul.f32 %v3236, %v3253
  %v3258 = vmul.f32 %v3238, %v3254
  %v3259 = vpack.c.bf16 %v3255, %v3255
  %v3260 = vpack.c.bf16 %v3256, %v3256
  %v3261 = vpack.c.bf16 %v3257, %v3257
  %v3262 = vpack.c.bf16 %v3258, %v3258
  %v3265 = vunpack.c.l.b16 %v3259
  %v3266 = vunpack.c.l.b16 %v3260
  %v3267 = vpack.c.b16 %v3266, %v3265
  %v3270 = vunpack.c.l.b16 %v3143
  %v3271 = vunpack.c.l.b16 %v3144
  %v3272 = vpack.c.b16 %v3271, %v3270
  %3273 = vrot.lane.b32.xlu0 %v3272, 32
  %v3274 = vpop.permute.xlu0 %3273
  %v3276 = vsel %vm2341, %v3267, 0
  %v3279 = vand.u32 %v3274, %v2406
  %3281 = vmatpush.bf16.msra.mxu0 0
  %3282 = vmatpush.bf16.msra.mxu0 0
  %3283 = vmatpush.bf16.msra.mxu0 0
  %3284 = vmatpush.bf16.msra.mxu0 0
  %3285 = vmatpush.bf16.msra.mxu0 0
  %3286 = vmatpush.bf16.msra.mxu0 0
  %3287 = vmatpush.bf16.msra.mxu0 0
  %3288 = vmatpush.bf16.msra.mxu0 %v3279
  %3289 = vmatmul.bf16.gmra.mxu0 %v3276
  %v3290 = vpop.f32.mrf.mxu0
  %v3291 = vadd.f32 0.0, %v3290
  %v3292 = vpop.f32.mrf.mxu0
  %v3293 = vadd.f32 0.0, %v3292
  %3294 = vdwg.mxu0
  %v3297 = vunpack.c.l.b16 %v3261
  %v3298 = vunpack.c.l.b16 %v3262
  %v3299 = vpack.c.b16 %v3298, %v3297
  %v3302 = vunpack.c.l.b16 %v3145
  %v3303 = vunpack.c.l.b16 %v3146
  %v3304 = vpack.c.b16 %v3303, %v3302
  %3305 = vrot.lane.b32.xlu0 %v3304, 32
  %v3306 = vpop.permute.xlu0 %3305
  %v3308 = vsel %vm2341, %v3299, 0
  %v3311 = vand.u32 %v3306, %v2406
  %3313 = vmatpush.bf16.msra.mxu0 0
  %3314 = vmatpush.bf16.msra.mxu0 0
  %3315 = vmatpush.bf16.msra.mxu0 0
  %3316 = vmatpush.bf16.msra.mxu0 0
  %3317 = vmatpush.bf16.msra.mxu0 0
  %3318 = vmatpush.bf16.msra.mxu0 0
  %3319 = vmatpush.bf16.msra.mxu0 0
  %3320 = vmatpush.bf16.msra.mxu0 %v3311
  %3321 = vmatmul.bf16.gmra.mxu0 %v3308
  %v3322 = vpop.f32.mrf.mxu0
  %v3323 = vadd.f32 0.0, %v3322
  %v3324 = vpop.f32.mrf.mxu0
  %v3325 = vadd.f32 0.0, %v3324
  %3326 = vdwg.mxu0
  %3331 = vrot.lane.b32.xlu0 %v2709, 32
  %v3332 = vpop.permute.xlu0 %3331
  %3333 = vrot.lane.b32.xlu0 %v2711, 32
  %v3334 = vpop.permute.xlu0 %3333
  %3335 = vrot.lane.b32.xlu0 %v2741, 32
  %v3336 = vpop.permute.xlu0 %3335
  %3337 = vrot.lane.b32.xlu0 %v2743, 32
  %v3338 = vpop.permute.xlu0 %3337
  %3347 = vrot.lane.b32.xlu0 %v3000, 64
  %v3348 = vpop.permute.xlu0 %3347
  %3349 = vrot.lane.b32.xlu0 %v3002, 64
  %v3350 = vpop.permute.xlu0 %3349
  %3351 = vrot.lane.b32.xlu0 %v3032, 64
  %v3352 = vpop.permute.xlu0 %3351
  %3353 = vrot.lane.b32.xlu0 %v3034, 64
  %v3354 = vpop.permute.xlu0 %3353
  %3363 = vrot.lane.b32.xlu0 %v3291, 96
  %v3364 = vpop.permute.xlu0 %3363
  %3365 = vrot.lane.b32.xlu0 %v3293, 96
  %v3366 = vpop.permute.xlu0 %3365
  %3367 = vrot.lane.b32.xlu0 %v3323, 96
  %v3368 = vpop.permute.xlu0 %3367
  %3369 = vrot.lane.b32.xlu0 %v3325, 96
  %v3370 = vpop.permute.xlu0 %3369
  %v3375 = vsel %vm2290, %v2420, %v3332
  %v3376 = vsel %vm2290, %v2422, %v3334
  %v3377 = vsel %vm2290, %v2450, %v3336
  %v3378 = vsel %vm2290, %v2452, %v3338
  %vm3379 = vcmask 523264
  %v3380 = vsel %vm3379, %v3375, %v3348
  %v3381 = vsel %vm3379, %v3376, %v3350
  %v3382 = vsel %vm3379, %v3377, %v3352
  %v3383 = vsel %vm3379, %v3378, %v3354
  %vm3384 = vcmask 785408
  %v3385 = vsel %vm3384, %v3380, %v3364
  %v3386 = vsel %vm3384, %v3381, %v3366
  %v3387 = vsel %vm3384, %v3382, %v3368
  %v3388 = vsel %vm3384, %v3383, %v3370
  %v3393 = vrot.slane %v3385, 1
  %v3394 = vrot.slane %v3385, 2
  %v3395 = vrot.slane %v3385, 3
  %v3396 = vrot.slane %v3385, 4
  %v3397 = vrot.slane %v3385, 5
  %v3398 = vrot.slane %v3385, 6
  %v3399 = vrot.slane %v3385, 7
  %v3400 = vrot.slane %v3387, 1
  %v3401 = vrot.slane %v3387, 2
  %v3402 = vrot.slane %v3387, 3
  %v3403 = vrot.slane %v3387, 4
  %v3404 = vrot.slane %v3387, 5
  %v3405 = vrot.slane %v3387, 6
  %v3406 = vrot.slane %v3387, 7
  %3407 = vst [vmem:[#allocation1] ss:$9 sm:$0xff] %v3385
  %s3408 = scalar_lea.vmem [#allocation1], 1
  %3409 = vst [vmem:[%s3408] ss:$9 sm:$0xff] %v3393
  %s3410 = scalar_lea.vmem [#allocation1], 2
  %3411 = vst [vmem:[%s3410] ss:$9 sm:$0xff] %v3394
  %s3412 = scalar_lea.vmem [#allocation1], 3
  %3413 = vst [vmem:[%s3412] ss:$9 sm:$0xff] %v3395
  %s3414 = scalar_lea.vmem [#allocation1], 4
  %3415 = vst [vmem:[%s3414] ss:$9 sm:$0xff] %v3396
  %s3416 = scalar_lea.vmem [#allocation1], 5
  %3417 = vst [vmem:[%s3416] ss:$9 sm:$0xff] %v3397
  %s3418 = scalar_lea.vmem [#allocation1], 6
  %3419 = vst [vmem:[%s3418] ss:$9 sm:$0xff] %v3398
  %s3420 = scalar_lea.vmem [#allocation1], 7
  %3421 = vst [vmem:[%s3420] ss:$9 sm:$0xff] %v3399
  %v3422 = vld [vmem:[#allocation1] sm:$0xff]
  %3423 = vst [vmem:[#allocation1] ss:$9 sm:$0xff] %v3386
  %3424 = vst [vmem:[%s3408] ss:$9 sm:$0xff] %v3387
  %3425 = vst [vmem:[%s3410] ss:$9 sm:$0xff] %v3400
  %3426 = vst [vmem:[%s3412] ss:$9 sm:$0xff] %v3401
  %3427 = vst [vmem:[%s3414] ss:$9 sm:$0xff] %v3402
  %3428 = vst [vmem:[%s3416] ss:$9 sm:$0xff] %v3403
  %3429 = vst [vmem:[%s3418] ss:$9 sm:$0xff] %v3404
  %3430 = vst [vmem:[%s3420] ss:$9 sm:$0xff] %v3405
  %v3431 = vld [vmem:[#allocation1] sm:$0xff]
  %3432 = vst [vmem:[#allocation1] ss:$9 sm:$0xff] %v3406
  %3433 = vst [vmem:[%s3408] ss:$9 sm:$0xff] %v3388
  %v3434 = vld [vmem:[#allocation1] sm:$0xff]
  %v3438 = vpack.c.bf16 %v3431, %v3422
  %v3439 = vpack.c.bf16 %v3434, %v3434
  %v3440 = vld [vmem:[%s5] sm:$0xf]
  %v3441 = vld [vmem:[%s5 + $0x4] sm:$0xf]
  %v3442 = vld [vmem:[%s5 + $0x8] sm:$0xf]
  %v3443 = vld [vmem:[%s5 + $0xc] sm:$0xf]
  %v3444 = vld [vmem:[%s5 + $0x10] sm:$0xf]
  %v3445 = vld [vmem:[%s5 + $0x14] sm:$0xf]
  %v3446 = vld [vmem:[%s5 + $0x18] sm:$0xf]
  %v3447 = vld [vmem:[%s5 + $0x1c] sm:$0xf]
  %v3448 = vld [vmem:[%s5 + $0x20] sm:$0xf]
  %v3449 = vld [vmem:[%s5 + $0x24] sm:$0xf]
  %v3450 = vld [vmem:[%s5 + $0x28] sm:$0xf]
  %v3451 = vld [vmem:[%s5 + $0x2c] sm:$0xf]
  %v3452 = vld [vmem:[%s5 + $0x30] sm:$0xf]
  %v3453 = vld [vmem:[%s5 + $0x34] sm:$0xf]
  %v3454 = vld [vmem:[%s5 + $0x38] sm:$0xf]
  %v3455 = vld [vmem:[%s5 + $0x3c] sm:$0xf]
  %v3457 = vperm.slane %v1220, 0
  %v3475 = vunpack.c.l.b16 %v3440
  %v3476 = vunpack.c.l.b16 %v3441
  %v3477 = vunpack.c.l.b16 %v3442
  %v3478 = vunpack.c.l.b16 %v3443
  %v3479 = vunpack.c.l.b16 %v3444
  %v3480 = vunpack.c.l.b16 %v3445
  %v3481 = vunpack.c.l.b16 %v3446
  %v3482 = vunpack.c.l.b16 %v3447
  %v3483 = vunpack.c.l.b16 %v3448
  %v3484 = vunpack.c.l.b16 %v3449
  %v3485 = vunpack.c.l.b16 %v3450
  %v3486 = vunpack.c.l.b16 %v3451
  %v3487 = vunpack.c.l.b16 %v3452
  %v3488 = vunpack.c.l.b16 %v3453
  %v3489 = vunpack.c.l.b16 %v3454
  %v3490 = vunpack.c.l.b16 %v3455
  %v3491 = vpack.c.b16 %v3476, %v3475
  %v3492 = vpack.c.b16 %v3478, %v3477
  %v3493 = vpack.c.b16 %v3480, %v3479
  %v3494 = vpack.c.b16 %v3482, %v3481
  %v3495 = vpack.c.b16 %v3484, %v3483
  %v3496 = vpack.c.b16 %v3486, %v3485
  %v3497 = vpack.c.b16 %v3488, %v3487
  %v3498 = vpack.c.b16 %v3490, %v3489
  %3507 = vmatpush.bf16.msra.mxu0 %v3498
  %3508 = vmatpush.bf16.msra.mxu0 %v3497
  %3509 = vmatpush.bf16.msra.mxu0 %v3496
  %3510 = vmatpush.bf16.msra.mxu0 %v3495
  %3511 = vmatpush.bf16.msra.mxu0 %v3494
  %3512 = vmatpush.bf16.msra.mxu0 %v3493
  %3513 = vmatpush.bf16.msra.mxu0 %v3492
  %3514 = vmatpush.bf16.msra.mxu0 %v3491
  %3515 = vmatmul.bf16.gmra.mxu0 %v3438
  %v3516 = vpop.f32.mrf.mxu0
  %v3517 = vadd.f32 %v3457, %v3516
  %v3518 = vpop.f32.mrf.mxu0
  %v3519 = vadd.f32 %v3457, %v3518
  %3520 = vmatmul.bf16.gmra.mxu0 %v3439
  %v3521 = vpop.f32.mrf.mxu0
  %v3522 = vadd.f32 %v3457, %v3521
  %v3523 = vpop.f32.mrf.mxu0
  %3524 = vdwg.mxu0
  %v3528 = vrot.slane %v3517, 1
  %v3529 = vrot.slane %v3517, 2
  %v3530 = vrot.slane %v3517, 3
  %v3531 = vrot.slane %v3517, 4
  %v3532 = vrot.slane %v3517, 5
  %v3533 = vrot.slane %v3517, 6
  %v3534 = vrot.slane %v3517, 7
  %v3535 = vrot.slane %v3519, 1
  %v3536 = vrot.slane %v3519, 2
  %v3537 = vrot.slane %v3519, 3
  %v3538 = vrot.slane %v3519, 4
  %v3539 = vrot.slane %v3519, 5
  %v3540 = vrot.slane %v3519, 6
  %v3541 = vrot.slane %v3519, 7
  %v3542 = vrot.slane %v3522, 1
  %v3558 = vadd.f32 %v1199, %v3517
  %v3559 = vadd.f32 %v1200, %v3528
  %v3560 = vadd.f32 %v1201, %v3529
  %v3561 = vadd.f32 %v1202, %v3530
  %v3562 = vadd.f32 %v1203, %v3531
  %v3563 = vadd.f32 %v1204, %v3532
  %v3564 = vadd.f32 %v1205, %v3533
  %v3565 = vadd.f32 %v1206, %v3534
  %v3566 = vadd.f32 %v1207, %v3519
  %v3567 = vadd.f32 %v1208, %v3535
  %v3568 = vadd.f32 %v1209, %v3536
  %v3569 = vadd.f32 %v1210, %v3537
  %v3570 = vadd.f32 %v1211, %v3538
  %v3571 = vadd.f32 %v1212, %v3539
  %v3572 = vadd.f32 %v1213, %v3540
  %v3573 = vadd.f32 %v1214, %v3541
  %v3574 = vadd.f32 %v1215, %v3522
  %v3575 = vadd.f32 %v1216, %v3542
  %3594 = vst [vmem:[#allocation1] ss:$9 sm:$0xff] %v3558
  %s3595 = scalar_lea.vmem [#allocation1], 1
  %3596 = vst [vmem:[%s3595] ss:$9 sm:$0xff] %v3559
  %s3597 = scalar_lea.vmem [#allocation1], 2
  %3598 = vst [vmem:[%s3597] ss:$9 sm:$0xff] %v3560
  %s3599 = scalar_lea.vmem [#allocation1], 3
  %3600 = vst [vmem:[%s3599] ss:$9 sm:$0xff] %v3561
  %s3601 = scalar_lea.vmem [#allocation1], 4
  %3602 = vst [vmem:[%s3601] ss:$9 sm:$0xff] %v3562
  %s3603 = scalar_lea.vmem [#allocation1], 5
  %3604 = vst [vmem:[%s3603] ss:$9 sm:$0xff] %v3563
  %s3605 = scalar_lea.vmem [#allocation1], 6
  %3606 = vst [vmem:[%s3605] ss:$9 sm:$0xff] %v3564
  %s3607 = scalar_lea.vmem [#allocation1], 7
  %3608 = vst [vmem:[%s3607] ss:$9 sm:$0xff] %v3565
  %v3609 = vld [vmem:[#allocation1] sm:$0xff]
  %3610 = vst [vmem:[#allocation1] ss:$9 sm:$0xff] %v3566
  %3611 = vst [vmem:[%s3595] ss:$9 sm:$0xff] %v3567
  %3612 = vst [vmem:[%s3597] ss:$9 sm:$0xff] %v3568
  %3613 = vst [vmem:[%s3599] ss:$9 sm:$0xff] %v3569
  %3614 = vst [vmem:[%s3601] ss:$9 sm:$0xff] %v3570
  %3615 = vst [vmem:[%s3603] ss:$9 sm:$0xff] %v3571
  %3616 = vst [vmem:[%s3605] ss:$9 sm:$0xff] %v3572
  %3617 = vst [vmem:[%s3607] ss:$9 sm:$0xff] %v3573
  %v3618 = vld [vmem:[#allocation1] sm:$0xff]
  %3619 = vst [vmem:[#allocation1] ss:$9 sm:$0xff] %v3574
  %3620 = vst [vmem:[%s3595] ss:$9 sm:$0xff] %v3575
  %v3621 = vld [vmem:[#allocation1] sm:$0xff]
  %3625 = vadd.xlane.f32.xlu0 %v3609
  %v3626 = vpop.xlane.xlu0 %3625
  %3627 = vadd.xlane.f32.xlu0 %v3618
  %v3628 = vpop.xlane.xlu0 %3627
  %v3629 = vsel %vm111, %v3621, 0.0
  %3630 = vadd.xlane.f32.xlu0 %v3629
  %v3631 = vpop.xlane.xlu0 %3630
  %v3632 = vmul.f32 %v3626, %v1287
  %v3633 = vmul.f32 %v3628, %v1287
  %v3634 = vmul.f32 %v3631, %v1287
  %v3638 = vperm.slane %v3632, 0
  %v3639 = vperm.slane %v3632, 1
  %v3640 = vperm.slane %v3632, 2
  %v3641 = vperm.slane %v3632, 3
  %v3642 = vperm.slane %v3632, 4
  %v3643 = vperm.slane %v3632, 5
  %v3644 = vperm.slane %v3632, 6
  %v3645 = vperm.slane %v3632, 7
  %v3646 = vperm.slane %v3633, 0
  %v3647 = vperm.slane %v3633, 1
  %v3648 = vperm.slane %v3633, 2
  %v3649 = vperm.slane %v3633, 3
  %v3650 = vperm.slane %v3633, 4
  %v3651 = vperm.slane %v3633, 5
  %v3652 = vperm.slane %v3633, 6
  %v3653 = vperm.slane %v3633, 7
  %v3654 = vperm.slane %v3634, 0
  %v3655 = vperm.slane %v3634, 1
  %v3674 = vsub.f32 %v3558, %v3638
  %v3675 = vsub.f32 %v3559, %v3639
  %v3676 = vsub.f32 %v3560, %v3640
  %v3677 = vsub.f32 %v3561, %v3641
  %v3678 = vsub.f32 %v3562, %v3642
  %v3679 = vsub.f32 %v3563, %v3643
  %v3680 = vsub.f32 %v3564, %v3644
  %v3681 = vsub.f32 %v3565, %v3645
  %v3682 = vsub.f32 %v3566, %v3646
  %v3683 = vsub.f32 %v3567, %v3647
  %v3684 = vsub.f32 %v3568, %v3648
  %v3685 = vsub.f32 %v3569, %v3649
  %v3686 = vsub.f32 %v3570, %v3650
  %v3687 = vsub.f32 %v3571, %v3651
  %v3688 = vsub.f32 %v3572, %v3652
  %v3689 = vsub.f32 %v3573, %v3653
  %v3690 = vsub.f32 %v3574, %v3654
  %v3691 = vsub.f32 %v3575, %v3655
  %v3692 = vmul.f32 %v3674, %v3674
  %v3693 = vmul.f32 %v3675, %v3675
  %v3694 = vmul.f32 %v3676, %v3676
  %v3695 = vmul.f32 %v3677, %v3677
  %v3696 = vmul.f32 %v3678, %v3678
  %v3697 = vmul.f32 %v3679, %v3679
  %v3698 = vmul.f32 %v3680, %v3680
  %v3699 = vmul.f32 %v3681, %v3681
  %v3700 = vmul.f32 %v3682, %v3682
  %v3701 = vmul.f32 %v3683, %v3683
  %v3702 = vmul.f32 %v3684, %v3684
  %v3703 = vmul.f32 %v3685, %v3685
  %v3704 = vmul.f32 %v3686, %v3686
  %v3705 = vmul.f32 %v3687, %v3687
  %v3706 = vmul.f32 %v3688, %v3688
  %v3707 = vmul.f32 %v3689, %v3689
  %v3708 = vmul.f32 %v3690, %v3690
  %v3709 = vmul.f32 %v3691, %v3691
  %3728 = vst [vmem:[#allocation1] ss:$9 sm:$0xff] %v3692
  %s3729 = scalar_lea.vmem [#allocation1], 1
  %3730 = vst [vmem:[%s3729] ss:$9 sm:$0xff] %v3693
  %s3731 = scalar_lea.vmem [#allocation1], 2
  %3732 = vst [vmem:[%s3731] ss:$9 sm:$0xff] %v3694
  %s3733 = scalar_lea.vmem [#allocation1], 3
  %3734 = vst [vmem:[%s3733] ss:$9 sm:$0xff] %v3695
  %s3735 = scalar_lea.vmem [#allocation1], 4
  %3736 = vst [vmem:[%s3735] ss:$9 sm:$0xff] %v3696
  %s3737 = scalar_lea.vmem [#allocation1], 5
  %3738 = vst [vmem:[%s3737] ss:$9 sm:$0xff] %v3697
  %s3739 = scalar_lea.vmem [#allocation1], 6
  %3740 = vst [vmem:[%s3739] ss:$9 sm:$0xff] %v3698
  %s3741 = scalar_lea.vmem [#allocation1], 7
  %3742 = vst [vmem:[%s3741] ss:$9 sm:$0xff] %v3699
  %v3743 = vld [vmem:[#allocation1] sm:$0xff]
  %3744 = vst [vmem:[#allocation1] ss:$9 sm:$0xff] %v3700
  %3745 = vst [vmem:[%s3729] ss:$9 sm:$0xff] %v3701
  %3746 = vst [vmem:[%s3731] ss:$9 sm:$0xff] %v3702
  %3747 = vst [vmem:[%s3733] ss:$9 sm:$0xff] %v3703
  %3748 = vst [vmem:[%s3735] ss:$9 sm:$0xff] %v3704
  %3749 = vst [vmem:[%s3737] ss:$9 sm:$0xff] %v3705
  %3750 = vst [vmem:[%s3739] ss:$9 sm:$0xff] %v3706
  %3751 = vst [vmem:[%s3741] ss:$9 sm:$0xff] %v3707
  %v3752 = vld [vmem:[#allocation1] sm:$0xff]
  %3753 = vst [vmem:[#allocation1] ss:$9 sm:$0xff] %v3708
  %3754 = vst [vmem:[%s3729] ss:$9 sm:$0xff] %v3709
  %v3755 = vld [vmem:[#allocation1] sm:$0xff]
  %3759 = vadd.xlane.f32.xlu0 %v3743
  %v3760 = vpop.xlane.xlu0 %3759
  %3761 = vadd.xlane.f32.xlu0 %v3752
  %v3762 = vpop.xlane.xlu0 %3761
  %v3763 = vsel %vm111, %v3755, 0.0
  %3764 = vadd.xlane.f32.xlu0 %v3763
  %v3765 = vpop.xlane.xlu0 %3764
  %v3766 = vmul.f32 %v3760, %v1287
  %v3767 = vmul.f32 %v3762, %v1287
  %v3768 = vmul.f32 %v3765, %v1287
  %v3769 = vadd.f32 %v3766, 1e-05
  %v3770 = vadd.f32 %v3767, 1e-05
  %v3771 = vadd.f32 %v3768, 1e-05
  %v3772 = vrsqrt.pop %v3769
  %v3773 = vmul.f32 %v3772, %v3769
  %v3774 = vmul.f32 %v3773, %v3772
  %v3775 = vmul.f32 0.5, %v3774
  %v3776 = vsub.f32 1.5, %v3775
  %v3777 = vmul.f32 %v3772, %v3776
  %v3778 = vmul.f32 %v3769, %v3777
  %vm3779 = vcmp.eq.f32.partialorder %v3769, inf
  %v3780 = vsel %vm3779, %v3769, %v3778
  %vm3781 = vcmp.eq.f32.partialorder %v3769, 0.0
  %v3782 = vand.u32 %v3769, 2147483648
  %v3783 = vsel %vm3781, %v3782, %v3780
  %v3784 = vrsqrt.pop %v3770
  %v3785 = vmul.f32 %v3784, %v3770
  %v3786 = vmul.f32 %v3785, %v3784
  %v3787 = vmul.f32 0.5, %v3786
  %v3788 = vsub.f32 1.5, %v3787
  %v3789 = vmul.f32 %v3784, %v3788
  %v3790 = vmul.f32 %v3770, %v3789
  %vm3791 = vcmp.eq.f32.partialorder %v3770, inf
  %v3792 = vsel %vm3791, %v3770, %v3790
  %vm3793 = vcmp.eq.f32.partialorder %v3770, 0.0
  %v3794 = vand.u32 %v3770, 2147483648
  %v3795 = vsel %vm3793, %v3794, %v3792
  %v3796 = vrsqrt.pop %v3771
  %v3797 = vmul.f32 %v3796, %v3771
  %v3798 = vmul.f32 %v3797, %v3796
  %v3799 = vmul.f32 0.5, %v3798
  %v3800 = vsub.f32 1.5, %v3799
  %v3801 = vmul.f32 %v3796, %v3800
  %v3802 = vmul.f32 %v3771, %v3801
  %vm3803 = vcmp.eq.f32.partialorder %v3771, inf
  %v3804 = vsel %vm3803, %v3771, %v3802
  %vm3805 = vcmp.eq.f32.partialorder %v3771, 0.0
  %v3806 = vand.u32 %v3771, 2147483648
  %v3807 = vsel %vm3805, %v3806, %v3804
  %v3811 = vperm.slane %v3783, 0
  %v3812 = vperm.slane %v3783, 1
  %v3813 = vperm.slane %v3783, 2
  %v3814 = vperm.slane %v3783, 3
  %v3815 = vperm.slane %v3783, 4
  %v3816 = vperm.slane %v3783, 5
  %v3817 = vperm.slane %v3783, 6
  %v3818 = vperm.slane %v3783, 7
  %v3819 = vperm.slane %v3795, 0
  %v3820 = vperm.slane %v3795, 1
  %v3821 = vperm.slane %v3795, 2
  %v3822 = vperm.slane %v3795, 3
  %v3823 = vperm.slane %v3795, 4
  %v3824 = vperm.slane %v3795, 5
  %v3825 = vperm.slane %v3795, 6
  %v3826 = vperm.slane %v3795, 7
  %v3827 = vperm.slane %v3807, 0
  %v3828 = vperm.slane %v3807, 1
  %v3847 = vrcp.pop %v3811
  %v3848 = vmul.f32 %v3811, %v3847
  %v3849 = vsub.f32 1.0, %v3848
  %v3850 = vmul.f32 %v3847, %v3849
  %v3851 = vadd.f32 %v3847, %v3850
  %vm3852 = vweird.f32 %v3811
  %vm3853 = vweird.f32 %v3847
  %vm3854 = vmor %vm3852, %vm3853
  %v3855 = vsel %vm3854, %v3847, %v3851
  %v3856 = vand.u32 2147483647, %v3811
  %vm3857 = vcmp.eq.f32.partialorder %v3856, 8.507059e+37
  %v3858 = vand.u32 %v3811, 2147483648
  %v3859 = vor.u32 1.1754944e-38, %v3858
  %v3860 = vsel %vm3857, %v3859, %v3855
  %v3861 = vmul.f32 %v3674, %v3860
  %v3862 = vrcp.pop %v3812
  %v3863 = vmul.f32 %v3812, %v3862
  %v3864 = vsub.f32 1.0, %v3863
  %v3865 = vmul.f32 %v3862, %v3864
  %v3866 = vadd.f32 %v3862, %v3865
  %vm3867 = vweird.f32 %v3812
  %vm3868 = vweird.f32 %v3862
  %vm3869 = vmor %vm3867, %vm3868
  %v3870 = vsel %vm3869, %v3862, %v3866
  %v3871 = vand.u32 2147483647, %v3812
  %vm3872 = vcmp.eq.f32.partialorder %v3871, 8.507059e+37
  %v3873 = vand.u32 %v3812, 2147483648
  %v3874 = vor.u32 1.1754944e-38, %v3873
  %v3875 = vsel %vm3872, %v3874, %v3870
  %v3876 = vmul.f32 %v3675, %v3875
  %v3877 = vrcp.pop %v3813
  %v3878 = vmul.f32 %v3813, %v3877
  %v3879 = vsub.f32 1.0, %v3878
  %v3880 = vmul.f32 %v3877, %v3879
  %v3881 = vadd.f32 %v3877, %v3880
  %vm3882 = vweird.f32 %v3813
  %vm3883 = vweird.f32 %v3877
  %vm3884 = vmor %vm3882, %vm3883
  %v3885 = vsel %vm3884, %v3877, %v3881
  %v3886 = vand.u32 2147483647, %v3813
  %vm3887 = vcmp.eq.f32.partialorder %v3886, 8.507059e+37
  %v3888 = vand.u32 %v3813, 2147483648
  %v3889 = vor.u32 1.1754944e-38, %v3888
  %v3890 = vsel %vm3887, %v3889, %v3885
  %v3891 = vmul.f32 %v3676, %v3890
  %v3892 = vrcp.pop %v3814
  %v3893 = vmul.f32 %v3814, %v3892
  %v3894 = vsub.f32 1.0, %v3893
  %v3895 = vmul.f32 %v3892, %v3894
  %v3896 = vadd.f32 %v3892, %v3895
  %vm3897 = vweird.f32 %v3814
  %vm3898 = vweird.f32 %v3892
  %vm3899 = vmor %vm3897, %vm3898
  %v3900 = vsel %vm3899, %v3892, %v3896
  %v3901 = vand.u32 2147483647, %v3814
  %vm3902 = vcmp.eq.f32.partialorder %v3901, 8.507059e+37
  %v3903 = vand.u32 %v3814, 2147483648
  %v3904 = vor.u32 1.1754944e-38, %v3903
  %v3905 = vsel %vm3902, %v3904, %v3900
  %v3906 = vmul.f32 %v3677, %v3905
  %v3907 = vrcp.pop %v3815
  %v3908 = vmul.f32 %v3815, %v3907
  %v3909 = vsub.f32 1.0, %v3908
  %v3910 = vmul.f32 %v3907, %v3909
  %v3911 = vadd.f32 %v3907, %v3910
  %vm3912 = vweird.f32 %v3815
  %vm3913 = vweird.f32 %v3907
  %vm3914 = vmor %vm3912, %vm3913
  %v3915 = vsel %vm3914, %v3907, %v3911
  %v3916 = vand.u32 2147483647, %v3815
  %vm3917 = vcmp.eq.f32.partialorder %v3916, 8.507059e+37
  %v3918 = vand.u32 %v3815, 2147483648
  %v3919 = vor.u32 1.1754944e-38, %v3918
  %v3920 = vsel %vm3917, %v3919, %v3915
  %v3921 = vmul.f32 %v3678, %v3920
  %v3922 = vrcp.pop %v3816
  %v3923 = vmul.f32 %v3816, %v3922
  %v3924 = vsub.f32 1.0, %v3923
  %v3925 = vmul.f32 %v3922, %v3924
  %v3926 = vadd.f32 %v3922, %v3925
  %vm3927 = vweird.f32 %v3816
  %vm3928 = vweird.f32 %v3922
  %vm3929 = vmor %vm3927, %vm3928
  %v3930 = vsel %vm3929, %v3922, %v3926
  %v3931 = vand.u32 2147483647, %v3816
  %vm3932 = vcmp.eq.f32.partialorder %v3931, 8.507059e+37
  %v3933 = vand.u32 %v3816, 2147483648
  %v3934 = vor.u32 1.1754944e-38, %v3933
  %v3935 = vsel %vm3932, %v3934, %v3930
  %v3936 = vmul.f32 %v3679, %v3935
  %v3937 = vrcp.pop %v3817
  %v3938 = vmul.f32 %v3817, %v3937
  %v3939 = vsub.f32 1.0, %v3938
  %v3940 = vmul.f32 %v3937, %v3939
  %v3941 = vadd.f32 %v3937, %v3940
  %vm3942 = vweird.f32 %v3817
  %vm3943 = vweird.f32 %v3937
  %vm3944 = vmor %vm3942, %vm3943
  %v3945 = vsel %vm3944, %v3937, %v3941
  %v3946 = vand.u32 2147483647, %v3817
  %vm3947 = vcmp.eq.f32.partialorder %v3946, 8.507059e+37
  %v3948 = vand.u32 %v3817, 2147483648
  %v3949 = vor.u32 1.1754944e-38, %v3948
  %v3950 = vsel %vm3947, %v3949, %v3945
  %v3951 = vmul.f32 %v3680, %v3950
  %v3952 = vrcp.pop %v3818
  %v3953 = vmul.f32 %v3818, %v3952
  %v3954 = vsub.f32 1.0, %v3953
  %v3955 = vmul.f32 %v3952, %v3954
  %v3956 = vadd.f32 %v3952, %v3955
  %vm3957 = vweird.f32 %v3818
  %vm3958 = vweird.f32 %v3952
  %vm3959 = vmor %vm3957, %vm3958
  %v3960 = vsel %vm3959, %v3952, %v3956
  %v3961 = vand.u32 2147483647, %v3818
  %vm3962 = vcmp.eq.f32.partialorder %v3961, 8.507059e+37
  %v3963 = vand.u32 %v3818, 2147483648
  %v3964 = vor.u32 1.1754944e-38, %v3963
  %v3965 = vsel %vm3962, %v3964, %v3960
  %v3966 = vmul.f32 %v3681, %v3965
  %v3967 = vrcp.pop %v3819
  %v3968 = vmul.f32 %v3819, %v3967
  %v3969 = vsub.f32 1.0, %v3968
  %v3970 = vmul.f32 %v3967, %v3969
  %v3971 = vadd.f32 %v3967, %v3970
  %vm3972 = vweird.f32 %v3819
  %vm3973 = vweird.f32 %v3967
  %vm3974 = vmor %vm3972, %vm3973
  %v3975 = vsel %vm3974, %v3967, %v3971
  %v3976 = vand.u32 2147483647, %v3819
  %vm3977 = vcmp.eq.f32.partialorder %v3976, 8.507059e+37
  %v3978 = vand.u32 %v3819, 2147483648
  %v3979 = vor.u32 1.1754944e-38, %v3978
  %v3980 = vsel %vm3977, %v3979, %v3975
  %v3981 = vmul.f32 %v3682, %v3980
  %v3982 = vrcp.pop %v3820
  %v3983 = vmul.f32 %v3820, %v3982
  %v3984 = vsub.f32 1.0, %v3983
  %v3985 = vmul.f32 %v3982, %v3984
  %v3986 = vadd.f32 %v3982, %v3985
  %vm3987 = vweird.f32 %v3820
  %vm3988 = vweird.f32 %v3982
  %vm3989 = vmor %vm3987, %vm3988
  %v3990 = vsel %vm3989, %v3982, %v3986
  %v3991 = vand.u32 2147483647, %v3820
  %vm3992 = vcmp.eq.f32.partialorder %v3991, 8.507059e+37
  %v3993 = vand.u32 %v3820, 2147483648
  %v3994 = vor.u32 1.1754944e-38, %v3993
  %v3995 = vsel %vm3992, %v3994, %v3990
  %v3996 = vmul.f32 %v3683, %v3995
  %v3997 = vrcp.pop %v3821
  %v3998 = vmul.f32 %v3821, %v3997
  %v3999 = vsub.f32 1.0, %v3998
  %v4000 = vmul.f32 %v3997, %v3999
  %v4001 = vadd.f32 %v3997, %v4000
  %vm4002 = vweird.f32 %v3821
  %vm4003 = vweird.f32 %v3997
  %vm4004 = vmor %vm4002, %vm4003
  %v4005 = vsel %vm4004, %v3997, %v4001
  %v4006 = vand.u32 2147483647, %v3821
  %vm4007 = vcmp.eq.f32.partialorder %v4006, 8.507059e+37
  %v4008 = vand.u32 %v3821, 2147483648
  %v4009 = vor.u32 1.1754944e-38, %v4008
  %v4010 = vsel %vm4007, %v4009, %v4005
  %v4011 = vmul.f32 %v3684, %v4010
  %v4012 = vrcp.pop %v3822
  %v4013 = vmul.f32 %v3822, %v4012
  %v4014 = vsub.f32 1.0, %v4013
  %v4015 = vmul.f32 %v4012, %v4014
  %v4016 = vadd.f32 %v4012, %v4015
  %vm4017 = vweird.f32 %v3822
  %vm4018 = vweird.f32 %v4012
  %vm4019 = vmor %vm4017, %vm4018
  %v4020 = vsel %vm4019, %v4012, %v4016
  %v4021 = vand.u32 2147483647, %v3822
  %vm4022 = vcmp.eq.f32.partialorder %v4021, 8.507059e+37
  %v4023 = vand.u32 %v3822, 2147483648
  %v4024 = vor.u32 1.1754944e-38, %v4023
  %v4025 = vsel %vm4022, %v4024, %v4020
  %v4026 = vmul.f32 %v3685, %v4025
  %v4027 = vrcp.pop %v3823
  %v4028 = vmul.f32 %v3823, %v4027
  %v4029 = vsub.f32 1.0, %v4028
  %v4030 = vmul.f32 %v4027, %v4029
  %v4031 = vadd.f32 %v4027, %v4030
  %vm4032 = vweird.f32 %v3823
  %vm4033 = vweird.f32 %v4027
  %vm4034 = vmor %vm4032, %vm4033
  %v4035 = vsel %vm4034, %v4027, %v4031
  %v4036 = vand.u32 2147483647, %v3823
  %vm4037 = vcmp.eq.f32.partialorder %v4036, 8.507059e+37
  %v4038 = vand.u32 %v3823, 2147483648
  %v4039 = vor.u32 1.1754944e-38, %v4038
  %v4040 = vsel %vm4037, %v4039, %v4035
  %v4041 = vmul.f32 %v3686, %v4040
  %v4042 = vrcp.pop %v3824
  %v4043 = vmul.f32 %v3824, %v4042
  %v4044 = vsub.f32 1.0, %v4043
  %v4045 = vmul.f32 %v4042, %v4044
  %v4046 = vadd.f32 %v4042, %v4045
  %vm4047 = vweird.f32 %v3824
  %vm4048 = vweird.f32 %v4042
  %vm4049 = vmor %vm4047, %vm4048
  %v4050 = vsel %vm4049, %v4042, %v4046
  %v4051 = vand.u32 2147483647, %v3824
  %vm4052 = vcmp.eq.f32.partialorder %v4051, 8.507059e+37
  %v4053 = vand.u32 %v3824, 2147483648
  %v4054 = vor.u32 1.1754944e-38, %v4053
  %v4055 = vsel %vm4052, %v4054, %v4050
  %v4056 = vmul.f32 %v3687, %v4055
  %v4057 = vrcp.pop %v3825
  %v4058 = vmul.f32 %v3825, %v4057
  %v4059 = vsub.f32 1.0, %v4058
  %v4060 = vmul.f32 %v4057, %v4059
  %v4061 = vadd.f32 %v4057, %v4060
  %vm4062 = vweird.f32 %v3825
  %vm4063 = vweird.f32 %v4057
  %vm4064 = vmor %vm4062, %vm4063
  %v4065 = vsel %vm4064, %v4057, %v4061
  %v4066 = vand.u32 2147483647, %v3825
  %vm4067 = vcmp.eq.f32.partialorder %v4066, 8.507059e+37
  %v4068 = vand.u32 %v3825, 2147483648
  %v4069 = vor.u32 1.1754944e-38, %v4068
  %v4070 = vsel %vm4067, %v4069, %v4065
  %v4071 = vmul.f32 %v3688, %v4070
  %v4072 = vrcp.pop %v3826
  %v4073 = vmul.f32 %v3826, %v4072
  %v4074 = vsub.f32 1.0, %v4073
  %v4075 = vmul.f32 %v4072, %v4074
  %v4076 = vadd.f32 %v4072, %v4075
  %vm4077 = vweird.f32 %v3826
  %vm4078 = vweird.f32 %v4072
  %vm4079 = vmor %vm4077, %vm4078
  %v4080 = vsel %vm4079, %v4072, %v4076
  %v4081 = vand.u32 2147483647, %v3826
  %vm4082 = vcmp.eq.f32.partialorder %v4081, 8.507059e+37
  %v4083 = vand.u32 %v3826, 2147483648
  %v4084 = vor.u32 1.1754944e-38, %v4083
  %v4085 = vsel %vm4082, %v4084, %v4080
  %v4086 = vmul.f32 %v3689, %v4085
  %v4087 = vrcp.pop %v3827
  %v4088 = vmul.f32 %v3827, %v4087
  %v4089 = vsub.f32 1.0, %v4088
  %v4090 = vmul.f32 %v4087, %v4089
  %v4091 = vadd.f32 %v4087, %v4090
  %vm4092 = vweird.f32 %v3827
  %vm4093 = vweird.f32 %v4087
  %vm4094 = vmor %vm4092, %vm4093
  %v4095 = vsel %vm4094, %v4087, %v4091
  %v4096 = vand.u32 2147483647, %v3827
  %vm4097 = vcmp.eq.f32.partialorder %v4096, 8.507059e+37
  %v4098 = vand.u32 %v3827, 2147483648
  %v4099 = vor.u32 1.1754944e-38, %v4098
  %v4100 = vsel %vm4097, %v4099, %v4095
  %v4101 = vmul.f32 %v3690, %v4100
  %v4102 = vrcp.pop %v3828
  %v4103 = vmul.f32 %v3828, %v4102
  %v4104 = vsub.f32 1.0, %v4103
  %v4105 = vmul.f32 %v4102, %v4104
  %v4106 = vadd.f32 %v4102, %v4105
  %vm4107 = vweird.f32 %v3828
  %vm4108 = vweird.f32 %v4102
  %vm4109 = vmor %vm4107, %vm4108
  %v4110 = vsel %vm4109, %v4102, %v4106
  %v4111 = vand.u32 2147483647, %v3828
  %vm4112 = vcmp.eq.f32.partialorder %v4111, 8.507059e+37
  %v4113 = vand.u32 %v3828, 2147483648
  %v4114 = vor.u32 1.1754944e-38, %v4113
  %v4115 = vsel %vm4112, %v4114, %v4110
  %v4116 = vmul.f32 %v3691, %v4115
  %v4118 = vperm.slane %v1221, 0
  %v4120 = vrot.slane %v4118, 1
  %v4121 = vrot.slane %v4118, 2
  %v4122 = vrot.slane %v4118, 3
  %v4123 = vrot.slane %v4118, 4
  %v4124 = vrot.slane %v4118, 5
  %v4125 = vrot.slane %v4118, 6
  %v4126 = vrot.slane %v4118, 7
  %v4134 = vmul.f32 %v3861, %v4118
  %v4135 = vmul.f32 %v3876, %v4120
  %v4136 = vmul.f32 %v3891, %v4121
  %v4137 = vmul.f32 %v3906, %v4122
  %v4138 = vmul.f32 %v3921, %v4123
  %v4139 = vmul.f32 %v3936, %v4124
  %v4140 = vmul.f32 %v3951, %v4125
  %v4141 = vmul.f32 %v3966, %v4126
  %v4142 = vmul.f32 %v3981, %v4118
  %v4143 = vmul.f32 %v3996, %v4120
  %v4144 = vmul.f32 %v4011, %v4121
  %v4145 = vmul.f32 %v4026, %v4122
  %v4146 = vmul.f32 %v4041, %v4123
  %v4147 = vmul.f32 %v4056, %v4124
  %v4148 = vmul.f32 %v4071, %v4125
  %v4149 = vmul.f32 %v4086, %v4126
  %v4150 = vmul.f32 %v4101, %v4118
  %v4151 = vmul.f32 %v4116, %v4120
  %v4153 = vperm.slane %v1222, 0
  %v4155 = vrot.slane %v4153, 1
  %v4156 = vrot.slane %v4153, 2
  %v4157 = vrot.slane %v4153, 3
  %v4158 = vrot.slane %v4153, 4
  %v4159 = vrot.slane %v4153, 5
  %v4160 = vrot.slane %v4153, 6
  %v4161 = vrot.slane %v4153, 7
  %v4169 = vadd.f32 %v4134, %v4153
  %v4170 = vadd.f32 %v4135, %v4155
  %v4171 = vadd.f32 %v4136, %v4156
  %v4172 = vadd.f32 %v4137, %v4157
  %v4173 = vadd.f32 %v4138, %v4158
  %v4174 = vadd.f32 %v4139, %v4159
  %v4175 = vadd.f32 %v4140, %v4160
  %v4176 = vadd.f32 %v4141, %v4161
  %v4177 = vadd.f32 %v4142, %v4153
  %v4178 = vadd.f32 %v4143, %v4155
  %v4179 = vadd.f32 %v4144, %v4156
  %v4180 = vadd.f32 %v4145, %v4157
  %v4181 = vadd.f32 %v4146, %v4158
  %v4182 = vadd.f32 %v4147, %v4159
  %v4183 = vadd.f32 %v4148, %v4160
  %v4184 = vadd.f32 %v4149, %v4161
  %v4185 = vadd.f32 %v4150, %v4153
  %v4186 = vadd.f32 %v4151, %v4155
  %4205 = vst [vmem:[#allocation1] ss:$9 sm:$0xff] %v4169
  %s4206 = scalar_lea.vmem [#allocation1], 1
  %4207 = vst [vmem:[%s4206] ss:$9 sm:$0xff] %v4170
  %s4208 = scalar_lea.vmem [#allocation1], 2
  %4209 = vst [vmem:[%s4208] ss:$9 sm:$0xff] %v4171
  %s4210 = scalar_lea.vmem [#allocation1], 3
  %4211 = vst [vmem:[%s4210] ss:$9 sm:$0xff] %v4172
  %s4212 = scalar_lea.vmem [#allocation1], 4
  %4213 = vst [vmem:[%s4212] ss:$9 sm:$0xff] %v4173
  %s4214 = scalar_lea.vmem [#allocation1], 5
  %4215 = vst [vmem:[%s4214] ss:$9 sm:$0xff] %v4174
  %s4216 = scalar_lea.vmem [#allocation1], 6
  %4217 = vst [vmem:[%s4216] ss:$9 sm:$0xff] %v4175
  %s4218 = scalar_lea.vmem [#allocation1], 7
  %4219 = vst [vmem:[%s4218] ss:$9 sm:$0xff] %v4176
  %v4220 = vld [vmem:[#allocation1] sm:$0xff]
  %4221 = vst [vmem:[#allocation1] ss:$9 sm:$0xff] %v4177
  %4222 = vst [vmem:[%s4206] ss:$9 sm:$0xff] %v4178
  %4223 = vst [vmem:[%s4208] ss:$9 sm:$0xff] %v4179
  %4224 = vst [vmem:[%s4210] ss:$9 sm:$0xff] %v4180
  %4225 = vst [vmem:[%s4212] ss:$9 sm:$0xff] %v4181
  %4226 = vst [vmem:[%s4214] ss:$9 sm:$0xff] %v4182
  %4227 = vst [vmem:[%s4216] ss:$9 sm:$0xff] %v4183
  %4228 = vst [vmem:[%s4218] ss:$9 sm:$0xff] %v4184
  %v4229 = vld [vmem:[#allocation1] sm:$0xff]
  %4230 = vst [vmem:[#allocation1] ss:$9 sm:$0xff] %v4185
  %4231 = vst [vmem:[%s4206] ss:$9 sm:$0xff] %v4186
  %v4232 = vld [vmem:[#allocation1] sm:$0xff]
  %v4236 = vpack.c.bf16 %v4229, %v4220
  %v4237 = vpack.c.bf16 %v4232, %v4232
  %v4238 = vld [vmem:[%s6] sm:$0xff]
  %v4239 = vld [vmem:[%s6 + $0x8] sm:$0xff]
  %v4240 = vld [vmem:[%s6 + $0x10] sm:$0xff]
  %v4241 = vld [vmem:[%s6 + $0x18] sm:$0xff]
  %v4242 = vld [vmem:[%s6 + $0x20] sm:$0xff]
  %v4243 = vld [vmem:[%s6 + $0x28] sm:$0xff]
  %v4244 = vld [vmem:[%s6 + $0x30] sm:$0xff]
  %v4245 = vld [vmem:[%s6 + $0x38] sm:$0xff]
  %v4246 = vld [vmem:[%s6 + $0x40] sm:$0xff]
  %v4247 = vld [vmem:[%s6 + $0x48] sm:$0xff]
  %v4248 = vld [vmem:[%s6 + $0x50] sm:$0xff]
  %v4249 = vld [vmem:[%s6 + $0x58] sm:$0xff]
  %v4250 = vld [vmem:[%s6 + $0x60] sm:$0xff]
  %v4251 = vld [vmem:[%s6 + $0x68] sm:$0xff]
  %v4252 = vld [vmem:[%s6 + $0x70] sm:$0xff]
  %v4253 = vld [vmem:[%s6 + $0x78] sm:$0xff]
  %v4254 = vld [vmem:[%s6 + $0x80] sm:$0xff]
  %v4255 = vld [vmem:[%s6 + $0x88] sm:$0xff]
  %v4256 = vld [vmem:[%s6 + $0x90] sm:$0xff]
  %v4257 = vld [vmem:[%s6 + $0x98] sm:$0xff]
  %v4258 = vld [vmem:[%s6 + $0xa0] sm:$0xff]
  %v4259 = vld [vmem:[%s6 + $0xa8] sm:$0xff]
  %v4260 = vld [vmem:[%s6 + $0xb0] sm:$0xff]
  %v4261 = vld [vmem:[%s6 + $0xb8] sm:$0xff]
  %v4262 = vld [vmem:[%s6 + $0xc0] sm:$0xff]
  %v4263 = vld [vmem:[%s6 + $0xc8] sm:$0xff]
  %v4264 = vld [vmem:[%s6 + $0xd0] sm:$0xff]
  %v4265 = vld [vmem:[%s6 + $0xd8] sm:$0xff]
  %v4266 = vld [vmem:[%s6 + $0xe0] sm:$0xff]
  %v4267 = vld [vmem:[%s6 + $0xe8] sm:$0xff]
  %v4268 = vld [vmem:[%s6 + $0xf0] sm:$0xff]
  %v4269 = vld [vmem:[%s6 + $0xf8] sm:$0xff]
  %v4271 = vperm.slane %v1223, 0
  %v4272 = vperm.slane %v1223, 1
  %v4273 = vperm.slane %v1223, 2
  %v4274 = vperm.slane %v1223, 3
  %v4311 = vunpack.c.l.b16 %v4238
  %v4312 = vunpack.c.h.b16 %v4238
  %v4313 = vunpack.c.l.b16 %v4239
  %v4314 = vunpack.c.h.b16 %v4239
  %v4315 = vunpack.c.l.b16 %v4240
  %v4316 = vunpack.c.h.b16 %v4240
  %v4317 = vunpack.c.l.b16 %v4241
  %v4318 = vunpack.c.h.b16 %v4241
  %v4319 = vunpack.c.l.b16 %v4242
  %v4320 = vunpack.c.h.b16 %v4242
  %v4321 = vunpack.c.l.b16 %v4243
  %v4322 = vunpack.c.h.b16 %v4243
  %v4323 = vunpack.c.l.b16 %v4244
  %v4324 = vunpack.c.h.b16 %v4244
  %v4325 = vunpack.c.l.b16 %v4245
  %v4326 = vunpack.c.h.b16 %v4245
  %v4327 = vunpack.c.l.b16 %v4246
  %v4328 = vunpack.c.h.b16 %v4246
  %v4329 = vunpack.c.l.b16 %v4247
  %v4330 = vunpack.c.h.b16 %v4247
  %v4331 = vunpack.c.l.b16 %v4248
  %v4332 = vunpack.c.h.b16 %v4248
  %v4333 = vunpack.c.l.b16 %v4249
  %v4334 = vunpack.c.h.b16 %v4249
  %v4335 = vunpack.c.l.b16 %v4250
  %v4336 = vunpack.c.h.b16 %v4250
  %v4337 = vunpack.c.l.b16 %v4251
  %v4338 = vunpack.c.h.b16 %v4251
  %v4339 = vunpack.c.l.b16 %v4252
  %v4340 = vunpack.c.h.b16 %v4252
  %v4341 = vunpack.c.l.b16 %v4253
  %v4342 = vunpack.c.h.b16 %v4253
  %v4343 = vunpack.c.l.b16 %v4254
  %v4344 = vunpack.c.h.b16 %v4254
  %v4345 = vunpack.c.l.b16 %v4255
  %v4346 = vunpack.c.h.b16 %v4255
  %v4347 = vunpack.c.l.b16 %v4256
  %v4348 = vunpack.c.h.b16 %v4256
  %v4349 = vunpack.c.l.b16 %v4257
  %v4350 = vunpack.c.h.b16 %v4257
  %v4351 = vunpack.c.l.b16 %v4258
  %v4352 = vunpack.c.h.b16 %v4258
  %v4353 = vunpack.c.l.b16 %v4259
  %v4354 = vunpack.c.h.b16 %v4259
  %v4355 = vunpack.c.l.b16 %v4260
  %v4356 = vunpack.c.h.b16 %v4260
  %v4357 = vunpack.c.l.b16 %v4261
  %v4358 = vunpack.c.h.b16 %v4261
  %v4359 = vunpack.c.l.b16 %v4262
  %v4360 = vunpack.c.h.b16 %v4262
  %v4361 = vunpack.c.l.b16 %v4263
  %v4362 = vunpack.c.h.b16 %v4263
  %v4363 = vunpack.c.l.b16 %v4264
  %v4364 = vunpack.c.h.b16 %v4264
  %v4365 = vunpack.c.l.b16 %v4265
  %v4366 = vunpack.c.h.b16 %v4265
  %v4367 = vunpack.c.l.b16 %v4266
  %v4368 = vunpack.c.h.b16 %v4266
  %v4369 = vunpack.c.l.b16 %v4267
  %v4370 = vunpack.c.h.b16 %v4267
  %v4371 = vunpack.c.l.b16 %v4268
  %v4372 = vunpack.c.h.b16 %v4268
  %v4373 = vunpack.c.l.b16 %v4269
  %v4374 = vunpack.c.h.b16 %v4269
  %v4375 = vpack.c.b16 %v4315, %v4311
  %v4376 = vpack.c.b16 %v4316, %v4312
  %v4377 = vpack.c.b16 %v4317, %v4313
  %v4378 = vpack.c.b16 %v4318, %v4314
  %v4379 = vpack.c.b16 %v4323, %v4319
  %v4380 = vpack.c.b16 %v4324, %v4320
  %v4381 = vpack.c.b16 %v4325, %v4321
  %v4382 = vpack.c.b16 %v4326, %v4322
  %v4383 = vpack.c.b16 %v4331, %v4327
  %v4384 = vpack.c.b16 %v4332, %v4328
  %v4385 = vpack.c.b16 %v4333, %v4329
  %v4386 = vpack.c.b16 %v4334, %v4330
  %v4387 = vpack.c.b16 %v4339, %v4335
  %v4388 = vpack.c.b16 %v4340, %v4336
  %v4389 = vpack.c.b16 %v4341, %v4337
  %v4390 = vpack.c.b16 %v4342, %v4338
  %v4391 = vpack.c.b16 %v4347, %v4343
  %v4392 = vpack.c.b16 %v4348, %v4344
  %v4393 = vpack.c.b16 %v4349, %v4345
  %v4394 = vpack.c.b16 %v4350, %v4346
  %v4395 = vpack.c.b16 %v4355, %v4351
  %v4396 = vpack.c.b16 %v4356, %v4352
  %v4397 = vpack.c.b16 %v4357, %v4353
  %v4398 = vpack.c.b16 %v4358, %v4354
  %v4399 = vpack.c.b16 %v4363, %v4359
  %v4400 = vpack.c.b16 %v4364, %v4360
  %v4401 = vpack.c.b16 %v4365, %v4361
  %v4402 = vpack.c.b16 %v4366, %v4362
  %v4403 = vpack.c.b16 %v4371, %v4367
  %v4404 = vpack.c.b16 %v4372, %v4368
  %v4405 = vpack.c.b16 %v4373, %v4369
  %v4406 = vpack.c.b16 %v4374, %v4370
  %4439 = vmatpush.bf16.msra.mxu0 %v4403
  %4440 = vmatpush.bf16.msra.mxu0 %v4399
  %4441 = vmatpush.bf16.msra.mxu0 %v4395
  %4442 = vmatpush.bf16.msra.mxu0 %v4391
  %4443 = vmatpush.bf16.msra.mxu0 %v4387
  %4444 = vmatpush.bf16.msra.mxu0 %v4383
  %4445 = vmatpush.bf16.msra.mxu0 %v4379
  %4446 = vmatpush.bf16.msra.mxu0 %v4375
  %4447 = vmatmul.bf16.gmra.mxu0 %v4236
  %v4448 = vpop.f32.mrf.mxu0
  %v4449 = vadd.f32 %v4271, %v4448
  %v4450 = vpop.f32.mrf.mxu0
  %v4451 = vadd.f32 %v4271, %v4450
  %4452 = vmatmul.bf16.gmra.mxu0 %v4237
  %v4453 = vpop.f32.mrf.mxu0
  %v4454 = vadd.f32 %v4271, %v4453
  %v4455 = vpop.f32.mrf.mxu0
  %4456 = vdwg.mxu0
  %4457 = vmatpush.bf16.msra.mxu0 %v4404
  %4458 = vmatpush.bf16.msra.mxu0 %v4400
  %4459 = vmatpush.bf16.msra.mxu0 %v4396
  %4460 = vmatpush.bf16.msra.mxu0 %v4392
  %4461 = vmatpush.bf16.msra.mxu0 %v4388
  %4462 = vmatpush.bf16.msra.mxu0 %v4384
  %4463 = vmatpush.bf16.msra.mxu0 %v4380
  %4464 = vmatpush.bf16.msra.mxu0 %v4376
  %4465 = vmatmul.bf16.gmra.mxu0 %v4236
  %v4466 = vpop.f32.mrf.mxu0
  %v4467 = vadd.f32 %v4272, %v4466
  %v4468 = vpop.f32.mrf.mxu0
  %v4469 = vadd.f32 %v4272, %v4468
  %4470 = vmatmul.bf16.gmra.mxu0 %v4237
  %v4471 = vpop.f32.mrf.mxu0
  %v4472 = vadd.f32 %v4272, %v4471
  %v4473 = vpop.f32.mrf.mxu0
  %4474 = vdwg.mxu0
  %4475 = vmatpush.bf16.msra.mxu0 %v4405
  %4476 = vmatpush.bf16.msra.mxu0 %v4401
  %4477 = vmatpush.bf16.msra.mxu0 %v4397
  %4478 = vmatpush.bf16.msra.mxu0 %v4393
  %4479 = vmatpush.bf16.msra.mxu0 %v4389
  %4480 = vmatpush.bf16.msra.mxu0 %v4385
  %4481 = vmatpush.bf16.msra.mxu0 %v4381
  %4482 = vmatpush.bf16.msra.mxu0 %v4377
  %4483 = vmatmul.bf16.gmra.mxu0 %v4236
  %v4484 = vpop.f32.mrf.mxu0
  %v4485 = vadd.f32 %v4273, %v4484
  %v4486 = vpop.f32.mrf.mxu0
  %v4487 = vadd.f32 %v4273, %v4486
  %4488 = vmatmul.bf16.gmra.mxu0 %v4237
  %v4489 = vpop.f32.mrf.mxu0
  %v4490 = vadd.f32 %v4273, %v4489
  %v4491 = vpop.f32.mrf.mxu0
  %4492 = vdwg.mxu0
  %4493 = vmatpush.bf16.msra.mxu0 %v4406
  %4494 = vmatpush.bf16.msra.mxu0 %v4402
  %4495 = vmatpush.bf16.msra.mxu0 %v4398
  %4496 = vmatpush.bf16.msra.mxu0 %v4394
  %4497 = vmatpush.bf16.msra.mxu0 %v4390
  %4498 = vmatpush.bf16.msra.mxu0 %v4386
  %4499 = vmatpush.bf16.msra.mxu0 %v4382
  %4500 = vmatpush.bf16.msra.mxu0 %v4378
  %4501 = vmatmul.bf16.gmra.mxu0 %v4236
  %v4502 = vpop.f32.mrf.mxu0
  %v4503 = vadd.f32 %v4274, %v4502
  %v4504 = vpop.f32.mrf.mxu0
  %v4505 = vadd.f32 %v4274, %v4504
  %4506 = vmatmul.bf16.gmra.mxu0 %v4237
  %v4507 = vpop.f32.mrf.mxu0
  %v4508 = vadd.f32 %v4274, %v4507
  %v4509 = vpop.f32.mrf.mxu0
  %4510 = vdwg.mxu0
  %v4511 = vmul.f32 %v4449, 0.5
  %v4512 = vmul.f32 %v4467, 0.5
  %v4513 = vmul.f32 %v4485, 0.5
  %v4514 = vmul.f32 %v4503, 0.5
  %v4515 = vmul.f32 %v4451, 0.5
  %v4516 = vmul.f32 %v4469, 0.5
  %v4517 = vmul.f32 %v4487, 0.5
  %v4518 = vmul.f32 %v4505, 0.5
  %v4519 = vmul.f32 %v4454, 0.5
  %v4520 = vmul.f32 %v4472, 0.5
  %v4521 = vmul.f32 %v4490, 0.5
  %v4522 = vmul.f32 %v4508, 0.5
  %v4523 = vmul.f32 %v4449, 0.70710677
  %v4524 = vmul.f32 %v4467, 0.70710677
  %v4525 = vmul.f32 %v4485, 0.70710677
  %v4526 = vmul.f32 %v4503, 0.70710677
  %v4527 = vmul.f32 %v4451, 0.70710677
  %v4528 = vmul.f32 %v4469, 0.70710677
  %v4529 = vmul.f32 %v4487, 0.70710677
  %v4530 = vmul.f32 %v4505, 0.70710677
  %v4531 = vmul.f32 %v4454, 0.70710677
  %v4532 = vmul.f32 %v4472, 0.70710677
  %v4533 = vmul.f32 %v4490, 0.70710677
  %v4534 = vmul.f32 %v4508, 0.70710677
  %vm4535 = vcmp.ge.f32.partialorder %v4523, 0.0
  %vm4536 = vcmp.ge.f32.partialorder %v4524, 0.0
  %vm4537 = vcmp.ge.f32.partialorder %v4525, 0.0
  %vm4538 = vcmp.ge.f32.partialorder %v4526, 0.0
  %vm4539 = vcmp.ge.f32.partialorder %v4527, 0.0
  %vm4540 = vcmp.ge.f32.partialorder %v4528, 0.0
  %vm4541 = vcmp.ge.f32.partialorder %v4529, 0.0
  %vm4542 = vcmp.ge.f32.partialorder %v4530, 0.0
  %vm4543 = vcmp.ge.f32.partialorder %v4531, 0.0
  %vm4544 = vcmp.ge.f32.partialorder %v4532, 0.0
  %vm4545 = vcmp.ge.f32.partialorder %v4533, 0.0
  %vm4546 = vcmp.ge.f32.partialorder %v4534, 0.0
  %v4547 = vsel %vm4535, 1.0, -1.0
  %v4548 = vsel %vm4536, 1.0, -1.0
  %v4549 = vsel %vm4537, 1.0, -1.0
  %v4550 = vsel %vm4538, 1.0, -1.0
  %v4551 = vsel %vm4539, 1.0, -1.0
  %v4552 = vsel %vm4540, 1.0, -1.0
  %v4553 = vsel %vm4541, 1.0, -1.0
  %v4554 = vsel %vm4542, 1.0, -1.0
  %v4555 = vsel %vm4543, 1.0, -1.0
  %v4556 = vsel %vm4544, 1.0, -1.0
  %v4557 = vsel %vm4545, 1.0, -1.0
  %v4558 = vsel %vm4546, 1.0, -1.0
  %v4559 = vand.u32 2147483647, %v4523
  %v4560 = vand.u32 2147483647, %v4524
  %v4561 = vand.u32 2147483647, %v4525
  %v4562 = vand.u32 2147483647, %v4526
  %v4563 = vand.u32 2147483647, %v4527
  %v4564 = vand.u32 2147483647, %v4528
  %v4565 = vand.u32 2147483647, %v4529
  %v4566 = vand.u32 2147483647, %v4530
  %v4567 = vand.u32 2147483647, %v4531
  %v4568 = vand.u32 2147483647, %v4532
  %v4569 = vand.u32 2147483647, %v4533
  %v4570 = vand.u32 2147483647, %v4534
  %v4571 = vmul.f32 %v4559, 0.3275911
  %v4572 = vmul.f32 %v4560, 0.3275911
  %v4573 = vmul.f32 %v4561, 0.3275911
  %v4574 = vmul.f32 %v4562, 0.3275911
  %v4575 = vmul.f32 %v4563, 0.3275911
  %v4576 = vmul.f32 %v4564, 0.3275911
  %v4577 = vmul.f32 %v4565, 0.3275911
  %v4578 = vmul.f32 %v4566, 0.3275911
  %v4579 = vmul.f32 %v4567, 0.3275911
  %v4580 = vmul.f32 %v4568, 0.3275911
  %v4581 = vmul.f32 %v4569, 0.3275911
  %v4582 = vmul.f32 %v4570, 0.3275911
  %v4583 = vadd.f32 %v4571, 1.0
  %v4584 = vadd.f32 %v4572, 1.0
  %v4585 = vadd.f32 %v4573, 1.0
  %v4586 = vadd.f32 %v4574, 1.0
  %v4587 = vadd.f32 %v4575, 1.0
  %v4588 = vadd.f32 %v4576, 1.0
  %v4589 = vadd.f32 %v4577, 1.0
  %v4590 = vadd.f32 %v4578, 1.0
  %v4591 = vadd.f32 %v4579, 1.0
  %v4592 = vadd.f32 %v4580, 1.0
  %v4593 = vadd.f32 %v4581, 1.0
  %v4594 = vadd.f32 %v4582, 1.0
  %v4595 = vrcp.pop %v4583
  %v4596 = vmul.f32 %v4583, %v4595
  %v4597 = vsub.f32 1.0, %v4596
  %v4598 = vmul.f32 %v4595, %v4597
  %v4599 = vadd.f32 %v4595, %v4598
  %vm4600 = vweird.f32 %v4583
  %vm4601 = vweird.f32 %v4595
  %vm4602 = vmor %vm4600, %vm4601
  %v4603 = vsel %vm4602, %v4595, %v4599
  %v4604 = vand.u32 2147483647, %v4583
  %vm4605 = vcmp.eq.f32.partialorder %v4604, 8.507059e+37
  %v4606 = vand.u32 %v4583, 2147483648
  %v4607 = vor.u32 1.1754944e-38, %v4606
  %v4608 = vsel %vm4605, %v4607, %v4603
  %v4609 = vmul.f32 1.0, %v4608
  %v4610 = vrcp.pop %v4584
  %v4611 = vmul.f32 %v4584, %v4610
  %v4612 = vsub.f32 1.0, %v4611
  %v4613 = vmul.f32 %v4610, %v4612
  %v4614 = vadd.f32 %v4610, %v4613
  %vm4615 = vweird.f32 %v4584
  %vm4616 = vweird.f32 %v4610
  %vm4617 = vmor %vm4615, %vm4616
  %v4618 = vsel %vm4617, %v4610, %v4614
  %v4619 = vand.u32 2147483647, %v4584
  %vm4620 = vcmp.eq.f32.partialorder %v4619, 8.507059e+37
  %v4621 = vand.u32 %v4584, 2147483648
  %v4622 = vor.u32 1.1754944e-38, %v4621
  %v4623 = vsel %vm4620, %v4622, %v4618
  %v4624 = vmul.f32 1.0, %v4623
  %v4625 = vrcp.pop %v4585
  %v4626 = vmul.f32 %v4585, %v4625
  %v4627 = vsub.f32 1.0, %v4626
  %v4628 = vmul.f32 %v4625, %v4627
  %v4629 = vadd.f32 %v4625, %v4628
  %vm4630 = vweird.f32 %v4585
  %vm4631 = vweird.f32 %v4625
  %vm4632 = vmor %vm4630, %vm4631
  %v4633 = vsel %vm4632, %v4625, %v4629
  %v4634 = vand.u32 2147483647, %v4585
  %vm4635 = vcmp.eq.f32.partialorder %v4634, 8.507059e+37
  %v4636 = vand.u32 %v4585, 2147483648
  %v4637 = vor.u32 1.1754944e-38, %v4636
  %v4638 = vsel %vm4635, %v4637, %v4633
  %v4639 = vmul.f32 1.0, %v4638
  %v4640 = vrcp.pop %v4586
  %v4641 = vmul.f32 %v4586, %v4640
  %v4642 = vsub.f32 1.0, %v4641
  %v4643 = vmul.f32 %v4640, %v4642
  %v4644 = vadd.f32 %v4640, %v4643
  %vm4645 = vweird.f32 %v4586
  %vm4646 = vweird.f32 %v4640
  %vm4647 = vmor %vm4645, %vm4646
  %v4648 = vsel %vm4647, %v4640, %v4644
  %v4649 = vand.u32 2147483647, %v4586
  %vm4650 = vcmp.eq.f32.partialorder %v4649, 8.507059e+37
  %v4651 = vand.u32 %v4586, 2147483648
  %v4652 = vor.u32 1.1754944e-38, %v4651
  %v4653 = vsel %vm4650, %v4652, %v4648
  %v4654 = vmul.f32 1.0, %v4653
  %v4655 = vrcp.pop %v4587
  %v4656 = vmul.f32 %v4587, %v4655
  %v4657 = vsub.f32 1.0, %v4656
  %v4658 = vmul.f32 %v4655, %v4657
  %v4659 = vadd.f32 %v4655, %v4658
  %vm4660 = vweird.f32 %v4587
  %vm4661 = vweird.f32 %v4655
  %vm4662 = vmor %vm4660, %vm4661
  %v4663 = vsel %vm4662, %v4655, %v4659
  %v4664 = vand.u32 2147483647, %v4587
  %vm4665 = vcmp.eq.f32.partialorder %v4664, 8.507059e+37
  %v4666 = vand.u32 %v4587, 2147483648
  %v4667 = vor.u32 1.1754944e-38, %v4666
  %v4668 = vsel %vm4665, %v4667, %v4663
  %v4669 = vmul.f32 1.0, %v4668
  %v4670 = vrcp.pop %v4588
  %v4671 = vmul.f32 %v4588, %v4670
  %v4672 = vsub.f32 1.0, %v4671
  %v4673 = vmul.f32 %v4670, %v4672
  %v4674 = vadd.f32 %v4670, %v4673
  %vm4675 = vweird.f32 %v4588
  %vm4676 = vweird.f32 %v4670
  %vm4677 = vmor %vm4675, %vm4676
  %v4678 = vsel %vm4677, %v4670, %v4674
  %v4679 = vand.u32 2147483647, %v4588
  %vm4680 = vcmp.eq.f32.partialorder %v4679, 8.507059e+37
  %v4681 = vand.u32 %v4588, 2147483648
  %v4682 = vor.u32 1.1754944e-38, %v4681
  %v4683 = vsel %vm4680, %v4682, %v4678
  %v4684 = vmul.f32 1.0, %v4683
  %v4685 = vrcp.pop %v4589
  %v4686 = vmul.f32 %v4589, %v4685
  %v4687 = vsub.f32 1.0, %v4686
  %v4688 = vmul.f32 %v4685, %v4687
  %v4689 = vadd.f32 %v4685, %v4688
  %vm4690 = vweird.f32 %v4589
  %vm4691 = vweird.f32 %v4685
  %vm4692 = vmor %vm4690, %vm4691
  %v4693 = vsel %vm4692, %v4685, %v4689
  %v4694 = vand.u32 2147483647, %v4589
  %vm4695 = vcmp.eq.f32.partialorder %v4694, 8.507059e+37
  %v4696 = vand.u32 %v4589, 2147483648
  %v4697 = vor.u32 1.1754944e-38, %v4696
  %v4698 = vsel %vm4695, %v4697, %v4693
  %v4699 = vmul.f32 1.0, %v4698
  %v4700 = vrcp.pop %v4590
  %v4701 = vmul.f32 %v4590, %v4700
  %v4702 = vsub.f32 1.0, %v4701
  %v4703 = vmul.f32 %v4700, %v4702
  %v4704 = vadd.f32 %v4700, %v4703
  %vm4705 = vweird.f32 %v4590
  %vm4706 = vweird.f32 %v4700
  %vm4707 = vmor %vm4705, %vm4706
  %v4708 = vsel %vm4707, %v4700, %v4704
  %v4709 = vand.u32 2147483647, %v4590
  %vm4710 = vcmp.eq.f32.partialorder %v4709, 8.507059e+37
  %v4711 = vand.u32 %v4590, 2147483648
  %v4712 = vor.u32 1.1754944e-38, %v4711
  %v4713 = vsel %vm4710, %v4712, %v4708
  %v4714 = vmul.f32 1.0, %v4713
  %v4715 = vrcp.pop %v4591
  %v4716 = vmul.f32 %v4591, %v4715
  %v4717 = vsub.f32 1.0, %v4716
  %v4718 = vmul.f32 %v4715, %v4717
  %v4719 = vadd.f32 %v4715, %v4718
  %vm4720 = vweird.f32 %v4591
  %vm4721 = vweird.f32 %v4715
  %vm4722 = vmor %vm4720, %vm4721
  %v4723 = vsel %vm4722, %v4715, %v4719
  %v4724 = vand.u32 2147483647, %v4591
  %vm4725 = vcmp.eq.f32.partialorder %v4724, 8.507059e+37
  %v4726 = vand.u32 %v4591, 2147483648
  %v4727 = vor.u32 1.1754944e-38, %v4726
  %v4728 = vsel %vm4725, %v4727, %v4723
  %v4729 = vmul.f32 1.0, %v4728
  %v4730 = vrcp.pop %v4592
  %v4731 = vmul.f32 %v4592, %v4730
  %v4732 = vsub.f32 1.0, %v4731
  %v4733 = vmul.f32 %v4730, %v4732
  %v4734 = vadd.f32 %v4730, %v4733
  %vm4735 = vweird.f32 %v4592
  %vm4736 = vweird.f32 %v4730
  %vm4737 = vmor %vm4735, %vm4736
  %v4738 = vsel %vm4737, %v4730, %v4734
  %v4739 = vand.u32 2147483647, %v4592
  %vm4740 = vcmp.eq.f32.partialorder %v4739, 8.507059e+37
  %v4741 = vand.u32 %v4592, 2147483648
  %v4742 = vor.u32 1.1754944e-38, %v4741
  %v4743 = vsel %vm4740, %v4742, %v4738
  %v4744 = vmul.f32 1.0, %v4743
  %v4745 = vrcp.pop %v4593
  %v4746 = vmul.f32 %v4593, %v4745
  %v4747 = vsub.f32 1.0, %v4746
  %v4748 = vmul.f32 %v4745, %v4747
  %v4749 = vadd.f32 %v4745, %v4748
  %vm4750 = vweird.f32 %v4593
  %vm4751 = vweird.f32 %v4745
  %vm4752 = vmor %vm4750, %vm4751
  %v4753 = vsel %vm4752, %v4745, %v4749
  %v4754 = vand.u32 2147483647, %v4593
  %vm4755 = vcmp.eq.f32.partialorder %v4754, 8.507059e+37
  %v4756 = vand.u32 %v4593, 2147483648
  %v4757 = vor.u32 1.1754944e-38, %v4756
  %v4758 = vsel %vm4755, %v4757, %v4753
  %v4759 = vmul.f32 1.0, %v4758
  %v4760 = vrcp.pop %v4594
  %v4761 = vmul.f32 %v4594, %v4760
  %v4762 = vsub.f32 1.0, %v4761
  %v4763 = vmul.f32 %v4760, %v4762
  %v4764 = vadd.f32 %v4760, %v4763
  %vm4765 = vweird.f32 %v4594
  %vm4766 = vweird.f32 %v4760
  %vm4767 = vmor %vm4765, %vm4766
  %v4768 = vsel %vm4767, %v4760, %v4764
  %v4769 = vand.u32 2147483647, %v4594
  %vm4770 = vcmp.eq.f32.partialorder %v4769, 8.507059e+37
  %v4771 = vand.u32 %v4594, 2147483648
  %v4772 = vor.u32 1.1754944e-38, %v4771
  %v4773 = vsel %vm4770, %v4772, %v4768
  %v4774 = vmul.f32 1.0, %v4773
  %v4775 = vmul.f32 %v4609, 1.0614054
  %v4776 = vmul.f32 %v4624, 1.0614054
  %v4777 = vmul.f32 %v4639, 1.0614054
  %v4778 = vmul.f32 %v4654, 1.0614054
  %v4779 = vmul.f32 %v4669, 1.0614054
  %v4780 = vmul.f32 %v4684, 1.0614054
  %v4781 = vmul.f32 %v4699, 1.0614054
  %v4782 = vmul.f32 %v4714, 1.0614054
  %v4783 = vmul.f32 %v4729, 1.0614054
  %v4784 = vmul.f32 %v4744, 1.0614054
  %v4785 = vmul.f32 %v4759, 1.0614054
  %v4786 = vmul.f32 %v4774, 1.0614054
  %v4787 = vadd.f32 %v4775, -1.4531521
  %v4788 = vadd.f32 %v4776, -1.4531521
  %v4789 = vadd.f32 %v4777, -1.4531521
  %v4790 = vadd.f32 %v4778, -1.4531521
  %v4791 = vadd.f32 %v4779, -1.4531521
  %v4792 = vadd.f32 %v4780, -1.4531521
  %v4793 = vadd.f32 %v4781, -1.4531521
  %v4794 = vadd.f32 %v4782, -1.4531521
  %v4795 = vadd.f32 %v4783, -1.4531521
  %v4796 = vadd.f32 %v4784, -1.4531521
  %v4797 = vadd.f32 %v4785, -1.4531521
  %v4798 = vadd.f32 %v4786, -1.4531521
  %v4799 = vmul.f32 %v4787, %v4609
  %v4800 = vmul.f32 %v4788, %v4624
  %v4801 = vmul.f32 %v4789, %v4639
  %v4802 = vmul.f32 %v4790, %v4654
  %v4803 = vmul.f32 %v4791, %v4669
  %v4804 = vmul.f32 %v4792, %v4684
  %v4805 = vmul.f32 %v4793, %v4699
  %v4806 = vmul.f32 %v4794, %v4714
  %v4807 = vmul.f32 %v4795, %v4729
  %v4808 = vmul.f32 %v4796, %v4744
  %v4809 = vmul.f32 %v4797, %v4759
  %v4810 = vmul.f32 %v4798, %v4774
  %v4811 = vadd.f32 %v4799, 1.4214138
  %v4812 = vadd.f32 %v4800, 1.4214138
  %v4813 = vadd.f32 %v4801, 1.4214138
  %v4814 = vadd.f32 %v4802, 1.4214138
  %v4815 = vadd.f32 %v4803, 1.4214138
  %v4816 = vadd.f32 %v4804, 1.4214138
  %v4817 = vadd.f32 %v4805, 1.4214138
  %v4818 = vadd.f32 %v4806, 1.4214138
  %v4819 = vadd.f32 %v4807, 1.4214138
  %v4820 = vadd.f32 %v4808, 1.4214138
  %v4821 = vadd.f32 %v4809, 1.4214138
  %v4822 = vadd.f32 %v4810, 1.4214138
  %v4823 = vmul.f32 %v4811, %v4609
  %v4824 = vmul.f32 %v4812, %v4624
  %v4825 = vmul.f32 %v4813, %v4639
  %v4826 = vmul.f32 %v4814, %v4654
  %v4827 = vmul.f32 %v4815, %v4669
  %v4828 = vmul.f32 %v4816, %v4684
  %v4829 = vmul.f32 %v4817, %v4699
  %v4830 = vmul.f32 %v4818, %v4714
  %v4831 = vmul.f32 %v4819, %v4729
  %v4832 = vmul.f32 %v4820, %v4744
  %v4833 = vmul.f32 %v4821, %v4759
  %v4834 = vmul.f32 %v4822, %v4774
  %v4835 = vadd.f32 %v4823, -0.28449672
  %v4836 = vadd.f32 %v4824, -0.28449672
  %v4837 = vadd.f32 %v4825, -0.28449672
  %v4838 = vadd.f32 %v4826, -0.28449672
  %v4839 = vadd.f32 %v4827, -0.28449672
  %v4840 = vadd.f32 %v4828, -0.28449672
  %v4841 = vadd.f32 %v4829, -0.28449672
  %v4842 = vadd.f32 %v4830, -0.28449672
  %v4843 = vadd.f32 %v4831, -0.28449672
  %v4844 = vadd.f32 %v4832, -0.28449672
  %v4845 = vadd.f32 %v4833, -0.28449672
  %v4846 = vadd.f32 %v4834, -0.28449672
  %v4847 = vmul.f32 %v4835, %v4609
  %v4848 = vmul.f32 %v4836, %v4624
  %v4849 = vmul.f32 %v4837, %v4639
  %v4850 = vmul.f32 %v4838, %v4654
  %v4851 = vmul.f32 %v4839, %v4669
  %v4852 = vmul.f32 %v4840, %v4684
  %v4853 = vmul.f32 %v4841, %v4699
  %v4854 = vmul.f32 %v4842, %v4714
  %v4855 = vmul.f32 %v4843, %v4729
  %v4856 = vmul.f32 %v4844, %v4744
  %v4857 = vmul.f32 %v4845, %v4759
  %v4858 = vmul.f32 %v4846, %v4774
  %v4859 = vadd.f32 %v4847, 0.2548296
  %v4860 = vadd.f32 %v4848, 0.2548296
  %v4861 = vadd.f32 %v4849, 0.2548296
  %v4862 = vadd.f32 %v4850, 0.2548296
  %v4863 = vadd.f32 %v4851, 0.2548296
  %v4864 = vadd.f32 %v4852, 0.2548296
  %v4865 = vadd.f32 %v4853, 0.2548296
  %v4866 = vadd.f32 %v4854, 0.2548296
  %v4867 = vadd.f32 %v4855, 0.2548296
  %v4868 = vadd.f32 %v4856, 0.2548296
  %v4869 = vadd.f32 %v4857, 0.2548296
  %v4870 = vadd.f32 %v4858, 0.2548296
  %v4871 = vmul.f32 %v4859, %v4609
  %v4872 = vmul.f32 %v4860, %v4624
  %v4873 = vmul.f32 %v4861, %v4639
  %v4874 = vmul.f32 %v4862, %v4654
  %v4875 = vmul.f32 %v4863, %v4669
  %v4876 = vmul.f32 %v4864, %v4684
  %v4877 = vmul.f32 %v4865, %v4699
  %v4878 = vmul.f32 %v4866, %v4714
  %v4879 = vmul.f32 %v4867, %v4729
  %v4880 = vmul.f32 %v4868, %v4744
  %v4881 = vmul.f32 %v4869, %v4759
  %v4882 = vmul.f32 %v4870, %v4774
  %v4883 = vsub.f32 0.0, %v4559
  %v4884 = vsub.f32 0.0, %v4560
  %v4885 = vsub.f32 0.0, %v4561
  %v4886 = vsub.f32 0.0, %v4562
  %v4887 = vsub.f32 0.0, %v4563
  %v4888 = vsub.f32 0.0, %v4564
  %v4889 = vsub.f32 0.0, %v4565
  %v4890 = vsub.f32 0.0, %v4566
  %v4891 = vsub.f32 0.0, %v4567
  %v4892 = vsub.f32 0.0, %v4568
  %v4893 = vsub.f32 0.0, %v4569
  %v4894 = vsub.f32 0.0, %v4570
  %v4895 = vmul.f32 %v4883, %v4559
  %v4896 = vmul.f32 %v4884, %v4560
  %v4897 = vmul.f32 %v4885, %v4561
  %v4898 = vmul.f32 %v4886, %v4562
  %v4899 = vmul.f32 %v4887, %v4563
  %v4900 = vmul.f32 %v4888, %v4564
  %v4901 = vmul.f32 %v4889, %v4565
  %v4902 = vmul.f32 %v4890, %v4566
  %v4903 = vmul.f32 %v4891, %v4567
  %v4904 = vmul.f32 %v4892, %v4568
  %v4905 = vmul.f32 %v4893, %v4569
  %v4906 = vmul.f32 %v4894, %v4570
  %v4907 = vmul.f32 %v4895, 1.442695
  %v4908 = vpow.pop %v4907
  %v4909 = vmul.f32 %v4896, 1.442695
  %v4910 = vpow.pop %v4909
  %v4911 = vmul.f32 %v4897, 1.442695
  %v4912 = vpow.pop %v4911
  %v4913 = vmul.f32 %v4898, 1.442695
  %v4914 = vpow.pop %v4913
  %v4915 = vmul.f32 %v4899, 1.442695
  %v4916 = vpow.pop %v4915
  %v4917 = vmul.f32 %v4900, 1.442695
  %v4918 = vpow.pop %v4917
  %v4919 = vmul.f32 %v4901, 1.442695
  %v4920 = vpow.pop %v4919
  %v4921 = vmul.f32 %v4902, 1.442695
  %v4922 = vpow.pop %v4921
  %v4923 = vmul.f32 %v4903, 1.442695
  %v4924 = vpow.pop %v4923
  %v4925 = vmul.f32 %v4904, 1.442695
  %v4926 = vpow.pop %v4925
  %v4927 = vmul.f32 %v4905, 1.442695
  %v4928 = vpow.pop %v4927
  %v4929 = vmul.f32 %v4906, 1.442695
  %v4930 = vpow.pop %v4929
  %v4931 = vmul.f32 %v4871, %v4908
  %v4932 = vmul.f32 %v4872, %v4910
  %v4933 = vmul.f32 %v4873, %v4912
  %v4934 = vmul.f32 %v4874, %v4914
  %v4935 = vmul.f32 %v4875, %v4916
  %v4936 = vmul.f32 %v4876, %v4918
  %v4937 = vmul.f32 %v4877, %v4920
  %v4938 = vmul.f32 %v4878, %v4922
  %v4939 = vmul.f32 %v4879, %v4924
  %v4940 = vmul.f32 %v4880, %v4926
  %v4941 = vmul.f32 %v4881, %v4928
  %v4942 = vmul.f32 %v4882, %v4930
  %v4943 = vsub.f32 1.0, %v4931
  %v4944 = vsub.f32 1.0, %v4932
  %v4945 = vsub.f32 1.0, %v4933
  %v4946 = vsub.f32 1.0, %v4934
  %v4947 = vsub.f32 1.0, %v4935
  %v4948 = vsub.f32 1.0, %v4936
  %v4949 = vsub.f32 1.0, %v4937
  %v4950 = vsub.f32 1.0, %v4938
  %v4951 = vsub.f32 1.0, %v4939
  %v4952 = vsub.f32 1.0, %v4940
  %v4953 = vsub.f32 1.0, %v4941
  %v4954 = vsub.f32 1.0, %v4942
  %v4955 = vmul.f32 %v4547, %v4943
  %v4956 = vmul.f32 %v4548, %v4944
  %v4957 = vmul.f32 %v4549, %v4945
  %v4958 = vmul.f32 %v4550, %v4946
  %v4959 = vmul.f32 %v4551, %v4947
  %v4960 = vmul.f32 %v4552, %v4948
  %v4961 = vmul.f32 %v4553, %v4949
  %v4962 = vmul.f32 %v4554, %v4950
  %v4963 = vmul.f32 %v4555, %v4951
  %v4964 = vmul.f32 %v4556, %v4952
  %v4965 = vmul.f32 %v4557, %v4953
  %v4966 = vmul.f32 %v4558, %v4954
  %v4967 = vadd.f32 %v4955, 1.0
  %v4968 = vadd.f32 %v4956, 1.0
  %v4969 = vadd.f32 %v4957, 1.0
  %v4970 = vadd.f32 %v4958, 1.0
  %v4971 = vadd.f32 %v4959, 1.0
  %v4972 = vadd.f32 %v4960, 1.0
  %v4973 = vadd.f32 %v4961, 1.0
  %v4974 = vadd.f32 %v4962, 1.0
  %v4975 = vadd.f32 %v4963, 1.0
  %v4976 = vadd.f32 %v4964, 1.0
  %v4977 = vadd.f32 %v4965, 1.0
  %v4978 = vadd.f32 %v4966, 1.0
  %v4979 = vmul.f32 %v4511, %v4967
  %v4980 = vmul.f32 %v4512, %v4968
  %v4981 = vmul.f32 %v4513, %v4969
  %v4982 = vmul.f32 %v4514, %v4970
  %v4983 = vmul.f32 %v4515, %v4971
  %v4984 = vmul.f32 %v4516, %v4972
  %v4985 = vmul.f32 %v4517, %v4973
  %v4986 = vmul.f32 %v4518, %v4974
  %v4987 = vmul.f32 %v4519, %v4975
  %v4988 = vmul.f32 %v4520, %v4976
  %v4989 = vmul.f32 %v4521, %v4977
  %v4990 = vmul.f32 %v4522, %v4978
  %v4991 = vpack.c.bf16 %v4983, %v4979
  %v4992 = vpack.c.bf16 %v4984, %v4980
  %v4993 = vpack.c.bf16 %v4985, %v4981
  %v4994 = vpack.c.bf16 %v4986, %v4982
  %v4995 = vpack.c.bf16 %v4987, %v4987
  %v4996 = vpack.c.bf16 %v4988, %v4988
  %v4997 = vpack.c.bf16 %v4989, %v4989
  %v4998 = vpack.c.bf16 %v4990, %v4990
  %v4999 = vld [vmem:[%s7] sm:$0xf]
  %v5000 = vld [vmem:[%s7 + $0x4] sm:$0xf]
  %v5001 = vld [vmem:[%s7 + $0x8] sm:$0xf]
  %v5002 = vld [vmem:[%s7 + $0xc] sm:$0xf]
  %v5003 = vld [vmem:[%s7 + $0x10] sm:$0xf]
  %v5004 = vld [vmem:[%s7 + $0x14] sm:$0xf]
  %v5005 = vld [vmem:[%s7 + $0x18] sm:$0xf]
  %v5006 = vld [vmem:[%s7 + $0x1c] sm:$0xf]
  %v5007 = vld [vmem:[%s7 + $0x20] sm:$0xf]
  %v5008 = vld [vmem:[%s7 + $0x24] sm:$0xf]
  %v5009 = vld [vmem:[%s7 + $0x28] sm:$0xf]
  %v5010 = vld [vmem:[%s7 + $0x2c] sm:$0xf]
  %v5011 = vld [vmem:[%s7 + $0x30] sm:$0xf]
  %v5012 = vld [vmem:[%s7 + $0x34] sm:$0xf]
  %v5013 = vld [vmem:[%s7 + $0x38] sm:$0xf]
  %v5014 = vld [vmem:[%s7 + $0x3c] sm:$0xf]
  %v5015 = vld [vmem:[%s7 + $0x40] sm:$0xf]
  %v5016 = vld [vmem:[%s7 + $0x44] sm:$0xf]
  %v5017 = vld [vmem:[%s7 + $0x48] sm:$0xf]
  %v5018 = vld [vmem:[%s7 + $0x4c] sm:$0xf]
  %v5019 = vld [vmem:[%s7 + $0x50] sm:$0xf]
  %v5020 = vld [vmem:[%s7 + $0x54] sm:$0xf]
  %v5021 = vld [vmem:[%s7 + $0x58] sm:$0xf]
  %v5022 = vld [vmem:[%s7 + $0x5c] sm:$0xf]
  %v5023 = vld [vmem:[%s7 + $0x60] sm:$0xf]
  %v5024 = vld [vmem:[%s7 + $0x64] sm:$0xf]
  %v5025 = vld [vmem:[%s7 + $0x68] sm:$0xf]
  %v5026 = vld [vmem:[%s7 + $0x6c] sm:$0xf]
  %v5027 = vld [vmem:[%s7 + $0x70] sm:$0xf]
  %v5028 = vld [vmem:[%s7 + $0x74] sm:$0xf]
  %v5029 = vld [vmem:[%s7 + $0x78] sm:$0xf]
  %v5030 = vld [vmem:[%s7 + $0x7c] sm:$0xf]
  %v5031 = vld [vmem:[%s7 + $0x80] sm:$0xf]
  %v5032 = vld [vmem:[%s7 + $0x84] sm:$0xf]
  %v5033 = vld [vmem:[%s7 + $0x88] sm:$0xf]
  %v5034 = vld [vmem:[%s7 + $0x8c] sm:$0xf]
  %v5035 = vld [vmem:[%s7 + $0x90] sm:$0xf]
  %v5036 = vld [vmem:[%s7 + $0x94] sm:$0xf]
  %v5037 = vld [vmem:[%s7 + $0x98] sm:$0xf]
  %v5038 = vld [vmem:[%s7 + $0x9c] sm:$0xf]
  %v5039 = vld [vmem:[%s7 + $0xa0] sm:$0xf]
  %v5040 = vld [vmem:[%s7 + $0xa4] sm:$0xf]
  %v5041 = vld [vmem:[%s7 + $0xa8] sm:$0xf]
  %v5042 = vld [vmem:[%s7 + $0xac] sm:$0xf]
  %v5043 = vld [vmem:[%s7 + $0xb0] sm:$0xf]
  %v5044 = vld [vmem:[%s7 + $0xb4] sm:$0xf]
  %v5045 = vld [vmem:[%s7 + $0xb8] sm:$0xf]
  %v5046 = vld [vmem:[%s7 + $0xbc] sm:$0xf]
  %v5047 = vld [vmem:[%s7 + $0xc0] sm:$0xf]
  %v5048 = vld [vmem:[%s7 + $0xc4] sm:$0xf]
  %v5049 = vld [vmem:[%s7 + $0xc8] sm:$0xf]
  %v5050 = vld [vmem:[%s7 + $0xcc] sm:$0xf]
  %v5051 = vld [vmem:[%s7 + $0xd0] sm:$0xf]
  %v5052 = vld [vmem:[%s7 + $0xd4] sm:$0xf]
  %v5053 = vld [vmem:[%s7 + $0xd8] sm:$0xf]
  %v5054 = vld [vmem:[%s7 + $0xdc] sm:$0xf]
  %v5055 = vld [vmem:[%s7 + $0xe0] sm:$0xf]
  %v5056 = vld [vmem:[%s7 + $0xe4] sm:$0xf]
  %v5057 = vld [vmem:[%s7 + $0xe8] sm:$0xf]
  %v5058 = vld [vmem:[%s7 + $0xec] sm:$0xf]
  %v5059 = vld [vmem:[%s7 + $0xf0] sm:$0xf]
  %v5060 = vld [vmem:[%s7 + $0xf4] sm:$0xf]
  %v5061 = vld [vmem:[%s7 + $0xf8] sm:$0xf]
  %v5062 = vld [vmem:[%s7 + $0xfc] sm:$0xf]
  %v5127 = vunpack.c.l.b16 %v4999
  %v5128 = vunpack.c.l.b16 %v5000
  %v5129 = vunpack.c.l.b16 %v5001
  %v5130 = vunpack.c.l.b16 %v5002
  %v5131 = vunpack.c.l.b16 %v5003
  %v5132 = vunpack.c.l.b16 %v5004
  %v5133 = vunpack.c.l.b16 %v5005
  %v5134 = vunpack.c.l.b16 %v5006
  %v5135 = vunpack.c.l.b16 %v5007
  %v5136 = vunpack.c.l.b16 %v5008
  %v5137 = vunpack.c.l.b16 %v5009
  %v5138 = vunpack.c.l.b16 %v5010
  %v5139 = vunpack.c.l.b16 %v5011
  %v5140 = vunpack.c.l.b16 %v5012
  %v5141 = vunpack.c.l.b16 %v5013
  %v5142 = vunpack.c.l.b16 %v5014
  %v5143 = vunpack.c.l.b16 %v5015
  %v5144 = vunpack.c.l.b16 %v5016
  %v5145 = vunpack.c.l.b16 %v5017
  %v5146 = vunpack.c.l.b16 %v5018
  %v5147 = vunpack.c.l.b16 %v5019
  %v5148 = vunpack.c.l.b16 %v5020
  %v5149 = vunpack.c.l.b16 %v5021
  %v5150 = vunpack.c.l.b16 %v5022
  %v5151 = vunpack.c.l.b16 %v5023
  %v5152 = vunpack.c.l.b16 %v5024
  %v5153 = vunpack.c.l.b16 %v5025
  %v5154 = vunpack.c.l.b16 %v5026
  %v5155 = vunpack.c.l.b16 %v5027
  %v5156 = vunpack.c.l.b16 %v5028
  %v5157 = vunpack.c.l.b16 %v5029
  %v5158 = vunpack.c.l.b16 %v5030
  %v5159 = vunpack.c.l.b16 %v5031
  %v5160 = vunpack.c.l.b16 %v5032
  %v5161 = vunpack.c.l.b16 %v5033
  %v5162 = vunpack.c.l.b16 %v5034
  %v5163 = vunpack.c.l.b16 %v5035
  %v5164 = vunpack.c.l.b16 %v5036
  %v5165 = vunpack.c.l.b16 %v5037
  %v5166 = vunpack.c.l.b16 %v5038
  %v5167 = vunpack.c.l.b16 %v5039
  %v5168 = vunpack.c.l.b16 %v5040
  %v5169 = vunpack.c.l.b16 %v5041
  %v5170 = vunpack.c.l.b16 %v5042
  %v5171 = vunpack.c.l.b16 %v5043
  %v5172 = vunpack.c.l.b16 %v5044
  %v5173 = vunpack.c.l.b16 %v5045
  %v5174 = vunpack.c.l.b16 %v5046
  %v5175 = vunpack.c.l.b16 %v5047
  %v5176 = vunpack.c.l.b16 %v5048
  %v5177 = vunpack.c.l.b16 %v5049
  %v5178 = vunpack.c.l.b16 %v5050
  %v5179 = vunpack.c.l.b16 %v5051
  %v5180 = vunpack.c.l.b16 %v5052
  %v5181 = vunpack.c.l.b16 %v5053
  %v5182 = vunpack.c.l.b16 %v5054
  %v5183 = vunpack.c.l.b16 %v5055
  %v5184 = vunpack.c.l.b16 %v5056
  %v5185 = vunpack.c.l.b16 %v5057
  %v5186 = vunpack.c.l.b16 %v5058
  %v5187 = vunpack.c.l.b16 %v5059
  %v5188 = vunpack.c.l.b16 %v5060
  %v5189 = vunpack.c.l.b16 %v5061
  %v5190 = vunpack.c.l.b16 %v5062
  %v5191 = vpack.c.b16 %v5128, %v5127
  %v5192 = vpack.c.b16 %v5130, %v5129
  %v5193 = vpack.c.b16 %v5132, %v5131
  %v5194 = vpack.c.b16 %v5134, %v5133
  %v5195 = vpack.c.b16 %v5136, %v5135
  %v5196 = vpack.c.b16 %v5138, %v5137
  %v5197 = vpack.c.b16 %v5140, %v5139
  %v5198 = vpack.c.b16 %v5142, %v5141
  %v5199 = vpack.c.b16 %v5144, %v5143
  %v5200 = vpack.c.b16 %v5146, %v5145
  %v5201 = vpack.c.b16 %v5148, %v5147
  %v5202 = vpack.c.b16 %v5150, %v5149
  %v5203 = vpack.c.b16 %v5152, %v5151
  %v5204 = vpack.c.b16 %v5154, %v5153
  %v5205 = vpack.c.b16 %v5156, %v5155
  %v5206 = vpack.c.b16 %v5158, %v5157
  %v5207 = vpack.c.b16 %v5160, %v5159
  %v5208 = vpack.c.b16 %v5162, %v5161
  %v5209 = vpack.c.b16 %v5164, %v5163
  %v5210 = vpack.c.b16 %v5166, %v5165
  %v5211 = vpack.c.b16 %v5168, %v5167
  %v5212 = vpack.c.b16 %v5170, %v5169
  %v5213 = vpack.c.b16 %v5172, %v5171
  %v5214 = vpack.c.b16 %v5174, %v5173
  %v5215 = vpack.c.b16 %v5176, %v5175
  %v5216 = vpack.c.b16 %v5178, %v5177
  %v5217 = vpack.c.b16 %v5180, %v5179
  %v5218 = vpack.c.b16 %v5182, %v5181
  %v5219 = vpack.c.b16 %v5184, %v5183
  %v5220 = vpack.c.b16 %v5186, %v5185
  %v5221 = vpack.c.b16 %v5188, %v5187
  %v5222 = vpack.c.b16 %v5190, %v5189
  %5255 = vmatpush.bf16.msra.mxu0 %v5198
  %5256 = vmatpush.bf16.msra.mxu0 %v5197
  %5257 = vmatpush.bf16.msra.mxu0 %v5196
  %5258 = vmatpush.bf16.msra.mxu0 %v5195
  %5259 = vmatpush.bf16.msra.mxu0 %v5194
  %5260 = vmatpush.bf16.msra.mxu0 %v5193
  %5261 = vmatpush.bf16.msra.mxu0 %v5192
  %5262 = vmatpush.bf16.msra.mxu0 %v5191
  %5263 = vmatmul.bf16.gmra.mxu0 %v4991
  %v5264 = vpop.f32.mrf.mxu0
  %v5265 = vadd.f32 0.0, %v5264
  %v5266 = vpop.f32.mrf.mxu0
  %v5267 = vadd.f32 0.0, %v5266
  %5268 = vmatmul.bf16.gmra.mxu0 %v4995
  %v5269 = vpop.f32.mrf.mxu0
  %v5270 = vadd.f32 0.0, %v5269
  %v5271 = vpop.f32.mrf.mxu0
  %5272 = vdwg.mxu0
  %5273 = vmatpush.bf16.msra.mxu0 %v5206
  %5274 = vmatpush.bf16.msra.mxu0 %v5205
  %5275 = vmatpush.bf16.msra.mxu0 %v5204
  %5276 = vmatpush.bf16.msra.mxu0 %v5203
  %5277 = vmatpush.bf16.msra.mxu0 %v5202
  %5278 = vmatpush.bf16.msra.mxu0 %v5201
  %5279 = vmatpush.bf16.msra.mxu0 %v5200
  %5280 = vmatpush.bf16.msra.mxu0 %v5199
  %5281 = vmatmul.bf16.gmra.mxu0 %v4992
  %v5282 = vpop.f32.mrf.mxu0
  %v5283 = vadd.f32 %v5265, %v5282
  %v5284 = vpop.f32.mrf.mxu0
  %v5285 = vadd.f32 %v5267, %v5284
  %5286 = vmatmul.bf16.gmra.mxu0 %v4996
  %v5287 = vpop.f32.mrf.mxu0
  %v5288 = vadd.f32 %v5270, %v5287
  %v5289 = vpop.f32.mrf.mxu0
  %5290 = vdwg.mxu0
  %5291 = vmatpush.bf16.msra.mxu0 %v5214
  %5292 = vmatpush.bf16.msra.mxu0 %v5213
  %5293 = vmatpush.bf16.msra.mxu0 %v5212
  %5294 = vmatpush.bf16.msra.mxu0 %v5211
  %5295 = vmatpush.bf16.msra.mxu0 %v5210
  %5296 = vmatpush.bf16.msra.mxu0 %v5209
  %5297 = vmatpush.bf16.msra.mxu0 %v5208
  %5298 = vmatpush.bf16.msra.mxu0 %v5207
  %5299 = vmatmul.bf16.gmra.mxu0 %v4993
  %v5300 = vpop.f32.mrf.mxu0
  %v5301 = vadd.f32 %v5283, %v5300
  %v5302 = vpop.f32.mrf.mxu0
  %v5303 = vadd.f32 %v5285, %v5302
  %5304 = vmatmul.bf16.gmra.mxu0 %v4997
  %v5305 = vpop.f32.mrf.mxu0
  %v5306 = vadd.f32 %v5288, %v5305
  %v5307 = vpop.f32.mrf.mxu0
  %5308 = vdwg.mxu0
  %5309 = vmatpush.bf16.msra.mxu0 %v5222
  %5310 = vmatpush.bf16.msra.mxu0 %v5221
  %5311 = vmatpush.bf16.msra.mxu0 %v5220
  %5312 = vmatpush.bf16.msra.mxu0 %v5219
  %5313 = vmatpush.bf16.msra.mxu0 %v5218
  %5314 = vmatpush.bf16.msra.mxu0 %v5217
  %5315 = vmatpush.bf16.msra.mxu0 %v5216
  %5316 = vmatpush.bf16.msra.mxu0 %v5215
  %5317 = vmatmul.bf16.gmra.mxu0 %v4994
  %v5318 = vpop.f32.mrf.mxu0
  %v5319 = vadd.f32 %v5301, %v5318
  %v5320 = vpop.f32.mrf.mxu0
  %v5321 = vadd.f32 %v5303, %v5320
  %5322 = vmatmul.bf16.gmra.mxu0 %v4998
  %v5323 = vpop.f32.mrf.mxu0
  %v5324 = vadd.f32 %v5306, %v5323
  %v5325 = vpop.f32.mrf.mxu0
  %5326 = vdwg.mxu0
  %v5330 = vrot.slane %v5319, 1
  %v5331 = vrot.slane %v5319, 2
  %v5332 = vrot.slane %v5319, 3
  %v5333 = vrot.slane %v5319, 4
  %v5334 = vrot.slane %v5319, 5
  %v5335 = vrot.slane %v5319, 6
  %v5336 = vrot.slane %v5319, 7
  %v5337 = vrot.slane %v5321, 1
  %v5338 = vrot.slane %v5321, 2
  %v5339 = vrot.slane %v5321, 3
  %v5340 = vrot.slane %v5321, 4
  %v5341 = vrot.slane %v5321, 5
  %v5342 = vrot.slane %v5321, 6
  %v5343 = vrot.slane %v5321, 7
  %v5344 = vrot.slane %v5324, 1
  %v5360 = vadd.f32 %v3558, %v5319
  %v5361 = vadd.f32 %v3559, %v5330
  %v5362 = vadd.f32 %v3560, %v5331
  %v5363 = vadd.f32 %v3561, %v5332
  %v5364 = vadd.f32 %v3562, %v5333
  %v5365 = vadd.f32 %v3563, %v5334
  %v5366 = vadd.f32 %v3564, %v5335
  %v5367 = vadd.f32 %v3565, %v5336
  %v5368 = vadd.f32 %v3566, %v5321
  %v5369 = vadd.f32 %v3567, %v5337
  %v5370 = vadd.f32 %v3568, %v5338
  %v5371 = vadd.f32 %v3569, %v5339
  %v5372 = vadd.f32 %v3570, %v5340
  %v5373 = vadd.f32 %v3571, %v5341
  %v5374 = vadd.f32 %v3572, %v5342
  %v5375 = vadd.f32 %v3573, %v5343
  %v5376 = vadd.f32 %v3574, %v5324
  %v5377 = vadd.f32 %v3575, %v5344
  %v5379 = vperm.slane %v1224, 0
  %v5381 = vrot.slane %v5379, 1
  %v5382 = vrot.slane %v5379, 2
  %v5383 = vrot.slane %v5379, 3
  %v5384 = vrot.slane %v5379, 4
  %v5385 = vrot.slane %v5379, 5
  %v5386 = vrot.slane %v5379, 6
  %v5387 = vrot.slane %v5379, 7
  %v5395 = vadd.f32 %v5360, %v5379
  %v5396 = vadd.f32 %v5361, %v5381
  %v5397 = vadd.f32 %v5362, %v5382
  %v5398 = vadd.f32 %v5363, %v5383
  %v5399 = vadd.f32 %v5364, %v5384
  %v5400 = vadd.f32 %v5365, %v5385
  %v5401 = vadd.f32 %v5366, %v5386
  %v5402 = vadd.f32 %v5367, %v5387
  %v5403 = vadd.f32 %v5368, %v5379
  %v5404 = vadd.f32 %v5369, %v5381
  %v5405 = vadd.f32 %v5370, %v5382
  %v5406 = vadd.f32 %v5371, %v5383
  %v5407 = vadd.f32 %v5372, %v5384
  %v5408 = vadd.f32 %v5373, %v5385
  %v5409 = vadd.f32 %v5374, %v5386
  %v5410 = vadd.f32 %v5375, %v5387
  %v5411 = vadd.f32 %v5376, %v5379
  %v5412 = vadd.f32 %v5377, %v5381
  %v5413 = vld [vmem:[%s2 + $0xe] sm:$0x1]
  %v5414 = vld [vmem:[%s2 + $0xf] sm:$0x1]
  %5433 = vst [vmem:[#allocation1] ss:$9 sm:$0xff] %v5395
  %s5434 = scalar_lea.vmem [#allocation1], 1
  %5435 = vst [vmem:[%s5434] ss:$9 sm:$0xff] %v5396
  %s5436 = scalar_lea.vmem [#allocation1], 2
  %5437 = vst [vmem:[%s5436] ss:$9 sm:$0xff] %v5397
  %s5438 = scalar_lea.vmem [#allocation1], 3
  %5439 = vst [vmem:[%s5438] ss:$9 sm:$0xff] %v5398
  %s5440 = scalar_lea.vmem [#allocation1], 4
  %5441 = vst [vmem:[%s5440] ss:$9 sm:$0xff] %v5399
  %s5442 = scalar_lea.vmem [#allocation1], 5
  %5443 = vst [vmem:[%s5442] ss:$9 sm:$0xff] %v5400
  %s5444 = scalar_lea.vmem [#allocation1], 6
  %5445 = vst [vmem:[%s5444] ss:$9 sm:$0xff] %v5401
  %s5446 = scalar_lea.vmem [#allocation1], 7
  %5447 = vst [vmem:[%s5446] ss:$9 sm:$0xff] %v5402
  %v5448 = vld [vmem:[#allocation1] sm:$0xff]
  %5449 = vst [vmem:[#allocation1] ss:$9 sm:$0xff] %v5403
  %5450 = vst [vmem:[%s5434] ss:$9 sm:$0xff] %v5404
  %5451 = vst [vmem:[%s5436] ss:$9 sm:$0xff] %v5405
  %5452 = vst [vmem:[%s5438] ss:$9 sm:$0xff] %v5406
  %5453 = vst [vmem:[%s5440] ss:$9 sm:$0xff] %v5407
  %5454 = vst [vmem:[%s5442] ss:$9 sm:$0xff] %v5408
  %5455 = vst [vmem:[%s5444] ss:$9 sm:$0xff] %v5409
  %5456 = vst [vmem:[%s5446] ss:$9 sm:$0xff] %v5410
  %v5457 = vld [vmem:[#allocation1] sm:$0xff]
  %5458 = vst [vmem:[#allocation1] ss:$9 sm:$0xff] %v5411
  %5459 = vst [vmem:[%s5434] ss:$9 sm:$0xff] %v5412
  %v5460 = vld [vmem:[#allocation1] sm:$0xff]
  %5464 = vadd.xlane.f32.xlu0 %v5448
  %v5465 = vpop.xlane.xlu0 %5464
  %5466 = vadd.xlane.f32.xlu0 %v5457
  %v5467 = vpop.xlane.xlu0 %5466
  %v5468 = vsel %vm111, %v5460, 0.0
  %5469 = vadd.xlane.f32.xlu0 %v5468
  %v5470 = vpop.xlane.xlu0 %5469
  %v5471 = vmul.f32 %v5465, %v1287
  %v5472 = vmul.f32 %v5467, %v1287
  %v5473 = vmul.f32 %v5470, %v1287
  %v5477 = vperm.slane %v5471, 0
  %v5478 = vperm.slane %v5471, 1
  %v5479 = vperm.slane %v5471, 2
  %v5480 = vperm.slane %v5471, 3
  %v5481 = vperm.slane %v5471, 4
  %v5482 = vperm.slane %v5471, 5
  %v5483 = vperm.slane %v5471, 6
  %v5484 = vperm.slane %v5471, 7
  %v5485 = vperm.slane %v5472, 0
  %v5486 = vperm.slane %v5472, 1
  %v5487 = vperm.slane %v5472, 2
  %v5488 = vperm.slane %v5472, 3
  %v5489 = vperm.slane %v5472, 4
  %v5490 = vperm.slane %v5472, 5
  %v5491 = vperm.slane %v5472, 6
  %v5492 = vperm.slane %v5472, 7
  %v5493 = vperm.slane %v5473, 0
  %v5494 = vperm.slane %v5473, 1
  %v5513 = vsub.f32 %v5395, %v5477
  %v5514 = vsub.f32 %v5396, %v5478
  %v5515 = vsub.f32 %v5397, %v5479
  %v5516 = vsub.f32 %v5398, %v5480
  %v5517 = vsub.f32 %v5399, %v5481
  %v5518 = vsub.f32 %v5400, %v5482
  %v5519 = vsub.f32 %v5401, %v5483
  %v5520 = vsub.f32 %v5402, %v5484
  %v5521 = vsub.f32 %v5403, %v5485
  %v5522 = vsub.f32 %v5404, %v5486
  %v5523 = vsub.f32 %v5405, %v5487
  %v5524 = vsub.f32 %v5406, %v5488
  %v5525 = vsub.f32 %v5407, %v5489
  %v5526 = vsub.f32 %v5408, %v5490
  %v5527 = vsub.f32 %v5409, %v5491
  %v5528 = vsub.f32 %v5410, %v5492
  %v5529 = vsub.f32 %v5411, %v5493
  %v5530 = vsub.f32 %v5412, %v5494
  %v5531 = vmul.f32 %v5513, %v5513
  %v5532 = vmul.f32 %v5514, %v5514
  %v5533 = vmul.f32 %v5515, %v5515
  %v5534 = vmul.f32 %v5516, %v5516
  %v5535 = vmul.f32 %v5517, %v5517
  %v5536 = vmul.f32 %v5518, %v5518
  %v5537 = vmul.f32 %v5519, %v5519
  %v5538 = vmul.f32 %v5520, %v5520
  %v5539 = vmul.f32 %v5521, %v5521
  %v5540 = vmul.f32 %v5522, %v5522
  %v5541 = vmul.f32 %v5523, %v5523
  %v5542 = vmul.f32 %v5524, %v5524
  %v5543 = vmul.f32 %v5525, %v5525
  %v5544 = vmul.f32 %v5526, %v5526
  %v5545 = vmul.f32 %v5527, %v5527
  %v5546 = vmul.f32 %v5528, %v5528
  %v5547 = vmul.f32 %v5529, %v5529
  %v5548 = vmul.f32 %v5530, %v5530
  %5567 = vst [vmem:[#allocation1] ss:$9 sm:$0xff] %v5531
  %s5568 = scalar_lea.vmem [#allocation1], 1
  %5569 = vst [vmem:[%s5568] ss:$9 sm:$0xff] %v5532
  %s5570 = scalar_lea.vmem [#allocation1], 2
  %5571 = vst [vmem:[%s5570] ss:$9 sm:$0xff] %v5533
  %s5572 = scalar_lea.vmem [#allocation1], 3
  %5573 = vst [vmem:[%s5572] ss:$9 sm:$0xff] %v5534
  %s5574 = scalar_lea.vmem [#allocation1], 4
  %5575 = vst [vmem:[%s5574] ss:$9 sm:$0xff] %v5535
  %s5576 = scalar_lea.vmem [#allocation1], 5
  %5577 = vst [vmem:[%s5576] ss:$9 sm:$0xff] %v5536
  %s5578 = scalar_lea.vmem [#allocation1], 6
  %5579 = vst [vmem:[%s5578] ss:$9 sm:$0xff] %v5537
  %s5580 = scalar_lea.vmem [#allocation1], 7
  %5581 = vst [vmem:[%s5580] ss:$9 sm:$0xff] %v5538
  %v5582 = vld [vmem:[#allocation1] sm:$0xff]
  %5583 = vst [vmem:[#allocation1] ss:$9 sm:$0xff] %v5539
  %5584 = vst [vmem:[%s5568] ss:$9 sm:$0xff] %v5540
  %5585 = vst [vmem:[%s5570] ss:$9 sm:$0xff] %v5541
  %5586 = vst [vmem:[%s5572] ss:$9 sm:$0xff] %v5542
  %5587 = vst [vmem:[%s5574] ss:$9 sm:$0xff] %v5543
  %5588 = vst [vmem:[%s5576] ss:$9 sm:$0xff] %v5544
  %5589 = vst [vmem:[%s5578] ss:$9 sm:$0xff] %v5545
  %5590 = vst [vmem:[%s5580] ss:$9 sm:$0xff] %v5546
  %v5591 = vld [vmem:[#allocation1] sm:$0xff]
  %5592 = vst [vmem:[#allocation1] ss:$9 sm:$0xff] %v5547
  %5593 = vst [vmem:[%s5568] ss:$9 sm:$0xff] %v5548
  %v5594 = vld [vmem:[#allocation1] sm:$0xff]
  %5598 = vadd.xlane.f32.xlu0 %v5582
  %v5599 = vpop.xlane.xlu0 %5598
  %5600 = vadd.xlane.f32.xlu0 %v5591
  %v5601 = vpop.xlane.xlu0 %5600
  %v5602 = vsel %vm111, %v5594, 0.0
  %5603 = vadd.xlane.f32.xlu0 %v5602
  %v5604 = vpop.xlane.xlu0 %5603
  %v5605 = vmul.f32 %v5599, %v1287
  %v5606 = vmul.f32 %v5601, %v1287
  %v5607 = vmul.f32 %v5604, %v1287
  %v5608 = vadd.f32 %v5605, 1e-05
  %v5609 = vadd.f32 %v5606, 1e-05
  %v5610 = vadd.f32 %v5607, 1e-05
  %v5611 = vrsqrt.pop %v5608
  %v5612 = vmul.f32 %v5611, %v5608
  %v5613 = vmul.f32 %v5612, %v5611
  %v5614 = vmul.f32 0.5, %v5613
  %v5615 = vsub.f32 1.5, %v5614
  %v5616 = vmul.f32 %v5611, %v5615
  %v5617 = vmul.f32 %v5608, %v5616
  %vm5618 = vcmp.eq.f32.partialorder %v5608, inf
  %v5619 = vsel %vm5618, %v5608, %v5617
  %vm5620 = vcmp.eq.f32.partialorder %v5608, 0.0
  %v5621 = vand.u32 %v5608, 2147483648
  %v5622 = vsel %vm5620, %v5621, %v5619
  %v5623 = vrsqrt.pop %v5609
  %v5624 = vmul.f32 %v5623, %v5609
  %v5625 = vmul.f32 %v5624, %v5623
  %v5626 = vmul.f32 0.5, %v5625
  %v5627 = vsub.f32 1.5, %v5626
  %v5628 = vmul.f32 %v5623, %v5627
  %v5629 = vmul.f32 %v5609, %v5628
  %vm5630 = vcmp.eq.f32.partialorder %v5609, inf
  %v5631 = vsel %vm5630, %v5609, %v5629
  %vm5632 = vcmp.eq.f32.partialorder %v5609, 0.0
  %v5633 = vand.u32 %v5609, 2147483648
  %v5634 = vsel %vm5632, %v5633, %v5631
  %v5635 = vrsqrt.pop %v5610
  %v5636 = vmul.f32 %v5635, %v5610
  %v5637 = vmul.f32 %v5636, %v5635
  %v5638 = vmul.f32 0.5, %v5637
  %v5639 = vsub.f32 1.5, %v5638
  %v5640 = vmul.f32 %v5635, %v5639
  %v5641 = vmul.f32 %v5610, %v5640
  %vm5642 = vcmp.eq.f32.partialorder %v5610, inf
  %v5643 = vsel %vm5642, %v5610, %v5641
  %vm5644 = vcmp.eq.f32.partialorder %v5610, 0.0
  %v5645 = vand.u32 %v5610, 2147483648
  %v5646 = vsel %vm5644, %v5645, %v5643
  %v5650 = vperm.slane %v5622, 0
  %v5651 = vperm.slane %v5622, 1
  %v5652 = vperm.slane %v5622, 2
  %v5653 = vperm.slane %v5622, 3
  %v5654 = vperm.slane %v5622, 4
  %v5655 = vperm.slane %v5622, 5
  %v5656 = vperm.slane %v5622, 6
  %v5657 = vperm.slane %v5622, 7
  %v5658 = vperm.slane %v5634, 0
  %v5659 = vperm.slane %v5634, 1
  %v5660 = vperm.slane %v5634, 2
  %v5661 = vperm.slane %v5634, 3
  %v5662 = vperm.slane %v5634, 4
  %v5663 = vperm.slane %v5634, 5
  %v5664 = vperm.slane %v5634, 6
  %v5665 = vperm.slane %v5634, 7
  %v5666 = vperm.slane %v5646, 0
  %v5667 = vperm.slane %v5646, 1
  %v5686 = vrcp.pop %v5650
  %v5687 = vmul.f32 %v5650, %v5686
  %v5688 = vsub.f32 1.0, %v5687
  %v5689 = vmul.f32 %v5686, %v5688
  %v5690 = vadd.f32 %v5686, %v5689
  %vm5691 = vweird.f32 %v5650
  %vm5692 = vweird.f32 %v5686
  %vm5693 = vmor %vm5691, %vm5692
  %v5694 = vsel %vm5693, %v5686, %v5690
  %v5695 = vand.u32 2147483647, %v5650
  %vm5696 = vcmp.eq.f32.partialorder %v5695, 8.507059e+37
  %v5697 = vand.u32 %v5650, 2147483648
  %v5698 = vor.u32 1.1754944e-38, %v5697
  %v5699 = vsel %vm5696, %v5698, %v5694
  %v5700 = vmul.f32 %v5513, %v5699
  %v5701 = vrcp.pop %v5651
  %v5702 = vmul.f32 %v5651, %v5701
  %v5703 = vsub.f32 1.0, %v5702
  %v5704 = vmul.f32 %v5701, %v5703
  %v5705 = vadd.f32 %v5701, %v5704
  %vm5706 = vweird.f32 %v5651
  %vm5707 = vweird.f32 %v5701
  %vm5708 = vmor %vm5706, %vm5707
  %v5709 = vsel %vm5708, %v5701, %v5705
  %v5710 = vand.u32 2147483647, %v5651
  %vm5711 = vcmp.eq.f32.partialorder %v5710, 8.507059e+37
  %v5712 = vand.u32 %v5651, 2147483648
  %v5713 = vor.u32 1.1754944e-38, %v5712
  %v5714 = vsel %vm5711, %v5713, %v5709
  %v5715 = vmul.f32 %v5514, %v5714
  %v5716 = vrcp.pop %v5652
  %v5717 = vmul.f32 %v5652, %v5716
  %v5718 = vsub.f32 1.0, %v5717
  %v5719 = vmul.f32 %v5716, %v5718
  %v5720 = vadd.f32 %v5716, %v5719
  %vm5721 = vweird.f32 %v5652
  %vm5722 = vweird.f32 %v5716
  %vm5723 = vmor %vm5721, %vm5722
  %v5724 = vsel %vm5723, %v5716, %v5720
  %v5725 = vand.u32 2147483647, %v5652
  %vm5726 = vcmp.eq.f32.partialorder %v5725, 8.507059e+37
  %v5727 = vand.u32 %v5652, 2147483648
  %v5728 = vor.u32 1.1754944e-38, %v5727
  %v5729 = vsel %vm5726, %v5728, %v5724
  %v5730 = vmul.f32 %v5515, %v5729
  %v5731 = vrcp.pop %v5653
  %v5732 = vmul.f32 %v5653, %v5731
  %v5733 = vsub.f32 1.0, %v5732
  %v5734 = vmul.f32 %v5731, %v5733
  %v5735 = vadd.f32 %v5731, %v5734
  %vm5736 = vweird.f32 %v5653
  %vm5737 = vweird.f32 %v5731
  %vm5738 = vmor %vm5736, %vm5737
  %v5739 = vsel %vm5738, %v5731, %v5735
  %v5740 = vand.u32 2147483647, %v5653
  %vm5741 = vcmp.eq.f32.partialorder %v5740, 8.507059e+37
  %v5742 = vand.u32 %v5653, 2147483648
  %v5743 = vor.u32 1.1754944e-38, %v5742
  %v5744 = vsel %vm5741, %v5743, %v5739
  %v5745 = vmul.f32 %v5516, %v5744
  %v5746 = vrcp.pop %v5654
  %v5747 = vmul.f32 %v5654, %v5746
  %v5748 = vsub.f32 1.0, %v5747
  %v5749 = vmul.f32 %v5746, %v5748
  %v5750 = vadd.f32 %v5746, %v5749
  %vm5751 = vweird.f32 %v5654
  %vm5752 = vweird.f32 %v5746
  %vm5753 = vmor %vm5751, %vm5752
  %v5754 = vsel %vm5753, %v5746, %v5750
  %v5755 = vand.u32 2147483647, %v5654
  %vm5756 = vcmp.eq.f32.partialorder %v5755, 8.507059e+37
  %v5757 = vand.u32 %v5654, 2147483648
  %v5758 = vor.u32 1.1754944e-38, %v5757
  %v5759 = vsel %vm5756, %v5758, %v5754
  %v5760 = vmul.f32 %v5517, %v5759
  %v5761 = vrcp.pop %v5655
  %v5762 = vmul.f32 %v5655, %v5761
  %v5763 = vsub.f32 1.0, %v5762
  %v5764 = vmul.f32 %v5761, %v5763
  %v5765 = vadd.f32 %v5761, %v5764
  %vm5766 = vweird.f32 %v5655
  %vm5767 = vweird.f32 %v5761
  %vm5768 = vmor %vm5766, %vm5767
  %v5769 = vsel %vm5768, %v5761, %v5765
  %v5770 = vand.u32 2147483647, %v5655
  %vm5771 = vcmp.eq.f32.partialorder %v5770, 8.507059e+37
  %v5772 = vand.u32 %v5655, 2147483648
  %v5773 = vor.u32 1.1754944e-38, %v5772
  %v5774 = vsel %vm5771, %v5773, %v5769
  %v5775 = vmul.f32 %v5518, %v5774
  %v5776 = vrcp.pop %v5656
  %v5777 = vmul.f32 %v5656, %v5776
  %v5778 = vsub.f32 1.0, %v5777
  %v5779 = vmul.f32 %v5776, %v5778
  %v5780 = vadd.f32 %v5776, %v5779
  %vm5781 = vweird.f32 %v5656
  %vm5782 = vweird.f32 %v5776
  %vm5783 = vmor %vm5781, %vm5782
  %v5784 = vsel %vm5783, %v5776, %v5780
  %v5785 = vand.u32 2147483647, %v5656
  %vm5786 = vcmp.eq.f32.partialorder %v5785, 8.507059e+37
  %v5787 = vand.u32 %v5656, 2147483648
  %v5788 = vor.u32 1.1754944e-38, %v5787
  %v5789 = vsel %vm5786, %v5788, %v5784
  %v5790 = vmul.f32 %v5519, %v5789
  %v5791 = vrcp.pop %v5657
  %v5792 = vmul.f32 %v5657, %v5791
  %v5793 = vsub.f32 1.0, %v5792
  %v5794 = vmul.f32 %v5791, %v5793
  %v5795 = vadd.f32 %v5791, %v5794
  %vm5796 = vweird.f32 %v5657
  %vm5797 = vweird.f32 %v5791
  %vm5798 = vmor %vm5796, %vm5797
  %v5799 = vsel %vm5798, %v5791, %v5795
  %v5800 = vand.u32 2147483647, %v5657
  %vm5801 = vcmp.eq.f32.partialorder %v5800, 8.507059e+37
  %v5802 = vand.u32 %v5657, 2147483648
  %v5803 = vor.u32 1.1754944e-38, %v5802
  %v5804 = vsel %vm5801, %v5803, %v5799
  %v5805 = vmul.f32 %v5520, %v5804
  %v5806 = vrcp.pop %v5658
  %v5807 = vmul.f32 %v5658, %v5806
  %v5808 = vsub.f32 1.0, %v5807
  %v5809 = vmul.f32 %v5806, %v5808
  %v5810 = vadd.f32 %v5806, %v5809
  %vm5811 = vweird.f32 %v5658
  %vm5812 = vweird.f32 %v5806
  %vm5813 = vmor %vm5811, %vm5812
  %v5814 = vsel %vm5813, %v5806, %v5810
  %v5815 = vand.u32 2147483647, %v5658
  %vm5816 = vcmp.eq.f32.partialorder %v5815, 8.507059e+37
  %v5817 = vand.u32 %v5658, 2147483648
  %v5818 = vor.u32 1.1754944e-38, %v5817
  %v5819 = vsel %vm5816, %v5818, %v5814
  %v5820 = vmul.f32 %v5521, %v5819
  %v5821 = vrcp.pop %v5659
  %v5822 = vmul.f32 %v5659, %v5821
  %v5823 = vsub.f32 1.0, %v5822
  %v5824 = vmul.f32 %v5821, %v5823
  %v5825 = vadd.f32 %v5821, %v5824
  %vm5826 = vweird.f32 %v5659
  %vm5827 = vweird.f32 %v5821
  %vm5828 = vmor %vm5826, %vm5827
  %v5829 = vsel %vm5828, %v5821, %v5825
  %v5830 = vand.u32 2147483647, %v5659
  %vm5831 = vcmp.eq.f32.partialorder %v5830, 8.507059e+37
  %v5832 = vand.u32 %v5659, 2147483648
  %v5833 = vor.u32 1.1754944e-38, %v5832
  %v5834 = vsel %vm5831, %v5833, %v5829
  %v5835 = vmul.f32 %v5522, %v5834
  %v5836 = vrcp.pop %v5660
  %v5837 = vmul.f32 %v5660, %v5836
  %v5838 = vsub.f32 1.0, %v5837
  %v5839 = vmul.f32 %v5836, %v5838
  %v5840 = vadd.f32 %v5836, %v5839
  %vm5841 = vweird.f32 %v5660
  %vm5842 = vweird.f32 %v5836
  %vm5843 = vmor %vm5841, %vm5842
  %v5844 = vsel %vm5843, %v5836, %v5840
  %v5845 = vand.u32 2147483647, %v5660
  %vm5846 = vcmp.eq.f32.partialorder %v5845, 8.507059e+37
  %v5847 = vand.u32 %v5660, 2147483648
  %v5848 = vor.u32 1.1754944e-38, %v5847
  %v5849 = vsel %vm5846, %v5848, %v5844
  %v5850 = vmul.f32 %v5523, %v5849
  %v5851 = vrcp.pop %v5661
  %v5852 = vmul.f32 %v5661, %v5851
  %v5853 = vsub.f32 1.0, %v5852
  %v5854 = vmul.f32 %v5851, %v5853
  %v5855 = vadd.f32 %v5851, %v5854
  %vm5856 = vweird.f32 %v5661
  %vm5857 = vweird.f32 %v5851
  %vm5858 = vmor %vm5856, %vm5857
  %v5859 = vsel %vm5858, %v5851, %v5855
  %v5860 = vand.u32 2147483647, %v5661
  %vm5861 = vcmp.eq.f32.partialorder %v5860, 8.507059e+37
  %v5862 = vand.u32 %v5661, 2147483648
  %v5863 = vor.u32 1.1754944e-38, %v5862
  %v5864 = vsel %vm5861, %v5863, %v5859
  %v5865 = vmul.f32 %v5524, %v5864
  %v5866 = vrcp.pop %v5662
  %v5867 = vmul.f32 %v5662, %v5866
  %v5868 = vsub.f32 1.0, %v5867
  %v5869 = vmul.f32 %v5866, %v5868
  %v5870 = vadd.f32 %v5866, %v5869
  %vm5871 = vweird.f32 %v5662
  %vm5872 = vweird.f32 %v5866
  %vm5873 = vmor %vm5871, %vm5872
  %v5874 = vsel %vm5873, %v5866, %v5870
  %v5875 = vand.u32 2147483647, %v5662
  %vm5876 = vcmp.eq.f32.partialorder %v5875, 8.507059e+37
  %v5877 = vand.u32 %v5662, 2147483648
  %v5878 = vor.u32 1.1754944e-38, %v5877
  %v5879 = vsel %vm5876, %v5878, %v5874
  %v5880 = vmul.f32 %v5525, %v5879
  %v5881 = vrcp.pop %v5663
  %v5882 = vmul.f32 %v5663, %v5881
  %v5883 = vsub.f32 1.0, %v5882
  %v5884 = vmul.f32 %v5881, %v5883
  %v5885 = vadd.f32 %v5881, %v5884
  %vm5886 = vweird.f32 %v5663
  %vm5887 = vweird.f32 %v5881
  %vm5888 = vmor %vm5886, %vm5887
  %v5889 = vsel %vm5888, %v5881, %v5885
  %v5890 = vand.u32 2147483647, %v5663
  %vm5891 = vcmp.eq.f32.partialorder %v5890, 8.507059e+37
  %v5892 = vand.u32 %v5663, 2147483648
  %v5893 = vor.u32 1.1754944e-38, %v5892
  %v5894 = vsel %vm5891, %v5893, %v5889
  %v5895 = vmul.f32 %v5526, %v5894
  %v5896 = vrcp.pop %v5664
  %v5897 = vmul.f32 %v5664, %v5896
  %v5898 = vsub.f32 1.0, %v5897
  %v5899 = vmul.f32 %v5896, %v5898
  %v5900 = vadd.f32 %v5896, %v5899
  %vm5901 = vweird.f32 %v5664
  %vm5902 = vweird.f32 %v5896
  %vm5903 = vmor %vm5901, %vm5902
  %v5904 = vsel %vm5903, %v5896, %v5900
  %v5905 = vand.u32 2147483647, %v5664
  %vm5906 = vcmp.eq.f32.partialorder %v5905, 8.507059e+37
  %v5907 = vand.u32 %v5664, 2147483648
  %v5908 = vor.u32 1.1754944e-38, %v5907
  %v5909 = vsel %vm5906, %v5908, %v5904
  %v5910 = vmul.f32 %v5527, %v5909
  %v5911 = vrcp.pop %v5665
  %v5912 = vmul.f32 %v5665, %v5911
  %v5913 = vsub.f32 1.0, %v5912
  %v5914 = vmul.f32 %v5911, %v5913
  %v5915 = vadd.f32 %v5911, %v5914
  %vm5916 = vweird.f32 %v5665
  %vm5917 = vweird.f32 %v5911
  %vm5918 = vmor %vm5916, %vm5917
  %v5919 = vsel %vm5918, %v5911, %v5915
  %v5920 = vand.u32 2147483647, %v5665
  %vm5921 = vcmp.eq.f32.partialorder %v5920, 8.507059e+37
  %v5922 = vand.u32 %v5665, 2147483648
  %v5923 = vor.u32 1.1754944e-38, %v5922
  %v5924 = vsel %vm5921, %v5923, %v5919
  %v5925 = vmul.f32 %v5528, %v5924
  %v5926 = vrcp.pop %v5666
  %v5927 = vmul.f32 %v5666, %v5926
  %v5928 = vsub.f32 1.0, %v5927
  %v5929 = vmul.f32 %v5926, %v5928
  %v5930 = vadd.f32 %v5926, %v5929
  %vm5931 = vweird.f32 %v5666
  %vm5932 = vweird.f32 %v5926
  %vm5933 = vmor %vm5931, %vm5932
  %v5934 = vsel %vm5933, %v5926, %v5930
  %v5935 = vand.u32 2147483647, %v5666
  %vm5936 = vcmp.eq.f32.partialorder %v5935, 8.507059e+37
  %v5937 = vand.u32 %v5666, 2147483648
  %v5938 = vor.u32 1.1754944e-38, %v5937
  %v5939 = vsel %vm5936, %v5938, %v5934
  %v5940 = vmul.f32 %v5529, %v5939
  %v5941 = vrcp.pop %v5667
  %v5942 = vmul.f32 %v5667, %v5941
  %v5943 = vsub.f32 1.0, %v5942
  %v5944 = vmul.f32 %v5941, %v5943
  %v5945 = vadd.f32 %v5941, %v5944
  %vm5946 = vweird.f32 %v5667
  %vm5947 = vweird.f32 %v5941
  %vm5948 = vmor %vm5946, %vm5947
  %v5949 = vsel %vm5948, %v5941, %v5945
  %v5950 = vand.u32 2147483647, %v5667
  %vm5951 = vcmp.eq.f32.partialorder %v5950, 8.507059e+37
  %v5952 = vand.u32 %v5667, 2147483648
  %v5953 = vor.u32 1.1754944e-38, %v5952
  %v5954 = vsel %vm5951, %v5953, %v5949
  %v5955 = vmul.f32 %v5530, %v5954
  %v5957 = vperm.slane %v5413, 0
  %v5959 = vrot.slane %v5957, 1
  %v5960 = vrot.slane %v5957, 2
  %v5961 = vrot.slane %v5957, 3
  %v5962 = vrot.slane %v5957, 4
  %v5963 = vrot.slane %v5957, 5
  %v5964 = vrot.slane %v5957, 6
  %v5965 = vrot.slane %v5957, 7
  %v5973 = vmul.f32 %v5700, %v5957
  %v5974 = vmul.f32 %v5715, %v5959
  %v5975 = vmul.f32 %v5730, %v5960
  %v5976 = vmul.f32 %v5745, %v5961
  %v5977 = vmul.f32 %v5760, %v5962
  %v5978 = vmul.f32 %v5775, %v5963
  %v5979 = vmul.f32 %v5790, %v5964
  %v5980 = vmul.f32 %v5805, %v5965
  %v5981 = vmul.f32 %v5820, %v5957
  %v5982 = vmul.f32 %v5835, %v5959
  %v5983 = vmul.f32 %v5850, %v5960
  %v5984 = vmul.f32 %v5865, %v5961
  %v5985 = vmul.f32 %v5880, %v5962
  %v5986 = vmul.f32 %v5895, %v5963
  %v5987 = vmul.f32 %v5910, %v5964
  %v5988 = vmul.f32 %v5925, %v5965
  %v5989 = vmul.f32 %v5940, %v5957
  %v5990 = vmul.f32 %v5955, %v5959
  %v5992 = vperm.slane %v5414, 0
  %v5994 = vrot.slane %v5992, 1
  %v5995 = vrot.slane %v5992, 2
  %v5996 = vrot.slane %v5992, 3
  %v5997 = vrot.slane %v5992, 4
  %v5998 = vrot.slane %v5992, 5
  %v5999 = vrot.slane %v5992, 6
  %v6000 = vrot.slane %v5992, 7
  %v6008 = vadd.f32 %v5973, %v5992
  %v6009 = vadd.f32 %v5974, %v5994
  %v6010 = vadd.f32 %v5975, %v5995
  %v6011 = vadd.f32 %v5976, %v5996
  %v6012 = vadd.f32 %v5977, %v5997
  %v6013 = vadd.f32 %v5978, %v5998
  %v6014 = vadd.f32 %v5979, %v5999
  %v6015 = vadd.f32 %v5980, %v6000
  %v6016 = vadd.f32 %v5981, %v5992
  %v6017 = vadd.f32 %v5982, %v5994
  %v6018 = vadd.f32 %v5983, %v5995
  %v6019 = vadd.f32 %v5984, %v5996
  %v6020 = vadd.f32 %v5985, %v5997
  %v6021 = vadd.f32 %v5986, %v5998
  %v6022 = vadd.f32 %v5987, %v5999
  %v6023 = vadd.f32 %v5988, %v6000
  %v6024 = vadd.f32 %v5989, %v5992
  %v6025 = vadd.f32 %v5990, %v5994
  %6044 = vst [vmem:[#allocation1] ss:$9 sm:$0xff] %v6008
  %s6045 = scalar_lea.vmem [#allocation1], 1
  %6046 = vst [vmem:[%s6045] ss:$9 sm:$0xff] %v6009
  %s6047 = scalar_lea.vmem [#allocation1], 2
  %6048 = vst [vmem:[%s6047] ss:$9 sm:$0xff] %v6010
  %s6049 = scalar_lea.vmem [#allocation1], 3
  %6050 = vst [vmem:[%s6049] ss:$9 sm:$0xff] %v6011
  %s6051 = scalar_lea.vmem [#allocation1], 4
  %6052 = vst [vmem:[%s6051] ss:$9 sm:$0xff] %v6012
  %s6053 = scalar_lea.vmem [#allocation1], 5
  %6054 = vst [vmem:[%s6053] ss:$9 sm:$0xff] %v6013
  %s6055 = scalar_lea.vmem [#allocation1], 6
  %6056 = vst [vmem:[%s6055] ss:$9 sm:$0xff] %v6014
  %s6057 = scalar_lea.vmem [#allocation1], 7
  %6058 = vst [vmem:[%s6057] ss:$9 sm:$0xff] %v6015
  %v6059 = vld [vmem:[#allocation1] sm:$0xff]
  %6060 = vst [vmem:[#allocation1] ss:$9 sm:$0xff] %v6016
  %v6061 = vld [vmem:[#allocation1] sm:$0xff]
  %6062 = vst [vmem:[#allocation1] ss:$9 sm:$0xff] %v6017
  %6063 = vst [vmem:[%s6045] ss:$9 sm:$0xff] %v6018
  %6064 = vst [vmem:[%s6047] ss:$9 sm:$0xff] %v6019
  %6065 = vst [vmem:[%s6049] ss:$9 sm:$0xff] %v6020
  %6066 = vst [vmem:[%s6051] ss:$9 sm:$0xff] %v6021
  %6067 = vst [vmem:[%s6053] ss:$9 sm:$0xff] %v6022
  %6068 = vst [vmem:[%s6055] ss:$9 sm:$0xff] %v6023
  %6069 = vst [vmem:[%s6057] ss:$9 sm:$0xff] %v6024
  %v6070 = vld [vmem:[#allocation1] sm:$0xff]
  %6071 = vst [vmem:[#allocation1] ss:$9 sm:$0xff] %v6025
  %v6072 = vld [vmem:[#allocation1] sm:$0xff]
  %6077 = vst [vmem:[%s8] sm:$0xff] %v6059
  %6078 = vst [vmem:[%s8 + $0x8] sm:$0x1] %v6061
  %6079 = vst [vmem:[%s8 + $0x10] sm:$0xff] %v6070
  %6080 = vst [vmem:[%s8 + $0x18] sm:$0x1] %v6072
  // Predicated region
  $region34: #{vit_encoder_forward.3} parent=0 // pred_check
    _
  $region35: #{vit_encoder_forward.3} parent=0 // pred_check_branch
    %6082 = sbr.rel (0) target = $region37
  $region36: #{vit_encoder_forward.3} parent=0 // pred_region
    _
  $region37: #{vit_encoder_forward.3} parent=0 // pred_fallthru
    _
  // Predicated region
  $region38: #{vit_encoder_forward.3} parent=0 // pred_check
    _
  $region39: #{vit_encoder_forward.3} parent=0 // pred_check_branch
    %6084 = sbr.rel (0) target = $region41
  $region40: #{vit_encoder_forward.3} parent=0 // pred_region
    _
  $region41: #{vit_encoder_forward.3} parent=0 // pred_fallthru
    _

</llo_original>
